<compile_context>
chip_gen: v5e
topology: v5e:2x2
jax: 0.10.0
libtpu: 0.0.40
codegen_flags: <defaults>
</compile_context>

<pallas_src>
import jax
import jax.numpy as jnp
from jax import lax
from jax.experimental import pallas as pl
from jax.experimental.pallas import tpu as pltpu


# ------------------------------- fused kernel -------------------------------

def _dalit_conv_kernel(x_ref, w1_ref, b1_ref, w2_ref, b2_ref, w3_ref, b3_ref,
                       o_ref, xp_ref, h1p_ref, h2p_ref):
    """One batch element per grid step: cbr1 -> cbr2 -> cbr3, all in VMEM."""
    _, H, W, _ = x_ref.shape
    c_mid = w1_ref.shape[-1]
    c_out = o_ref.shape[-1]

    def stage(pad_ref, w_ref, b_ref, dil, cout):
        # im2col: 9 shifted windows of the zero-padded scratch, concatenated on
        # the channel (lane) axis -> a single MXU matmul with K = 9 * Cin.
        cols = jnp.concatenate(
            [pad_ref[ky * dil:ky * dil + H, kx * dil:kx * dil + W, :]
             for ky in range(3) for kx in range(3)],
            axis=-1)                                              # (H, W, 9*Cin)
        y = jnp.dot(cols.reshape(H * W, cols.shape[-1]), w_ref[...],
                    preferred_element_type=jnp.float32)           # (H*W, Cout)
        y = jnp.maximum(y + b_ref[...], 0.0)                      # folded-BN bias + ReLU
        return y.reshape(H, W, cout)

    # Stage 1: 3x3, dilation 1 (pad 1).  Zero the halo, write the interior.
    xp_ref[...] = jnp.zeros_like(xp_ref)
    xp_ref[1:1 + H, 1:1 + W, :] = x_ref[0]
    h1 = stage(xp_ref, w1_ref, b1_ref, dil=1, cout=c_mid)

    # Stage 2: 3x3, dilation 2 (pad 2).
    h1p_ref[...] = jnp.zeros_like(h1p_ref)
    h1p_ref[2:2 + H, 2:2 + W, :] = h1
    h2 = stage(h1p_ref, w2_ref, b2_ref, dil=2, cout=c_mid)

    # Stage 3: 3x3, dilation 3 (pad 3).
    h2p_ref[...] = jnp.zeros_like(h2p_ref)
    h2p_ref[3:3 + H, 3:3 + W, :] = h2
    o_ref[0] = stage(h2p_ref, w3_ref, b3_ref, dil=3, cout=c_out).astype(o_ref.dtype)


# --------------------------------- wrapper ----------------------------------

def _fold_bn(w_hwio, conv_bias, bn_stats, eps=1e-5):
    """Fold eval-mode BN into the conv: returns im2col weight (9*Cin, Cout), bias (1, Cout)."""
    gamma, beta, mean, var = bn_stats
    scale = gamma / jnp.sqrt(var + eps)                               # (Cout,)
    w_f = (w_hwio * scale).astype(jnp.float32)                        # scale out-channels
    b_f = ((conv_bias - mean) * scale + beta).astype(jnp.float32)
    kh, kw, cin, cout = w_hwio.shape
    return w_f.reshape(kh * kw * cin, cout), b_f.reshape(1, cout)


@jax.jit
def dalit_conv_forward(x_nchw, params):
    x = jnp.transpose(x_nchw, (0, 2, 3, 1)).astype(jnp.float32)       # NHWC
    B, H, W, c_in = x.shape

    w1, b1 = _fold_bn(params['w1'], params['b1'], params['bn1'])
    w2, b2 = _fold_bn(params['w2'], params['b2'], params['bn2'])
    w3, b3 = _fold_bn(params['w3'], params['b3'], params['bn3'])
    c_mid = w1.shape[-1]
    c_out = w3.shape[-1]

    def resident(arr):                      # constant block -> stays VMEM-resident
        nd = arr.ndim
        return pl.BlockSpec(arr.shape, lambda b, _nd=nd: (0,) * _nd)

    out = pl.pallas_call(
        _dalit_conv_kernel,
        out_shape=jax.ShapeDtypeStruct((B, H, W, c_out), jnp.float32),
        grid=(B,),
        in_specs=[
            pl.BlockSpec((1, H, W, c_in), lambda b: (b, 0, 0, 0)),
            resident(w1), resident(b1),
            resident(w2), resident(b2),
            resident(w3), resident(b3),
        ],
        out_specs=pl.BlockSpec((1, H, W, c_out), lambda b: (b, 0, 0, 0)),
        scratch_shapes=[
            pltpu.VMEM((H + 2, W + 2, c_in), jnp.float32),    # stage-1 padded input
            pltpu.VMEM((H + 4, W + 4, c_mid), jnp.float32),   # stage-2 padded input
            pltpu.VMEM((H + 6, W + 6, c_mid), jnp.float32),   # stage-3 padded input
        ],
        compiler_params=pltpu.CompilerParams(
            dimension_semantics=("parallel",)),
    )(x, w1, b1, w2, b2, w3, b3)

    return jnp.transpose(out, (0, 3, 1, 2))                           # back to NCHW


# ----------------------------- plain-JAX reference ---------------------------

def _ref_forward(x_nchw, params, eps=1e-5):
    x = jnp.transpose(x_nchw, (0, 2, 3, 1)).astype(jnp.float32)

    def cbr(xin, w, bias, bn, d):
        y = lax.conv_general_dilated(
            xin, w, window_strides=(1, 1), padding=[(d, d), (d, d)],
            rhs_dilation=(d, d),
            dimension_numbers=('NHWC', 'HWIO', 'NHWC')) + bias
        gamma, beta, mean, var = bn
        y = (y - mean) / jnp.sqrt(var + eps) * gamma + beta
        return jax.nn.relu(y)

    h = cbr(x, params['w1'], params['b1'], params['bn1'], 1)
    h = cbr(h, params['w2'], params['b2'], params['bn2'], 2)
    h = cbr(h, params['w3'], params['b3'], params['bn3'], 3)
    return jnp.transpose(h, (0, 3, 1, 2))


# ----------------------------------- main ------------------------------------

def _init_params(key, c_in, c_out, c_mid):
    ks = jax.random.split(key, 9)
    n = lambda k, shape, scale=0.1: scale * jax.random.normal(k, shape, jnp.float32)

    def bn_stats(k, c):
        k1, k2, k3, k4 = jax.random.split(k, 4)
        return (1.0 + n(k1, (c,)),            # gamma
                n(k2, (c,)),                  # beta
                n(k3, (c,)),                  # running mean
                1.0 + jnp.abs(n(k4, (c,))))   # running var

    return {
        'w1': n(ks[0], (3, 3, c_in, c_mid)),   # HWIO
        'b1': n(ks[1], (c_mid,)),
        'bn1': bn_stats(ks[2], c_mid),
        'w2': n(ks[3], (3, 3, c_mid, c_mid)),
        'b2': n(ks[4], (c_mid,)),
        'bn2': bn_stats(ks[5], c_mid),
        'w3': n(ks[6], (3, 3, c_mid, c_out)),
        'b3': n(ks[7], (c_out,)),
        'bn3': bn_stats(ks[8], c_out),
    }


if __name__ == "__main__":
    in_channels, out_channels = 4, 8
    mid_channels = in_channels // 2           # PyTorch default: in_channels // 2

    key = jax.random.PRNGKey(0)
    k_x, k_p = jax.random.split(key)
    x = jax.random.normal(k_x, (2, in_channels, 16, 16), jnp.float32)  # NCHW
    params = _init_params(k_p, in_channels, out_channels, mid_channels)

    out = jax.block_until_ready(dalit_conv_forward(x, params))
    ref = jax.block_until_ready(_ref_forward(x, params))

    assert out.shape == (2, out_channels, 16, 16), out.shape
    err = float(jnp.max(jnp.abs(out - ref)))
    assert jnp.allclose(out, ref, atol=1e-4, rtol=1e-4), err
    print("KERNEL_OK")
</pallas_src>

<mosaic_0001>
module attributes {stable_mosaic.version = 11 : i64} {
  func.func @_dalit_conv_kernel(%arg0: i32, %arg1: memref<1x16x16x4xf32, #tpu.memory_space<vmem>>, %arg2: memref<36x2xf32, #tpu.memory_space<vmem>>, %arg3: memref<1x2xf32, #tpu.memory_space<vmem>>, %arg4: memref<18x2xf32, #tpu.memory_space<vmem>>, %arg5: memref<1x2xf32, #tpu.memory_space<vmem>>, %arg6: memref<18x8xf32, #tpu.memory_space<vmem>>, %arg7: memref<1x8xf32, #tpu.memory_space<vmem>>, %arg8: memref<1x16x16x8xf32, #tpu.memory_space<vmem>>, %arg9: memref<18x18x4xf32, #tpu.memory_space<vmem>>, %arg10: memref<20x20x2xf32, #tpu.memory_space<vmem>>, %arg11: memref<22x22x2xf32, #tpu.memory_space<vmem>>) attributes {dimension_semantics = [#tpu.dimension_semantics<parallel>], iteration_bounds = array<i64: 2>, scalar_prefetch = 0 : i64, scratch_operands = 3 : i64, tpu.core_type = #tpu.core_type<tc>, window_params = [{transform_indices = @transform_0, window_bounds = array<i64: 1, 16, 16, 4>}, {pipeline_mode = #tpu.pipeline_mode<synchronous>, transform_indices = @transform_1, window_bounds = array<i64: 36, 2>}, {pipeline_mode = #tpu.pipeline_mode<synchronous>, transform_indices = @transform_2, window_bounds = array<i64: 1, 2>}, {pipeline_mode = #tpu.pipeline_mode<synchronous>, transform_indices = @transform_3, window_bounds = array<i64: 18, 2>}, {pipeline_mode = #tpu.pipeline_mode<synchronous>, transform_indices = @transform_4, window_bounds = array<i64: 1, 2>}, {pipeline_mode = #tpu.pipeline_mode<synchronous>, transform_indices = @transform_5, window_bounds = array<i64: 18, 8>}, {pipeline_mode = #tpu.pipeline_mode<synchronous>, transform_indices = @transform_6, window_bounds = array<i64: 1, 8>}, {transform_indices = @transform_7, window_bounds = array<i64: 1, 16, 16, 8>}]} {
    %cst = arith.constant 0.000000e+00 : f32
    %0 = vector.broadcast %cst : f32 to vector<18x18x4xf32>
    %c0 = arith.constant 0 : index
    %c0_0 = arith.constant 0 : index
    %c0_1 = arith.constant 0 : index
    %1 = vector.load %arg9[%c0, %c0_0, %c0_1] : memref<18x18x4xf32, #tpu.memory_space<vmem>>, vector<18x18x4xf32>
    tpu.vector_store %arg9[%c0, %c0_0, %c0_1], %0 {strides = array<i32>} : memref<18x18x4xf32, #tpu.memory_space<vmem>>, vector<18x18x4xf32>,
    %c0_2 = arith.constant 0 : index
    %c0_3 = arith.constant 0 : index
    %c0_4 = arith.constant 0 : index
    %c0_5 = arith.constant 0 : index
    %2 = vector.load %arg1[%c0_2, %c0_3, %c0_4, %c0_5] : memref<1x16x16x4xf32, #tpu.memory_space<vmem>>, vector<1x16x16x4xf32>
    %3 = vector.shape_cast %2 : vector<1x16x16x4xf32> to vector<16x16x4xf32>
    %c1 = arith.constant 1 : index
    %c1_6 = arith.constant 1 : index
    %c0_7 = arith.constant 0 : index
    %4 = vector.load %arg9[%c1, %c1_6, %c0_7] : memref<18x18x4xf32, #tpu.memory_space<vmem>>, vector<16x16x4xf32>
    tpu.vector_store %arg9[%c1, %c1_6, %c0_7], %3 {strides = array<i32>} : memref<18x18x4xf32, #tpu.memory_space<vmem>>, vector<16x16x4xf32>,
    %c0_8 = arith.constant 0 : index
    %c0_9 = arith.constant 0 : index
    %c0_10 = arith.constant 0 : index
    %5 = vector.load %arg9[%c0_8, %c0_9, %c0_10] : memref<18x18x4xf32, #tpu.memory_space<vmem>>, vector<16x16x4xf32>
    %c0_11 = arith.constant 0 : index
    %c1_12 = arith.constant 1 : index
    %c0_13 = arith.constant 0 : index
    %6 = vector.load %arg9[%c0_11, %c1_12, %c0_13] : memref<18x18x4xf32, #tpu.memory_space<vmem>>, vector<16x16x4xf32>
    %c0_14 = arith.constant 0 : index
    %c2 = arith.constant 2 : index
    %c0_15 = arith.constant 0 : index
    %7 = vector.load %arg9[%c0_14, %c2, %c0_15] : memref<18x18x4xf32, #tpu.memory_space<vmem>>, vector<16x16x4xf32>
    %c1_16 = arith.constant 1 : index
    %c0_17 = arith.constant 0 : index
    %c0_18 = arith.constant 0 : index
    %8 = vector.load %arg9[%c1_16, %c0_17, %c0_18] : memref<18x18x4xf32, #tpu.memory_space<vmem>>, vector<16x16x4xf32>
    %c1_19 = arith.constant 1 : index
    %c1_20 = arith.constant 1 : index
    %c0_21 = arith.constant 0 : index
    %9 = vector.load %arg9[%c1_19, %c1_20, %c0_21] : memref<18x18x4xf32, #tpu.memory_space<vmem>>, vector<16x16x4xf32>
    %c1_22 = arith.constant 1 : index
    %c2_23 = arith.constant 2 : index
    %c0_24 = arith.constant 0 : index
    %10 = vector.load %arg9[%c1_22, %c2_23, %c0_24] : memref<18x18x4xf32, #tpu.memory_space<vmem>>, vector<16x16x4xf32>
    %c2_25 = arith.constant 2 : index
    %c0_26 = arith.constant 0 : index
    %c0_27 = arith.constant 0 : index
    %11 = vector.load %arg9[%c2_25, %c0_26, %c0_27] : memref<18x18x4xf32, #tpu.memory_space<vmem>>, vector<16x16x4xf32>
    %c2_28 = arith.constant 2 : index
    %c1_29 = arith.constant 1 : index
    %c0_30 = arith.constant 0 : index
    %12 = vector.load %arg9[%c2_28, %c1_29, %c0_30] : memref<18x18x4xf32, #tpu.memory_space<vmem>>, vector<16x16x4xf32>
    %c2_31 = arith.constant 2 : index
    %c2_32 = arith.constant 2 : index
    %c0_33 = arith.constant 0 : index
    %13 = vector.load %arg9[%c2_31, %c2_32, %c0_33] : memref<18x18x4xf32, #tpu.memory_space<vmem>>, vector<16x16x4xf32>
    %14 = tpu.concatenate %5, %6, %7, %8, %9, %10, %11, %12, %13 in 2 : vector<16x16x4xf32>, vector<16x16x4xf32>, vector<16x16x4xf32>, vector<16x16x4xf32>, vector<16x16x4xf32>, vector<16x16x4xf32>, vector<16x16x4xf32>, vector<16x16x4xf32>, vector<16x16x4xf32> -> vector<16x16x36xf32>
    %15 = vector.shape_cast %14 : vector<16x16x36xf32> to vector<256x36xf32>
    %c0_34 = arith.constant 0 : index
    %c0_35 = arith.constant 0 : index
    %16 = vector.load %arg2[%c0_34, %c0_35] : memref<36x2xf32, #tpu.memory_space<vmem>>, vector<36x2xf32>
    %cst_36 = arith.constant dense<0.000000e+00> : vector<256x2xf32>
    %17 = tpu.matmul %15, %16, %cst_36 {dimension_numbers = #tpu.dot_dimension_numbers<[1], [0], [0], [1], [0, 0, 1, 1], [], []>} : vector<256x36xf32>, vector<36x2xf32>, vector<256x2xf32> -> vector<256x2xf32>
    %c0_37 = arith.constant 0 : index
    %c0_38 = arith.constant 0 : index
    %18 = vector.load %arg3[%c0_37, %c0_38] : memref<1x2xf32, #tpu.memory_space<vmem>>, vector<1x2xf32>
    %19 = vector.broadcast %18 : vector<1x2xf32> to vector<256x2xf32>
    %20 = arith.addf %17, %19 : vector<256x2xf32>
    %cst_39 = arith.constant 0.000000e+00 : f32
    %21 = vector.broadcast %cst_39 : f32 to vector<256x2xf32>
    %22 = arith.maximumf %20, %21 : vector<256x2xf32>
    %23 = vector.shape_cast %22 : vector<256x2xf32> to vector<16x16x2xf32>
    %cst_40 = arith.constant 0.000000e+00 : f32
    %24 = vector.broadcast %cst_40 : f32 to vector<20x20x2xf32>
    %c0_41 = arith.constant 0 : index
    %c0_42 = arith.constant 0 : index
    %c0_43 = arith.constant 0 : index
    %25 = vector.load %arg10[%c0_41, %c0_42, %c0_43] : memref<20x20x2xf32, #tpu.memory_space<vmem>>, vector<20x20x2xf32>
    tpu.vector_store %arg10[%c0_41, %c0_42, %c0_43], %24 {strides = array<i32>} : memref<20x20x2xf32, #tpu.memory_space<vmem>>, vector<20x20x2xf32>,
    %c2_44 = arith.constant 2 : index
    %c2_45 = arith.constant 2 : index
    %c0_46 = arith.constant 0 : index
    %26 = vector.load %arg10[%c2_44, %c2_45, %c0_46] : memref<20x20x2xf32, #tpu.memory_space<vmem>>, vector<16x16x2xf32>
    tpu.vector_store %arg10[%c2_44, %c2_45, %c0_46], %23 {strides = array<i32>} : memref<20x20x2xf32, #tpu.memory_space<vmem>>, vector<16x16x2xf32>,
    %c0_47 = arith.constant 0 : index
    %c0_48 = arith.constant 0 : index
    %c0_49 = arith.constant 0 : index
    %27 = vector.load %arg10[%c0_47, %c0_48, %c0_49] : memref<20x20x2xf32, #tpu.memory_space<vmem>>, vector<16x16x2xf32>
    %c0_50 = arith.constant 0 : index
    %c2_51 = arith.constant 2 : index
    %c0_52 = arith.constant 0 : index
    %28 = vector.load %arg10[%c0_50, %c2_51, %c0_52] : memref<20x20x2xf32, #tpu.memory_space<vmem>>, vector<16x16x2xf32>
    %c0_53 = arith.constant 0 : index
    %c4 = arith.constant 4 : index
    %c0_54 = arith.constant 0 : index
    %29 = vector.load %arg10[%c0_53, %c4, %c0_54] : memref<20x20x2xf32, #tpu.memory_space<vmem>>, vector<16x16x2xf32>
    %c2_55 = arith.constant 2 : index
    %c0_56 = arith.constant 0 : index
    %c0_57 = arith.constant 0 : index
    %30 = vector.load %arg10[%c2_55, %c0_56, %c0_57] : memref<20x20x2xf32, #tpu.memory_space<vmem>>, vector<16x16x2xf32>
    %c2_58 = arith.constant 2 : index
    %c2_59 = arith.constant 2 : index
    %c0_60 = arith.constant 0 : index
    %31 = vector.load %arg10[%c2_58, %c2_59, %c0_60] : memref<20x20x2xf32, #tpu.memory_space<vmem>>, vector<16x16x2xf32>
    %c2_61 = arith.constant 2 : index
    %c4_62 = arith.constant 4 : index
    %c0_63 = arith.constant 0 : index
    %32 = vector.load %arg10[%c2_61, %c4_62, %c0_63] : memref<20x20x2xf32, #tpu.memory_space<vmem>>, vector<16x16x2xf32>
    %c4_64 = arith.constant 4 : index
    %c0_65 = arith.constant 0 : index
    %c0_66 = arith.constant 0 : index
    %33 = vector.load %arg10[%c4_64, %c0_65, %c0_66] : memref<20x20x2xf32, #tpu.memory_space<vmem>>, vector<16x16x2xf32>
    %c4_67 = arith.constant 4 : index
    %c2_68 = arith.constant 2 : index
    %c0_69 = arith.constant 0 : index
    %34 = vector.load %arg10[%c4_67, %c2_68, %c0_69] : memref<20x20x2xf32, #tpu.memory_space<vmem>>, vector<16x16x2xf32>
    %c4_70 = arith.constant 4 : index
    %c4_71 = arith.constant 4 : index
    %c0_72 = arith.constant 0 : index
    %35 = vector.load %arg10[%c4_70, %c4_71, %c0_72] : memref<20x20x2xf32, #tpu.memory_space<vmem>>, vector<16x16x2xf32>
    %36 = tpu.concatenate %27, %28, %29, %30, %31, %32, %33, %34, %35 in 2 : vector<16x16x2xf32>, vector<16x16x2xf32>, vector<16x16x2xf32>, vector<16x16x2xf32>, vector<16x16x2xf32>, vector<16x16x2xf32>, vector<16x16x2xf32>, vector<16x16x2xf32>, vector<16x16x2xf32> -> vector<16x16x18xf32>
    %37 = vector.shape_cast %36 : vector<16x16x18xf32> to vector<256x18xf32>
    %c0_73 = arith.constant 0 : index
    %c0_74 = arith.constant 0 : index
    %38 = vector.load %arg4[%c0_73, %c0_74] : memref<18x2xf32, #tpu.memory_space<vmem>>, vector<18x2xf32>
    %cst_75 = arith.constant dense<0.000000e+00> : vector<256x2xf32>
    %39 = tpu.matmul %37, %38, %cst_75 {dimension_numbers = #tpu.dot_dimension_numbers<[1], [0], [0], [1], [0, 0, 1, 1], [], []>} : vector<256x18xf32>, vector<18x2xf32>, vector<256x2xf32> -> vector<256x2xf32>
    %c0_76 = arith.constant 0 : index
    %c0_77 = arith.constant 0 : index
    %40 = vector.load %arg5[%c0_76, %c0_77] : memref<1x2xf32, #tpu.memory_space<vmem>>, vector<1x2xf32>
    %41 = vector.broadcast %40 : vector<1x2xf32> to vector<256x2xf32>
    %42 = arith.addf %39, %41 : vector<256x2xf32>
    %cst_78 = arith.constant 0.000000e+00 : f32
    %43 = vector.broadcast %cst_78 : f32 to vector<256x2xf32>
    %44 = arith.maximumf %42, %43 : vector<256x2xf32>
    %45 = vector.shape_cast %44 : vector<256x2xf32> to vector<16x16x2xf32>
    %cst_79 = arith.constant 0.000000e+00 : f32
    %46 = vector.broadcast %cst_79 : f32 to vector<22x22x2xf32>
    %c0_80 = arith.constant 0 : index
    %c0_81 = arith.constant 0 : index
    %c0_82 = arith.constant 0 : index
    %47 = vector.load %arg11[%c0_80, %c0_81, %c0_82] : memref<22x22x2xf32, #tpu.memory_space<vmem>>, vector<22x22x2xf32>
    tpu.vector_store %arg11[%c0_80, %c0_81, %c0_82], %46 {strides = array<i32>} : memref<22x22x2xf32, #tpu.memory_space<vmem>>, vector<22x22x2xf32>,
    %c3 = arith.constant 3 : index
    %c3_83 = arith.constant 3 : index
    %c0_84 = arith.constant 0 : index
    %48 = vector.load %arg11[%c3, %c3_83, %c0_84] : memref<22x22x2xf32, #tpu.memory_space<vmem>>, vector<16x16x2xf32>
    tpu.vector_store %arg11[%c3, %c3_83, %c0_84], %45 {strides = array<i32>} : memref<22x22x2xf32, #tpu.memory_space<vmem>>, vector<16x16x2xf32>,
    %c0_85 = arith.constant 0 : index
    %c0_86 = arith.constant 0 : index
    %c0_87 = arith.constant 0 : index
    %49 = vector.load %arg11[%c0_85, %c0_86, %c0_87] : memref<22x22x2xf32, #tpu.memory_space<vmem>>, vector<16x16x2xf32>
    %c0_88 = arith.constant 0 : index
    %c3_89 = arith.constant 3 : index
    %c0_90 = arith.constant 0 : index
    %50 = vector.load %arg11[%c0_88, %c3_89, %c0_90] : memref<22x22x2xf32, #tpu.memory_space<vmem>>, vector<16x16x2xf32>
    %c0_91 = arith.constant 0 : index
    %c6 = arith.constant 6 : index
    %c0_92 = arith.constant 0 : index
    %51 = vector.load %arg11[%c0_91, %c6, %c0_92] : memref<22x22x2xf32, #tpu.memory_space<vmem>>, vector<16x16x2xf32>
    %c3_93 = arith.constant 3 : index
    %c0_94 = arith.constant 0 : index
    %c0_95 = arith.constant 0 : index
    %52 = vector.load %arg11[%c3_93, %c0_94, %c0_95] : memref<22x22x2xf32, #tpu.memory_space<vmem>>, vector<16x16x2xf32>
    %c3_96 = arith.constant 3 : index
    %c3_97 = arith.constant 3 : index
    %c0_98 = arith.constant 0 : index
    %53 = vector.load %arg11[%c3_96, %c3_97, %c0_98] : memref<22x22x2xf32, #tpu.memory_space<vmem>>, vector<16x16x2xf32>
    %c3_99 = arith.constant 3 : index
    %c6_100 = arith.constant 6 : index
    %c0_101 = arith.constant 0 : index
    %54 = vector.load %arg11[%c3_99, %c6_100, %c0_101] : memref<22x22x2xf32, #tpu.memory_space<vmem>>, vector<16x16x2xf32>
    %c6_102 = arith.constant 6 : index
    %c0_103 = arith.constant 0 : index
    %c0_104 = arith.constant 0 : index
    %55 = vector.load %arg11[%c6_102, %c0_103, %c0_104] : memref<22x22x2xf32, #tpu.memory_space<vmem>>, vector<16x16x2xf32>
    %c6_105 = arith.constant 6 : index
    %c3_106 = arith.constant 3 : index
    %c0_107 = arith.constant 0 : index
    %56 = vector.load %arg11[%c6_105, %c3_106, %c0_107] : memref<22x22x2xf32, #tpu.memory_space<vmem>>, vector<16x16x2xf32>
    %c6_108 = arith.constant 6 : index
    %c6_109 = arith.constant 6 : index
    %c0_110 = arith.constant 0 : index
    %57 = vector.load %arg11[%c6_108, %c6_109, %c0_110] : memref<22x22x2xf32, #tpu.memory_space<vmem>>, vector<16x16x2xf32>
    %58 = tpu.concatenate %49, %50, %51, %52, %53, %54, %55, %56, %57 in 2 : vector<16x16x2xf32>, vector<16x16x2xf32>, vector<16x16x2xf32>, vector<16x16x2xf32>, vector<16x16x2xf32>, vector<16x16x2xf32>, vector<16x16x2xf32>, vector<16x16x2xf32>, vector<16x16x2xf32> -> vector<16x16x18xf32>
    %59 = vector.shape_cast %58 : vector<16x16x18xf32> to vector<256x18xf32>
    %c0_111 = arith.constant 0 : index
    %c0_112 = arith.constant 0 : index
    %60 = vector.load %arg6[%c0_111, %c0_112] : memref<18x8xf32, #tpu.memory_space<vmem>>, vector<18x8xf32>
    %cst_113 = arith.constant dense<0.000000e+00> : vector<256x8xf32>
    %61 = tpu.matmul %59, %60, %cst_113 {dimension_numbers = #tpu.dot_dimension_numbers<[1], [0], [0], [1], [0, 0, 1, 1], [], []>} : vector<256x18xf32>, vector<18x8xf32>, vector<256x8xf32> -> vector<256x8xf32>
    %c0_114 = arith.constant 0 : index
    %c0_115 = arith.constant 0 : index
    %62 = vector.load %arg7[%c0_114, %c0_115] : memref<1x8xf32, #tpu.memory_space<vmem>>, vector<1x8xf32>
    %63 = vector.broadcast %62 : vector<1x8xf32> to vector<256x8xf32>
    %64 = arith.addf %61, %63 : vector<256x8xf32>
    %cst_116 = arith.constant 0.000000e+00 : f32
    %65 = vector.broadcast %cst_116 : f32 to vector<256x8xf32>
    %66 = arith.maximumf %64, %65 : vector<256x8xf32>
    %67 = vector.shape_cast %66 : vector<256x8xf32> to vector<16x16x8xf32>
    %c0_117 = arith.constant 0 : index
    %c0_118 = arith.constant 0 : index
    %c0_119 = arith.constant 0 : index
    %c0_120 = arith.constant 0 : index
    %68 = vector.load %arg8[%c0_117, %c0_118, %c0_119, %c0_120] : memref<1x16x16x8xf32, #tpu.memory_space<vmem>>, vector<1x16x16x8xf32>
    %69 = vector.shape_cast %68 : vector<1x16x16x8xf32> to vector<16x16x8xf32>
    %70 = vector.shape_cast %67 : vector<16x16x8xf32> to vector<1x16x16x8xf32>
    tpu.vector_store %arg8[%c0_117, %c0_118, %c0_119, %c0_120], %70 {strides = array<i32>} : memref<1x16x16x8xf32, #tpu.memory_space<vmem>>, vector<1x16x16x8xf32>,
    return
  }
  func.func @transform_0(%arg0: i32) -> (i32, i32, i32, i32) {
    %c0_i32 = arith.constant 0 : i32
    %c0_i32_0 = arith.constant 0 : i32
    %c0_i32_1 = arith.constant 0 : i32
    %c0_i32_2 = arith.constant 0 : i32
    return %arg0, %c0_i32, %c0_i32_0, %c0_i32_1 : i32, i32, i32, i32
  }
  func.func @transform_1(%arg0: i32) -> (i32, i32) {
    %c0_i32 = arith.constant 0 : i32
    %c0_i32_0 = arith.constant 0 : i32
    %c0_i32_1 = arith.constant 0 : i32
    return %c0_i32, %c0_i32_0 : i32, i32
  }
  func.func @transform_2(%arg0: i32) -> (i32, i32) {
    %c0_i32 = arith.constant 0 : i32
    %c0_i32_0 = arith.constant 0 : i32
    %c0_i32_1 = arith.constant 0 : i32
    return %c0_i32, %c0_i32_0 : i32, i32
  }
  func.func @transform_3(%arg0: i32) -> (i32, i32) {
    %c0_i32 = arith.constant 0 : i32
    %c0_i32_0 = arith.constant 0 : i32
    %c0_i32_1 = arith.constant 0 : i32
    return %c0_i32, %c0_i32_0 : i32, i32
  }
  func.func @transform_4(%arg0: i32) -> (i32, i32) {
    %c0_i32 = arith.constant 0 : i32
    %c0_i32_0 = arith.constant 0 : i32
    %c0_i32_1 = arith.constant 0 : i32
    return %c0_i32, %c0_i32_0 : i32, i32
  }
  func.func @transform_5(%arg0: i32) -> (i32, i32) {
    %c0_i32 = arith.constant 0 : i32
    %c0_i32_0 = arith.constant 0 : i32
    %c0_i32_1 = arith.constant 0 : i32
    return %c0_i32, %c0_i32_0 : i32, i32
  }
  func.func @transform_6(%arg0: i32) -> (i32, i32) {
    %c0_i32 = arith.constant 0 : i32
    %c0_i32_0 = arith.constant 0 : i32
    %c0_i32_1 = arith.constant 0 : i32
    return %c0_i32, %c0_i32_0 : i32, i32
  }
  func.func @transform_7(%arg0: i32) -> (i32, i32, i32, i32) {
    %c0_i32 = arith.constant 0 : i32
    %c0_i32_0 = arith.constant 0 : i32
    %c0_i32_1 = arith.constant 0 : i32
    %c0_i32_2 = arith.constant 0 : i32
    return %arg0, %c0_i32, %c0_i32_0, %c0_i32_1 : i32, i32, i32, i32
  }
}

</mosaic_0001>

<llo_original>
// kernel: dalit_conv_forward.1
$region0: #{dalit_conv_forward.1}
  #allocation0 [shape = 'u32[]', space=smem, size = 0x4, offset = 0x4, fixed_abs, tag = 'smem constant byte address 0x4 - core index']
  #allocation1 [shape = 'u32[72,128]{1,0:T(1,128)}', space=vmem, size = 0x9000, scoped, tag = 'internal scratch']
  #allocation2 [shape = 'f32[18,18,4]{2,1,0:T(8,128)}', space=vmem, size = 0x36000, scoped, tag = 'scratch operand']
  #allocation3 [shape = 'f32[20,20,2]{2,1,0:T(8,128)}', space=vmem, size = 0x3c000, scoped, tag = 'scratch operand']
  #allocation4 [shape = 'f32[22,22,2]{2,1,0:T(8,128)}', space=vmem, size = 0x42000, scoped, tag = 'scratch operand']
  %s0 = inlined_call_operand.vmem [shape: f32[2,16,16,4], index: 0, kind: input, shape index: {}]
  %s1 = inlined_call_operand.vmem [shape: f32[36,2], index: 1, kind: input, shape index: {}]
  %s2 = inlined_call_operand.vmem [shape: f32[1,2], index: 2, kind: input, shape index: {}]
  %s3 = inlined_call_operand.vmem [shape: f32[18,2], index: 3, kind: input, shape index: {}]
  %s4 = inlined_call_operand.vmem [shape: f32[1,2], index: 4, kind: input, shape index: {}]
  %s5 = inlined_call_operand.vmem [shape: f32[18,8], index: 5, kind: input, shape index: {}]
  %s6 = inlined_call_operand.vmem [shape: f32[1,8], index: 6, kind: input, shape index: {}]
  %s7 = inlined_call_operand.vmem [shape: f32[2,16,16,8], index: 7, kind: output, shape index: {}]
  %s8 = sld [smem:[#allocation0]]
  $region61: #{dalit_conv_forward.1} parent=0
    _
  %s10 = ssub.s32 1, %s8
  %s11 = scalar_select 0, %s10, %s8
  loop: start=0, step=1, limit=4
  $region2: #{dalit_conv_forward.1} parent=0 // loop_pre_header
    _
  $region3: #{dalit_conv_forward.1} parent=0 // loop_header
    %s13 = sphi 0, %s17
    %p14 = scmp.ge.s32.totalorder %s13, 4
    %s23 = sphi 0, %s25
    %s26 = sphi 0, %s23
    %s27 = sphi 0, %s26
    %s43 = sphi 0, %s27
    %s47 = sphi 0, %s47
    %s49 = sphi 0, %s47
    %s50 = sphi 0, %s49
    %s64 = sphi 0, %s50
    %s68 = sphi 0, %s68
    %s70 = sphi 0, %s68
    %s71 = sphi 0, %s70
    %s85 = sphi 0, %s71
    %s89 = sphi 0, %s89
    %s91 = sphi 0, %s89
    %s92 = sphi 0, %s91
    %s106 = sphi 0, %s92
    %s110 = sphi 0, %s110
    %s112 = sphi 0, %s110
    %s113 = sphi 0, %s112
    %s127 = sphi 0, %s113
    %s131 = sphi 0, %s131
    %s133 = sphi 0, %s131
    %s134 = sphi 0, %s133
    %s148 = sphi 0, %s134
    %s152 = sphi 0, %s152
    %s154 = sphi 0, %s152
    %s155 = sphi 0, %s154
    %s169 = sphi 0, %s155
    %s175 = sphi 0, %s177
    %s178 = sphi 0, %s175
    %s179 = sphi 0, %s178
    %s195 = sphi 0, %s179
  $region4: #{dalit_conv_forward.1} parent=0 // loop_header_branch
    %16 = sbr.rel (%p14) target = $region8
  $region5: #{dalit_conv_forward.1} parent=0 // loop_body
    %s18 = ssub.s32 %s13, 1
    %s19 = ssub.s32 %s13, 2
    %s20 = sadd.s32 %s13, 1
    %s21 = ssub.s32 %s13, %s20
    %p22 = scmp.eq.s32.totalorder %s21, 0
    %s24 = sadd.s32 %s23, 1
    %s25 = scalar_select %p22, %s23, %s24
    %p28 = pneg %p22
    %p29 = scmp.eq.s32.totalorder %s13, 1
    %p30 = por %p28, %p29
    %p31 = scmp.ne.s32.totalorder %s23, %s26
    %p32 = scmp.eq.s32.totalorder %s13, 0
    %p33 = por %p31, %p32
    %p34 = scmp.ne.s32.totalorder %s23, %s26
    %p35 = scmp.eq.s32.totalorder %s18, 1
    %p36 = por %p34, %p35
    %p37 = scmp.ne.s32.totalorder %s26, %s27
    %p38 = scmp.eq.s32.totalorder %s18, 0
    %p39 = por %p37, %p38
    %p40 = scmp.ne.s32.totalorder %s26, %s27
    %p41 = scmp.eq.s32.totalorder %s19, 1
    %p42 = por %p40, %p41
    %p44 = scmp.ne.s32.totalorder %s27, %s43
    %p45 = scmp.eq.s32.totalorder %s19, 0
    %p46 = por %p44, %p45
    %s48 = sadd.s32 %s47, 1
    %p51 = scmp.eq.s32.totalorder %s13, 1
    %p52 = scmp.ne.s32.totalorder %s47, %s49
    %p53 = scmp.eq.s32.totalorder %s13, 0
    %p54 = por %p52, %p53
    %p55 = scmp.ne.s32.totalorder %s47, %s49
    %p56 = scmp.eq.s32.totalorder %s18, 1
    %p57 = por %p55, %p56
    %p58 = scmp.ne.s32.totalorder %s49, %s50
    %p59 = scmp.eq.s32.totalorder %s18, 0
    %p60 = por %p58, %p59
    %p61 = scmp.ne.s32.totalorder %s49, %s50
    %p62 = scmp.eq.s32.totalorder %s19, 1
    %p63 = por %p61, %p62
    %p65 = scmp.ne.s32.totalorder %s50, %s64
    %p66 = scmp.eq.s32.totalorder %s19, 0
    %p67 = por %p65, %p66
    %s69 = sadd.s32 %s68, 1
    %p72 = scmp.eq.s32.totalorder %s13, 1
    %p73 = scmp.ne.s32.totalorder %s68, %s70
    %p74 = scmp.eq.s32.totalorder %s13, 0
    %p75 = por %p73, %p74
    %p76 = scmp.ne.s32.totalorder %s68, %s70
    %p77 = scmp.eq.s32.totalorder %s18, 1
    %p78 = por %p76, %p77
    %p79 = scmp.ne.s32.totalorder %s70, %s71
    %p80 = scmp.eq.s32.totalorder %s18, 0
    %p81 = por %p79, %p80
    %p82 = scmp.ne.s32.totalorder %s70, %s71
    %p83 = scmp.eq.s32.totalorder %s19, 1
    %p84 = por %p82, %p83
    %p86 = scmp.ne.s32.totalorder %s71, %s85
    %p87 = scmp.eq.s32.totalorder %s19, 0
    %p88 = por %p86, %p87
    %s90 = sadd.s32 %s89, 1
    %p93 = scmp.eq.s32.totalorder %s13, 1
    %p94 = scmp.ne.s32.totalorder %s89, %s91
    %p95 = scmp.eq.s32.totalorder %s13, 0
    %p96 = por %p94, %p95
    %p97 = scmp.ne.s32.totalorder %s89, %s91
    %p98 = scmp.eq.s32.totalorder %s18, 1
    %p99 = por %p97, %p98
    %p100 = scmp.ne.s32.totalorder %s91, %s92
    %p101 = scmp.eq.s32.totalorder %s18, 0
    %p102 = por %p100, %p101
    %p103 = scmp.ne.s32.totalorder %s91, %s92
    %p104 = scmp.eq.s32.totalorder %s19, 1
    %p105 = por %p103, %p104
    %p107 = scmp.ne.s32.totalorder %s92, %s106
    %p108 = scmp.eq.s32.totalorder %s19, 0
    %p109 = por %p107, %p108
    %s111 = sadd.s32 %s110, 1
    %p114 = scmp.eq.s32.totalorder %s13, 1
    %p115 = scmp.ne.s32.totalorder %s110, %s112
    %p116 = scmp.eq.s32.totalorder %s13, 0
    %p117 = por %p115, %p116
    %p118 = scmp.ne.s32.totalorder %s110, %s112
    %p119 = scmp.eq.s32.totalorder %s18, 1
    %p120 = por %p118, %p119
    %p121 = scmp.ne.s32.totalorder %s112, %s113
    %p122 = scmp.eq.s32.totalorder %s18, 0
    %p123 = por %p121, %p122
    %p124 = scmp.ne.s32.totalorder %s112, %s113
    %p125 = scmp.eq.s32.totalorder %s19, 1
    %p126 = por %p124, %p125
    %p128 = scmp.ne.s32.totalorder %s113, %s127
    %p129 = scmp.eq.s32.totalorder %s19, 0
    %p130 = por %p128, %p129
    %s132 = sadd.s32 %s131, 1
    %p135 = scmp.eq.s32.totalorder %s13, 1
    %p136 = scmp.ne.s32.totalorder %s131, %s133
    %p137 = scmp.eq.s32.totalorder %s13, 0
    %p138 = por %p136, %p137
    %p139 = scmp.ne.s32.totalorder %s131, %s133
    %p140 = scmp.eq.s32.totalorder %s18, 1
    %p141 = por %p139, %p140
    %p142 = scmp.ne.s32.totalorder %s133, %s134
    %p143 = scmp.eq.s32.totalorder %s18, 0
    %p144 = por %p142, %p143
    %p145 = scmp.ne.s32.totalorder %s133, %s134
    %p146 = scmp.eq.s32.totalorder %s19, 1
    %p147 = por %p145, %p146
    %p149 = scmp.ne.s32.totalorder %s134, %s148
    %p150 = scmp.eq.s32.totalorder %s19, 0
    %p151 = por %p149, %p150
    %s153 = sadd.s32 %s152, 1
    %p156 = scmp.eq.s32.totalorder %s13, 1
    %p157 = scmp.ne.s32.totalorder %s152, %s154
    %p158 = scmp.eq.s32.totalorder %s13, 0
    %p159 = por %p157, %p158
    %p160 = scmp.ne.s32.totalorder %s152, %s154
    %p161 = scmp.eq.s32.totalorder %s18, 1
    %p162 = por %p160, %p161
    %p163 = scmp.ne.s32.totalorder %s154, %s155
    %p164 = scmp.eq.s32.totalorder %s18, 0
    %p165 = por %p163, %p164
    %p166 = scmp.ne.s32.totalorder %s154, %s155
    %p167 = scmp.eq.s32.totalorder %s19, 1
    %p168 = por %p166, %p167
    %p170 = scmp.ne.s32.totalorder %s155, %s169
    %p171 = scmp.eq.s32.totalorder %s19, 0
    %p172 = por %p170, %p171
    %s173 = ssub.s32 %s13, %s20
    %p174 = scmp.eq.s32.totalorder %s173, 0
    %s176 = sadd.s32 %s175, 1
    %s177 = scalar_select %p174, %s175, %s176
    %p180 = pneg %p174
    %p181 = scmp.eq.s32.totalorder %s13, 1
    %p182 = por %p180, %p181
    %p183 = scmp.ne.s32.totalorder %s175, %s178
    %p184 = scmp.eq.s32.totalorder %s13, 0
    %p185 = por %p183, %p184
    %p186 = scmp.ne.s32.totalorder %s175, %s178
    %p187 = scmp.eq.s32.totalorder %s18, 1
    %p188 = por %p186, %p187
    %p189 = scmp.ne.s32.totalorder %s178, %s179
    %p190 = scmp.eq.s32.totalorder %s18, 0
    %p191 = por %p189, %p190
    %p192 = scmp.ne.s32.totalorder %s178, %s179
    %p193 = scmp.eq.s32.totalorder %s19, 1
    %p194 = por %p192, %p193
    %p196 = scmp.ne.s32.totalorder %s179, %s195
    %p197 = scmp.eq.s32.totalorder %s19, 0
    %p198 = por %p196, %p197
    %p199 = scmp.le.s32.totalorder 1, %s13
    %p200 = scmp.lt.s32.totalorder %s13, 3
    %p201 = pnand %p199, %p200
    %p202 = pneg %p201
    // Predicated region
    $region9: #{dalit_conv_forward.1} parent=5 // pred_check
      _
    $region10: #{dalit_conv_forward.1} parent=5 // pred_check_branch
      %204 = sbr.rel (%p201) target = $region12
    $region11: #{dalit_conv_forward.1} parent=5 // pred_region
      %s205 = ssub.s32 %s13, 1
      // Predicated region
      $region13: #{dalit_conv_forward.1} parent=11 // pred_check
        %p206 = pneg %p60
      $region14: #{dalit_conv_forward.1} parent=11 // pred_check_branch
        %208 = sbr.rel (%p206) target = $region16
      $region15: #{dalit_conv_forward.1} parent=11 // pred_region
        _
      $region16: #{dalit_conv_forward.1} parent=11 // pred_fallthru
        _
      // Predicated region
      $region17: #{dalit_conv_forward.1} parent=11 // pred_check
        %p209 = pneg %p81
      $region18: #{dalit_conv_forward.1} parent=11 // pred_check_branch
        %211 = sbr.rel (%p209) target = $region20
      $region19: #{dalit_conv_forward.1} parent=11 // pred_region
        _
      $region20: #{dalit_conv_forward.1} parent=11 // pred_fallthru
        _
      // Predicated region
      $region21: #{dalit_conv_forward.1} parent=11 // pred_check
        %p212 = pneg %p102
      $region22: #{dalit_conv_forward.1} parent=11 // pred_check_branch
        %214 = sbr.rel (%p212) target = $region24
      $region23: #{dalit_conv_forward.1} parent=11 // pred_region
        _
      $region24: #{dalit_conv_forward.1} parent=11 // pred_fallthru
        _
      // Predicated region
      $region25: #{dalit_conv_forward.1} parent=11 // pred_check
        %p215 = pneg %p123
      $region26: #{dalit_conv_forward.1} parent=11 // pred_check_branch
        %217 = sbr.rel (%p215) target = $region28
      $region27: #{dalit_conv_forward.1} parent=11 // pred_region
        _
      $region28: #{dalit_conv_forward.1} parent=11 // pred_fallthru
        _
      // Predicated region
      $region29: #{dalit_conv_forward.1} parent=11 // pred_check
        %p218 = pneg %p144
      $region30: #{dalit_conv_forward.1} parent=11 // pred_check_branch
        %220 = sbr.rel (%p218) target = $region32
      $region31: #{dalit_conv_forward.1} parent=11 // pred_region
        _
      $region32: #{dalit_conv_forward.1} parent=11 // pred_fallthru
        _
      // Predicated region
      $region33: #{dalit_conv_forward.1} parent=11 // pred_check
        %p221 = pneg %p165
      $region34: #{dalit_conv_forward.1} parent=11 // pred_check_branch
        %223 = sbr.rel (%p221) target = $region36
      $region35: #{dalit_conv_forward.1} parent=11 // pred_region
        _
      $region36: #{dalit_conv_forward.1} parent=11 // pred_fallthru
        _
    $region12: #{dalit_conv_forward.1} parent=5 // pred_fallthru
      _
    %p224 = scmp.lt.s32.totalorder %s13, 2
    // Predicated region
    $region37: #{dalit_conv_forward.1} parent=5 // pred_check
      %p225 = pneg %p224
    $region38: #{dalit_conv_forward.1} parent=5 // pred_check_branch
      %227 = sbr.rel (%p225) target = $region40
    $region39: #{dalit_conv_forward.1} parent=5 // pred_region
      // Predicated region
      $region41: #{dalit_conv_forward.1} parent=39 // pred_check
        %p228 = pneg %p33
      $region42: #{dalit_conv_forward.1} parent=39 // pred_check_branch
        %230 = sbr.rel (%p228) target = $region44
      $region43: #{dalit_conv_forward.1} parent=39 // pred_region
        %p231 = scmp.lt.s32.totalorder %s13, 1
        %s232 = scalar_select %p231, %s13, 1
        %s233 = smul.addr %s232, 32
        %s234 = smul.addr %s233, 8
        %s235 = scalar_lea.vmem %s0, %s234
      $region44: #{dalit_conv_forward.1} parent=39 // pred_fallthru
        _
    $region40: #{dalit_conv_forward.1} parent=5 // pred_fallthru
      _
    %p236 = scmp.le.s32.totalorder 1, %s13
    %p237 = scmp.lt.s32.totalorder %s13, 3
    %p238 = pnand %p236, %p237
    %p239 = pneg %p238
    // Predicated region
    $region45: #{dalit_conv_forward.1} parent=5 // pred_check
      _
    $region46: #{dalit_conv_forward.1} parent=5 // pred_check_branch
      %241 = sbr.rel (%p238) target = $region48
    $region47: #{dalit_conv_forward.1} parent=5 // pred_region
      %s242 = ssub.s32 %s13, 1
      %p243 = scmp.lt.s32.totalorder %s18, 1
      %s244 = scalar_select %p243, %s18, 1
      %s245 = smul.addr %s244, 32
      %s246 = smul.addr %s245, 8
      %s247 = scalar_lea.vmem %s0, %s246
      %p248 = pneg %p39
      %p249 = pneg %p36
      %p250 = pneg %p60
      %p251 = pneg %p57
      %p252 = pneg %p81
      %p253 = pneg %p78
      %p254 = pneg %p102
      %p255 = pneg %p99
      %p256 = pneg %p123
      %p257 = pneg %p120
      %p258 = pneg %p144
      %p259 = pneg %p141
      %p260 = pneg %p165
      %p261 = pneg %p162
      %p262 = pneg %p191
      %p263 = pneg %p188
      %p264 = scmp.lt.s32.totalorder %s18, 1
      %s265 = scalar_select %p264, %s18, 1
      %s266 = smul.addr %s265, 32
      %s267 = smul.addr %s266, 8
      %s268 = scalar_lea.vmem %s7, %s267
      %p269 = scmp.lt.s32.totalorder %s18, 1
      %s270 = scalar_select %p269, %s18, 1
      %s271 = smul.addr %s270, 32
      %s272 = smul.addr %s271, 8
      %s273 = scalar_lea.vmem %s0, %s272
      %p274 = scmp.lt.s32.totalorder %s18, 1
      %s275 = scalar_select %p274, %s18, 1
      %s276 = smul.addr %s275, 32
      %s277 = smul.addr %s276, 8
      %s278 = scalar_lea.vmem %s7, %s277
      %vm279 = vcmask 31744
      %280 = vst.msk [vmem:[#allocation2] sm:$0xff] %vm279, 0.0
      %281 = vst.msk [vmem:[#allocation2 + $0x8] sm:$0xff] %vm279, 0.0
      %vm282 = vcmask 25600
      %283 = vst.msk [vmem:[#allocation2 + $0x10] sm:$0x3] %vm282, 0.0
      %284 = vst.msk [vmem:[#allocation2 + $0x18] sm:$0xff] %vm279, 0.0
      %285 = vst.msk [vmem:[#allocation2 + $0x20] sm:$0xff] %vm279, 0.0
      %286 = vst.msk [vmem:[#allocation2 + $0x28] sm:$0x3] %vm282, 0.0
      %287 = vst.msk [vmem:[#allocation2 + $0x30] sm:$0xff] %vm279, 0.0
      %288 = vst.msk [vmem:[#allocation2 + $0x38] sm:$0xff] %vm279, 0.0
      %289 = vst.msk [vmem:[#allocation2 + $0x40] sm:$0x3] %vm282, 0.0
      %290 = vst.msk [vmem:[#allocation2 + $0x48] sm:$0xff] %vm279, 0.0
      %291 = vst.msk [vmem:[#allocation2 + $0x50] sm:$0xff] %vm279, 0.0
      %292 = vst.msk [vmem:[#allocation2 + $0x58] sm:$0x3] %vm282, 0.0
      %293 = vst.msk [vmem:[#allocation2 + $0x60] sm:$0xff] %vm279, 0.0
      %294 = vst.msk [vmem:[#allocation2 + $0x68] sm:$0xff] %vm279, 0.0
      %295 = vst.msk [vmem:[#allocation2 + $0x70] sm:$0x3] %vm282, 0.0
      %296 = vst.msk [vmem:[#allocation2 + $0x78] sm:$0xff] %vm279, 0.0
      %297 = vst.msk [vmem:[#allocation2 + $0x80] sm:$0xff] %vm279, 0.0
      %298 = vst.msk [vmem:[#allocation2 + $0x88] sm:$0x3] %vm282, 0.0
      %299 = vst.msk [vmem:[#allocation2 + $0x90] sm:$0xff] %vm279, 0.0
      %300 = vst.msk [vmem:[#allocation2 + $0x98] sm:$0xff] %vm279, 0.0
      %301 = vst.msk [vmem:[#allocation2 + $0xa0] sm:$0x3] %vm282, 0.0
      %302 = vst.msk [vmem:[#allocation2 + $0xa8] sm:$0xff] %vm279, 0.0
      %303 = vst.msk [vmem:[#allocation2 + $0xb0] sm:$0xff] %vm279, 0.0
      %304 = vst.msk [vmem:[#allocation2 + $0xb8] sm:$0x3] %vm282, 0.0
      %305 = vst.msk [vmem:[#allocation2 + $0xc0] sm:$0xff] %vm279, 0.0
      %306 = vst.msk [vmem:[#allocation2 + $0xc8] sm:$0xff] %vm279, 0.0
      %307 = vst.msk [vmem:[#allocation2 + $0xd0] sm:$0x3] %vm282, 0.0
      %308 = vst.msk [vmem:[#allocation2 + $0xd8] sm:$0xff] %vm279, 0.0
      %309 = vst.msk [vmem:[#allocation2 + $0xe0] sm:$0xff] %vm279, 0.0
      %310 = vst.msk [vmem:[#allocation2 + $0xe8] sm:$0x3] %vm282, 0.0
      %311 = vst.msk [vmem:[#allocation2 + $0xf0] sm:$0xff] %vm279, 0.0
      %312 = vst.msk [vmem:[#allocation2 + $0xf8] sm:$0xff] %vm279, 0.0
      %313 = vst.msk [vmem:[#allocation2 + $0x100] sm:$0x3] %vm282, 0.0
      %314 = vst.msk [vmem:[#allocation2 + $0x108] sm:$0xff] %vm279, 0.0
      %315 = vst.msk [vmem:[#allocation2 + $0x110] sm:$0xff] %vm279, 0.0
      %316 = vst.msk [vmem:[#allocation2 + $0x118] sm:$0x3] %vm282, 0.0
      %317 = vst.msk [vmem:[#allocation2 + $0x120] sm:$0xff] %vm279, 0.0
      %318 = vst.msk [vmem:[#allocation2 + $0x128] sm:$0xff] %vm279, 0.0
      %319 = vst.msk [vmem:[#allocation2 + $0x130] sm:$0x3] %vm282, 0.0
      %320 = vst.msk [vmem:[#allocation2 + $0x138] sm:$0xff] %vm279, 0.0
      %321 = vst.msk [vmem:[#allocation2 + $0x140] sm:$0xff] %vm279, 0.0
      %322 = vst.msk [vmem:[#allocation2 + $0x148] sm:$0x3] %vm282, 0.0
      %323 = vst.msk [vmem:[#allocation2 + $0x150] sm:$0xff] %vm279, 0.0
      %324 = vst.msk [vmem:[#allocation2 + $0x158] sm:$0xff] %vm279, 0.0
      %325 = vst.msk [vmem:[#allocation2 + $0x160] sm:$0x3] %vm282, 0.0
      %326 = vst.msk [vmem:[#allocation2 + $0x168] sm:$0xff] %vm279, 0.0
      %327 = vst.msk [vmem:[#allocation2 + $0x170] sm:$0xff] %vm279, 0.0
      %328 = vst.msk [vmem:[#allocation2 + $0x178] sm:$0x3] %vm282, 0.0
      %329 = vst.msk [vmem:[#allocation2 + $0x180] sm:$0xff] %vm279, 0.0
      %330 = vst.msk [vmem:[#allocation2 + $0x188] sm:$0xff] %vm279, 0.0
      %331 = vst.msk [vmem:[#allocation2 + $0x190] sm:$0x3] %vm282, 0.0
      %332 = vst.msk [vmem:[#allocation2 + $0x198] sm:$0xff] %vm279, 0.0
      %333 = vst.msk [vmem:[#allocation2 + $0x1a0] sm:$0xff] %vm279, 0.0
      %334 = vst.msk [vmem:[#allocation2 + $0x1a8] sm:$0x3] %vm282, 0.0
      %v335 = vld [vmem:[%s273] sm:$0xff]
      %v336 = vld [vmem:[%s273 + $0x8] sm:$0xff]
      %v337 = vld [vmem:[%s273 + $0x10] sm:$0xff]
      %v338 = vld [vmem:[%s273 + $0x18] sm:$0xff]
      %v339 = vld [vmem:[%s273 + $0x20] sm:$0xff]
      %v340 = vld [vmem:[%s273 + $0x28] sm:$0xff]
      %v341 = vld [vmem:[%s273 + $0x30] sm:$0xff]
      %v342 = vld [vmem:[%s273 + $0x38] sm:$0xff]
      %v343 = vld [vmem:[%s273 + $0x40] sm:$0xff]
      %v344 = vld [vmem:[%s273 + $0x48] sm:$0xff]
      %v345 = vld [vmem:[%s273 + $0x50] sm:$0xff]
      %v346 = vld [vmem:[%s273 + $0x58] sm:$0xff]
      %v347 = vld [vmem:[%s273 + $0x60] sm:$0xff]
      %v348 = vld [vmem:[%s273 + $0x68] sm:$0xff]
      %v349 = vld [vmem:[%s273 + $0x70] sm:$0xff]
      %v350 = vld [vmem:[%s273 + $0x78] sm:$0xff]
      %v351 = vld [vmem:[%s273 + $0x80] sm:$0xff]
      %v352 = vld [vmem:[%s273 + $0x88] sm:$0xff]
      %v353 = vld [vmem:[%s273 + $0x90] sm:$0xff]
      %v354 = vld [vmem:[%s273 + $0x98] sm:$0xff]
      %v355 = vld [vmem:[%s273 + $0xa0] sm:$0xff]
      %v356 = vld [vmem:[%s273 + $0xa8] sm:$0xff]
      %v357 = vld [vmem:[%s273 + $0xb0] sm:$0xff]
      %v358 = vld [vmem:[%s273 + $0xb8] sm:$0xff]
      %v359 = vld [vmem:[%s273 + $0xc0] sm:$0xff]
      %v360 = vld [vmem:[%s273 + $0xc8] sm:$0xff]
      %v361 = vld [vmem:[%s273 + $0xd0] sm:$0xff]
      %v362 = vld [vmem:[%s273 + $0xd8] sm:$0xff]
      %v363 = vld [vmem:[%s273 + $0xe0] sm:$0xff]
      %v364 = vld [vmem:[%s273 + $0xe8] sm:$0xff]
      %v365 = vld [vmem:[%s273 + $0xf0] sm:$0xff]
      %v366 = vld [vmem:[%s273 + $0xf8] sm:$0xff]
      %s367 = scalar_lea.vmem [#allocation2], 24
      %368 = vst.msk [vmem:[%s367 + $0x1] sm:$0xff] %vm279, %v335
      %369 = vst.msk [vmem:[%s367 + $0x9] sm:$0xff] %vm279, %v336
      %370 = vst.msk [vmem:[%s367 + $0x19] sm:$0xff] %vm279, %v337
      %371 = vst.msk [vmem:[%s367 + $0x21] sm:$0xff] %vm279, %v338
      %372 = vst.msk [vmem:[%s367 + $0x31] sm:$0xff] %vm279, %v339
      %373 = vst.msk [vmem:[%s367 + $0x39] sm:$0xff] %vm279, %v340
      %374 = vst.msk [vmem:[%s367 + $0x49] sm:$0xff] %vm279, %v341
      %375 = vst.msk [vmem:[%s367 + $0x51] sm:$0xff] %vm279, %v342
      %376 = vst.msk [vmem:[%s367 + $0x61] sm:$0xff] %vm279, %v343
      %377 = vst.msk [vmem:[%s367 + $0x69] sm:$0xff] %vm279, %v344
      %378 = vst.msk [vmem:[%s367 + $0x79] sm:$0xff] %vm279, %v345
      %379 = vst.msk [vmem:[%s367 + $0x81] sm:$0xff] %vm279, %v346
      %380 = vst.msk [vmem:[%s367 + $0x91] sm:$0xff] %vm279, %v347
      %381 = vst.msk [vmem:[%s367 + $0x99] sm:$0xff] %vm279, %v348
      %382 = vst.msk [vmem:[%s367 + $0xa9] sm:$0xff] %vm279, %v349
      %383 = vst.msk [vmem:[%s367 + $0xb1] sm:$0xff] %vm279, %v350
      %384 = vst.msk [vmem:[%s367 + $0xc1] sm:$0xff] %vm279, %v351
      %385 = vst.msk [vmem:[%s367 + $0xc9] sm:$0xff] %vm279, %v352
      %386 = vst.msk [vmem:[%s367 + $0xd9] sm:$0xff] %vm279, %v353
      %387 = vst.msk [vmem:[%s367 + $0xe1] sm:$0xff] %vm279, %v354
      %388 = vst.msk [vmem:[%s367 + $0xf1] sm:$0xff] %vm279, %v355
      %389 = vst.msk [vmem:[%s367 + $0xf9] sm:$0xff] %vm279, %v356
      %390 = vst.msk [vmem:[%s367 + $0x109] sm:$0xff] %vm279, %v357
      %391 = vst.msk [vmem:[%s367 + $0x111] sm:$0xff] %vm279, %v358
      %392 = vst.msk [vmem:[%s367 + $0x121] sm:$0xff] %vm279, %v359
      %393 = vst.msk [vmem:[%s367 + $0x129] sm:$0xff] %vm279, %v360
      %394 = vst.msk [vmem:[%s367 + $0x139] sm:$0xff] %vm279, %v361
      %395 = vst.msk [vmem:[%s367 + $0x141] sm:$0xff] %vm279, %v362
      %396 = vst.msk [vmem:[%s367 + $0x151] sm:$0xff] %vm279, %v363
      %397 = vst.msk [vmem:[%s367 + $0x159] sm:$0xff] %vm279, %v364
      %398 = vst.msk [vmem:[%s367 + $0x169] sm:$0xff] %vm279, %v365
      %399 = vst.msk [vmem:[%s367 + $0x171] sm:$0xff] %vm279, %v366
      %v400 = vld [vmem:[#allocation2] sm:$0xff]
      %v401 = vld [vmem:[#allocation2 + $0x8] sm:$0xff]
      %v402 = vld [vmem:[#allocation2 + $0x18] sm:$0xff]
      %v403 = vld [vmem:[#allocation2 + $0x20] sm:$0xff]
      %v404 = vld [vmem:[#allocation2 + $0x30] sm:$0xff]
      %v405 = vld [vmem:[#allocation2 + $0x38] sm:$0xff]
      %v406 = vld [vmem:[#allocation2 + $0x48] sm:$0xff]
      %v407 = vld [vmem:[#allocation2 + $0x50] sm:$0xff]
      %v408 = vld [vmem:[#allocation2 + $0x60] sm:$0xff]
      %v409 = vld [vmem:[#allocation2 + $0x68] sm:$0xff]
      %v410 = vld [vmem:[#allocation2 + $0x78] sm:$0xff]
      %v411 = vld [vmem:[#allocation2 + $0x80] sm:$0xff]
      %v412 = vld [vmem:[#allocation2 + $0x90] sm:$0xff]
      %v413 = vld [vmem:[#allocation2 + $0x98] sm:$0xff]
      %v414 = vld [vmem:[#allocation2 + $0xa8] sm:$0xff]
      %v415 = vld [vmem:[#allocation2 + $0xb0] sm:$0xff]
      %v416 = vld [vmem:[#allocation2 + $0xc0] sm:$0xff]
      %v417 = vld [vmem:[#allocation2 + $0xc8] sm:$0xff]
      %v418 = vld [vmem:[#allocation2 + $0xd8] sm:$0xff]
      %v419 = vld [vmem:[#allocation2 + $0xe0] sm:$0xff]
      %v420 = vld [vmem:[#allocation2 + $0xf0] sm:$0xff]
      %v421 = vld [vmem:[#allocation2 + $0xf8] sm:$0xff]
      %v422 = vld [vmem:[#allocation2 + $0x108] sm:$0xff]
      %v423 = vld [vmem:[#allocation2 + $0x110] sm:$0xff]
      %v424 = vld [vmem:[#allocation2 + $0x120] sm:$0xff]
      %v425 = vld [vmem:[#allocation2 + $0x128] sm:$0xff]
      %v426 = vld [vmem:[#allocation2 + $0x138] sm:$0xff]
      %v427 = vld [vmem:[#allocation2 + $0x140] sm:$0xff]
      %v428 = vld [vmem:[#allocation2 + $0x150] sm:$0xff]
      %v429 = vld [vmem:[#allocation2 + $0x158] sm:$0xff]
      %v430 = vld [vmem:[#allocation2 + $0x168] sm:$0xff]
      %v431 = vld [vmem:[#allocation2 + $0x170] sm:$0xff]
      %v432 = vld [vmem:[#allocation2 + $0x1] sm:$0xff]
      %v433 = vld [vmem:[#allocation2 + $0x9] sm:$0xff]
      %v434 = vld [vmem:[#allocation2 + $0x19] sm:$0xff]
      %v435 = vld [vmem:[#allocation2 + $0x21] sm:$0xff]
      %v436 = vld [vmem:[#allocation2 + $0x31] sm:$0xff]
      %v437 = vld [vmem:[#allocation2 + $0x39] sm:$0xff]
      %v438 = vld [vmem:[#allocation2 + $0x49] sm:$0xff]
      %v439 = vld [vmem:[#allocation2 + $0x51] sm:$0xff]
      %v440 = vld [vmem:[#allocation2 + $0x61] sm:$0xff]
      %v441 = vld [vmem:[#allocation2 + $0x69] sm:$0xff]
      %v442 = vld [vmem:[#allocation2 + $0x79] sm:$0xff]
      %v443 = vld [vmem:[#allocation2 + $0x81] sm:$0xff]
      %v444 = vld [vmem:[#allocation2 + $0x91] sm:$0xff]
      %v445 = vld [vmem:[#allocation2 + $0x99] sm:$0xff]
      %v446 = vld [vmem:[#allocation2 + $0xa9] sm:$0xff]
      %v447 = vld [vmem:[#allocation2 + $0xb1] sm:$0xff]
      %v448 = vld [vmem:[#allocation2 + $0xc1] sm:$0xff]
      %v449 = vld [vmem:[#allocation2 + $0xc9] sm:$0xff]
      %v450 = vld [vmem:[#allocation2 + $0xd9] sm:$0xff]
      %v451 = vld [vmem:[#allocation2 + $0xe1] sm:$0xff]
      %v452 = vld [vmem:[#allocation2 + $0xf1] sm:$0xff]
      %v453 = vld [vmem:[#allocation2 + $0xf9] sm:$0xff]
      %v454 = vld [vmem:[#allocation2 + $0x109] sm:$0xff]
      %v455 = vld [vmem:[#allocation2 + $0x111] sm:$0xff]
      %v456 = vld [vmem:[#allocation2 + $0x121] sm:$0xff]
      %v457 = vld [vmem:[#allocation2 + $0x129] sm:$0xff]
      %v458 = vld [vmem:[#allocation2 + $0x139] sm:$0xff]
      %v459 = vld [vmem:[#allocation2 + $0x141] sm:$0xff]
      %v460 = vld [vmem:[#allocation2 + $0x151] sm:$0xff]
      %v461 = vld [vmem:[#allocation2 + $0x159] sm:$0xff]
      %v462 = vld [vmem:[#allocation2 + $0x169] sm:$0xff]
      %v463 = vld [vmem:[#allocation2 + $0x171] sm:$0xff]
      %v464 = vld [vmem:[#allocation2 + $0x2] sm:$0xff]
      %v465 = vld [vmem:[#allocation2 + $0xa] sm:$0xff]
      %v466 = vld [vmem:[#allocation2 + $0x1a] sm:$0xff]
      %v467 = vld [vmem:[#allocation2 + $0x22] sm:$0xff]
      %v468 = vld [vmem:[#allocation2 + $0x32] sm:$0xff]
      %v469 = vld [vmem:[#allocation2 + $0x3a] sm:$0xff]
      %v470 = vld [vmem:[#allocation2 + $0x4a] sm:$0xff]
      %v471 = vld [vmem:[#allocation2 + $0x52] sm:$0xff]
      %v472 = vld [vmem:[#allocation2 + $0x62] sm:$0xff]
      %v473 = vld [vmem:[#allocation2 + $0x6a] sm:$0xff]
      %v474 = vld [vmem:[#allocation2 + $0x7a] sm:$0xff]
      %v475 = vld [vmem:[#allocation2 + $0x82] sm:$0xff]
      %v476 = vld [vmem:[#allocation2 + $0x92] sm:$0xff]
      %v477 = vld [vmem:[#allocation2 + $0x9a] sm:$0xff]
      %v478 = vld [vmem:[#allocation2 + $0xaa] sm:$0xff]
      %v479 = vld [vmem:[#allocation2 + $0xb2] sm:$0xff]
      %v480 = vld [vmem:[#allocation2 + $0xc2] sm:$0xff]
      %v481 = vld [vmem:[#allocation2 + $0xca] sm:$0xff]
      %v482 = vld [vmem:[#allocation2 + $0xda] sm:$0xff]
      %v483 = vld [vmem:[#allocation2 + $0xe2] sm:$0xff]
      %v484 = vld [vmem:[#allocation2 + $0xf2] sm:$0xff]
      %v485 = vld [vmem:[#allocation2 + $0xfa] sm:$0xff]
      %v486 = vld [vmem:[#allocation2 + $0x10a] sm:$0xff]
      %v487 = vld [vmem:[#allocation2 + $0x112] sm:$0xff]
      %v488 = vld [vmem:[#allocation2 + $0x122] sm:$0xff]
      %v489 = vld [vmem:[#allocation2 + $0x12a] sm:$0xff]
      %v490 = vld [vmem:[#allocation2 + $0x13a] sm:$0xff]
      %v491 = vld [vmem:[#allocation2 + $0x142] sm:$0xff]
      %v492 = vld [vmem:[#allocation2 + $0x152] sm:$0xff]
      %v493 = vld [vmem:[#allocation2 + $0x15a] sm:$0xff]
      %v494 = vld [vmem:[#allocation2 + $0x16a] sm:$0xff]
      %v495 = vld [vmem:[#allocation2 + $0x172] sm:$0xff]
      %v496 = vld [vmem:[%s367] sm:$0xff]
      %v497 = vld [vmem:[%s367 + $0x8] sm:$0xff]
      %v498 = vld [vmem:[%s367 + $0x18] sm:$0xff]
      %v499 = vld [vmem:[%s367 + $0x20] sm:$0xff]
      %v500 = vld [vmem:[%s367 + $0x30] sm:$0xff]
      %v501 = vld [vmem:[%s367 + $0x38] sm:$0xff]
      %v502 = vld [vmem:[%s367 + $0x48] sm:$0xff]
      %v503 = vld [vmem:[%s367 + $0x50] sm:$0xff]
      %v504 = vld [vmem:[%s367 + $0x60] sm:$0xff]
      %v505 = vld [vmem:[%s367 + $0x68] sm:$0xff]
      %v506 = vld [vmem:[%s367 + $0x78] sm:$0xff]
      %v507 = vld [vmem:[%s367 + $0x80] sm:$0xff]
      %v508 = vld [vmem:[%s367 + $0x90] sm:$0xff]
      %v509 = vld [vmem:[%s367 + $0x98] sm:$0xff]
      %v510 = vld [vmem:[%s367 + $0xa8] sm:$0xff]
      %v511 = vld [vmem:[%s367 + $0xb0] sm:$0xff]
      %v512 = vld [vmem:[%s367 + $0xc0] sm:$0xff]
      %v513 = vld [vmem:[%s367 + $0xc8] sm:$0xff]
      %v514 = vld [vmem:[%s367 + $0xd8] sm:$0xff]
      %v515 = vld [vmem:[%s367 + $0xe0] sm:$0xff]
      %v516 = vld [vmem:[%s367 + $0xf0] sm:$0xff]
      %v517 = vld [vmem:[%s367 + $0xf8] sm:$0xff]
      %v518 = vld [vmem:[%s367 + $0x108] sm:$0xff]
      %v519 = vld [vmem:[%s367 + $0x110] sm:$0xff]
      %v520 = vld [vmem:[%s367 + $0x120] sm:$0xff]
      %v521 = vld [vmem:[%s367 + $0x128] sm:$0xff]
      %v522 = vld [vmem:[%s367 + $0x138] sm:$0xff]
      %v523 = vld [vmem:[%s367 + $0x140] sm:$0xff]
      %v524 = vld [vmem:[%s367 + $0x150] sm:$0xff]
      %v525 = vld [vmem:[%s367 + $0x158] sm:$0xff]
      %v526 = vld [vmem:[%s367 + $0x168] sm:$0xff]
      %v527 = vld [vmem:[%s367 + $0x170] sm:$0xff]
      %v528 = vld [vmem:[%s367 + $0x1] sm:$0xff]
      %v529 = vld [vmem:[%s367 + $0x9] sm:$0xff]
      %v530 = vld [vmem:[%s367 + $0x19] sm:$0xff]
      %v531 = vld [vmem:[%s367 + $0x21] sm:$0xff]
      %v532 = vld [vmem:[%s367 + $0x31] sm:$0xff]
      %v533 = vld [vmem:[%s367 + $0x39] sm:$0xff]
      %v534 = vld [vmem:[%s367 + $0x49] sm:$0xff]
      %v535 = vld [vmem:[%s367 + $0x51] sm:$0xff]
      %v536 = vld [vmem:[%s367 + $0x61] sm:$0xff]
      %v537 = vld [vmem:[%s367 + $0x69] sm:$0xff]
      %v538 = vld [vmem:[%s367 + $0x79] sm:$0xff]
      %v539 = vld [vmem:[%s367 + $0x81] sm:$0xff]
      %v540 = vld [vmem:[%s367 + $0x91] sm:$0xff]
      %v541 = vld [vmem:[%s367 + $0x99] sm:$0xff]
      %v542 = vld [vmem:[%s367 + $0xa9] sm:$0xff]
      %v543 = vld [vmem:[%s367 + $0xb1] sm:$0xff]
      %v544 = vld [vmem:[%s367 + $0xc1] sm:$0xff]
      %v545 = vld [vmem:[%s367 + $0xc9] sm:$0xff]
      %v546 = vld [vmem:[%s367 + $0xd9] sm:$0xff]
      %v547 = vld [vmem:[%s367 + $0xe1] sm:$0xff]
      %v548 = vld [vmem:[%s367 + $0xf1] sm:$0xff]
      %v549 = vld [vmem:[%s367 + $0xf9] sm:$0xff]
      %v550 = vld [vmem:[%s367 + $0x109] sm:$0xff]
      %v551 = vld [vmem:[%s367 + $0x111] sm:$0xff]
      %v552 = vld [vmem:[%s367 + $0x121] sm:$0xff]
      %v553 = vld [vmem:[%s367 + $0x129] sm:$0xff]
      %v554 = vld [vmem:[%s367 + $0x139] sm:$0xff]
      %v555 = vld [vmem:[%s367 + $0x141] sm:$0xff]
      %v556 = vld [vmem:[%s367 + $0x151] sm:$0xff]
      %v557 = vld [vmem:[%s367 + $0x159] sm:$0xff]
      %v558 = vld [vmem:[%s367 + $0x169] sm:$0xff]
      %v559 = vld [vmem:[%s367 + $0x171] sm:$0xff]
      %v560 = vld [vmem:[%s367 + $0x2] sm:$0xff]
      %v561 = vld [vmem:[%s367 + $0xa] sm:$0xff]
      %v562 = vld [vmem:[%s367 + $0x1a] sm:$0xff]
      %v563 = vld [vmem:[%s367 + $0x22] sm:$0xff]
      %v564 = vld [vmem:[%s367 + $0x32] sm:$0xff]
      %v565 = vld [vmem:[%s367 + $0x3a] sm:$0xff]
      %v566 = vld [vmem:[%s367 + $0x4a] sm:$0xff]
      %v567 = vld [vmem:[%s367 + $0x52] sm:$0xff]
      %v568 = vld [vmem:[%s367 + $0x62] sm:$0xff]
      %v569 = vld [vmem:[%s367 + $0x6a] sm:$0xff]
      %v570 = vld [vmem:[%s367 + $0x7a] sm:$0xff]
      %v571 = vld [vmem:[%s367 + $0x82] sm:$0xff]
      %v572 = vld [vmem:[%s367 + $0x92] sm:$0xff]
      %v573 = vld [vmem:[%s367 + $0x9a] sm:$0xff]
      %v574 = vld [vmem:[%s367 + $0xaa] sm:$0xff]
      %v575 = vld [vmem:[%s367 + $0xb2] sm:$0xff]
      %v576 = vld [vmem:[%s367 + $0xc2] sm:$0xff]
      %v577 = vld [vmem:[%s367 + $0xca] sm:$0xff]
      %v578 = vld [vmem:[%s367 + $0xda] sm:$0xff]
      %v579 = vld [vmem:[%s367 + $0xe2] sm:$0xff]
      %v580 = vld [vmem:[%s367 + $0xf2] sm:$0xff]
      %v581 = vld [vmem:[%s367 + $0xfa] sm:$0xff]
      %v582 = vld [vmem:[%s367 + $0x10a] sm:$0xff]
      %v583 = vld [vmem:[%s367 + $0x112] sm:$0xff]
      %v584 = vld [vmem:[%s367 + $0x122] sm:$0xff]
      %v585 = vld [vmem:[%s367 + $0x12a] sm:$0xff]
      %v586 = vld [vmem:[%s367 + $0x13a] sm:$0xff]
      %v587 = vld [vmem:[%s367 + $0x142] sm:$0xff]
      %v588 = vld [vmem:[%s367 + $0x152] sm:$0xff]
      %v589 = vld [vmem:[%s367 + $0x15a] sm:$0xff]
      %v590 = vld [vmem:[%s367 + $0x16a] sm:$0xff]
      %v591 = vld [vmem:[%s367 + $0x172] sm:$0xff]
      %s592 = scalar_lea.vmem [#allocation2], 48
      %v593 = vld [vmem:[%s592] sm:$0xff]
      %v594 = vld [vmem:[%s592 + $0x8] sm:$0xff]
      %v595 = vld [vmem:[%s592 + $0x18] sm:$0xff]
      %v596 = vld [vmem:[%s592 + $0x20] sm:$0xff]
      %v597 = vld [vmem:[%s592 + $0x30] sm:$0xff]
      %v598 = vld [vmem:[%s592 + $0x38] sm:$0xff]
      %v599 = vld [vmem:[%s592 + $0x48] sm:$0xff]
      %v600 = vld [vmem:[%s592 + $0x50] sm:$0xff]
      %v601 = vld [vmem:[%s592 + $0x60] sm:$0xff]
      %v602 = vld [vmem:[%s592 + $0x68] sm:$0xff]
      %v603 = vld [vmem:[%s592 + $0x78] sm:$0xff]
      %v604 = vld [vmem:[%s592 + $0x80] sm:$0xff]
      %v605 = vld [vmem:[%s592 + $0x90] sm:$0xff]
      %v606 = vld [vmem:[%s592 + $0x98] sm:$0xff]
      %v607 = vld [vmem:[%s592 + $0xa8] sm:$0xff]
      %v608 = vld [vmem:[%s592 + $0xb0] sm:$0xff]
      %v609 = vld [vmem:[%s592 + $0xc0] sm:$0xff]
      %v610 = vld [vmem:[%s592 + $0xc8] sm:$0xff]
      %v611 = vld [vmem:[%s592 + $0xd8] sm:$0xff]
      %v612 = vld [vmem:[%s592 + $0xe0] sm:$0xff]
      %v613 = vld [vmem:[%s592 + $0xf0] sm:$0xff]
      %v614 = vld [vmem:[%s592 + $0xf8] sm:$0xff]
      %v615 = vld [vmem:[%s592 + $0x108] sm:$0xff]
      %v616 = vld [vmem:[%s592 + $0x110] sm:$0xff]
      %v617 = vld [vmem:[%s592 + $0x120] sm:$0xff]
      %v618 = vld [vmem:[%s592 + $0x128] sm:$0xff]
      %v619 = vld [vmem:[%s592 + $0x138] sm:$0xff]
      %v620 = vld [vmem:[%s592 + $0x140] sm:$0xff]
      %v621 = vld [vmem:[%s592 + $0x150] sm:$0xff]
      %v622 = vld [vmem:[%s592 + $0x158] sm:$0xff]
      %v623 = vld [vmem:[%s592 + $0x168] sm:$0xff]
      %v624 = vld [vmem:[%s592 + $0x170] sm:$0xff]
      %v625 = vld [vmem:[%s592 + $0x1] sm:$0xff]
      %v626 = vld [vmem:[%s592 + $0x9] sm:$0xff]
      %v627 = vld [vmem:[%s592 + $0x19] sm:$0xff]
      %v628 = vld [vmem:[%s592 + $0x21] sm:$0xff]
      %v629 = vld [vmem:[%s592 + $0x31] sm:$0xff]
      %v630 = vld [vmem:[%s592 + $0x39] sm:$0xff]
      %v631 = vld [vmem:[%s592 + $0x49] sm:$0xff]
      %v632 = vld [vmem:[%s592 + $0x51] sm:$0xff]
      %v633 = vld [vmem:[%s592 + $0x61] sm:$0xff]
      %v634 = vld [vmem:[%s592 + $0x69] sm:$0xff]
      %v635 = vld [vmem:[%s592 + $0x79] sm:$0xff]
      %v636 = vld [vmem:[%s592 + $0x81] sm:$0xff]
      %v637 = vld [vmem:[%s592 + $0x91] sm:$0xff]
      %v638 = vld [vmem:[%s592 + $0x99] sm:$0xff]
      %v639 = vld [vmem:[%s592 + $0xa9] sm:$0xff]
      %v640 = vld [vmem:[%s592 + $0xb1] sm:$0xff]
      %v641 = vld [vmem:[%s592 + $0xc1] sm:$0xff]
      %v642 = vld [vmem:[%s592 + $0xc9] sm:$0xff]
      %v643 = vld [vmem:[%s592 + $0xd9] sm:$0xff]
      %v644 = vld [vmem:[%s592 + $0xe1] sm:$0xff]
      %v645 = vld [vmem:[%s592 + $0xf1] sm:$0xff]
      %v646 = vld [vmem:[%s592 + $0xf9] sm:$0xff]
      %v647 = vld [vmem:[%s592 + $0x109] sm:$0xff]
      %v648 = vld [vmem:[%s592 + $0x111] sm:$0xff]
      %v649 = vld [vmem:[%s592 + $0x121] sm:$0xff]
      %v650 = vld [vmem:[%s592 + $0x129] sm:$0xff]
      %v651 = vld [vmem:[%s592 + $0x139] sm:$0xff]
      %v652 = vld [vmem:[%s592 + $0x141] sm:$0xff]
      %v653 = vld [vmem:[%s592 + $0x151] sm:$0xff]
      %v654 = vld [vmem:[%s592 + $0x159] sm:$0xff]
      %v655 = vld [vmem:[%s592 + $0x169] sm:$0xff]
      %v656 = vld [vmem:[%s592 + $0x171] sm:$0xff]
      %v657 = vld [vmem:[%s592 + $0x2] sm:$0xff]
      %v658 = vld [vmem:[%s592 + $0xa] sm:$0xff]
      %v659 = vld [vmem:[%s592 + $0x1a] sm:$0xff]
      %v660 = vld [vmem:[%s592 + $0x22] sm:$0xff]
      %v661 = vld [vmem:[%s592 + $0x32] sm:$0xff]
      %v662 = vld [vmem:[%s592 + $0x3a] sm:$0xff]
      %v663 = vld [vmem:[%s592 + $0x4a] sm:$0xff]
      %v664 = vld [vmem:[%s592 + $0x52] sm:$0xff]
      %v665 = vld [vmem:[%s592 + $0x62] sm:$0xff]
      %v666 = vld [vmem:[%s592 + $0x6a] sm:$0xff]
      %v667 = vld [vmem:[%s592 + $0x7a] sm:$0xff]
      %v668 = vld [vmem:[%s592 + $0x82] sm:$0xff]
      %v669 = vld [vmem:[%s592 + $0x92] sm:$0xff]
      %v670 = vld [vmem:[%s592 + $0x9a] sm:$0xff]
      %v671 = vld [vmem:[%s592 + $0xaa] sm:$0xff]
      %v672 = vld [vmem:[%s592 + $0xb2] sm:$0xff]
      %v673 = vld [vmem:[%s592 + $0xc2] sm:$0xff]
      %v674 = vld [vmem:[%s592 + $0xca] sm:$0xff]
      %v675 = vld [vmem:[%s592 + $0xda] sm:$0xff]
      %v676 = vld [vmem:[%s592 + $0xe2] sm:$0xff]
      %v677 = vld [vmem:[%s592 + $0xf2] sm:$0xff]
      %v678 = vld [vmem:[%s592 + $0xfa] sm:$0xff]
      %v679 = vld [vmem:[%s592 + $0x10a] sm:$0xff]
      %v680 = vld [vmem:[%s592 + $0x112] sm:$0xff]
      %v681 = vld [vmem:[%s592 + $0x122] sm:$0xff]
      %v682 = vld [vmem:[%s592 + $0x12a] sm:$0xff]
      %v683 = vld [vmem:[%s592 + $0x13a] sm:$0xff]
      %v684 = vld [vmem:[%s592 + $0x142] sm:$0xff]
      %v685 = vld [vmem:[%s592 + $0x152] sm:$0xff]
      %v686 = vld [vmem:[%s592 + $0x15a] sm:$0xff]
      %v687 = vld [vmem:[%s592 + $0x16a] sm:$0xff]
      %v688 = vld [vmem:[%s592 + $0x172] sm:$0xff]
      %721 = vrot.lane.b32.xlu0 %v432, 4
      %v722 = vpop.permute.xlu0 %721
      %723 = vrot.lane.b32.xlu0 %v433, 4
      %v724 = vpop.permute.xlu0 %723
      %725 = vrot.lane.b32.xlu0 %v434, 4
      %v726 = vpop.permute.xlu0 %725
      %727 = vrot.lane.b32.xlu0 %v435, 4
      %v728 = vpop.permute.xlu0 %727
      %729 = vrot.lane.b32.xlu0 %v436, 4
      %v730 = vpop.permute.xlu0 %729
      %731 = vrot.lane.b32.xlu0 %v437, 4
      %v732 = vpop.permute.xlu0 %731
      %733 = vrot.lane.b32.xlu0 %v438, 4
      %v734 = vpop.permute.xlu0 %733
      %735 = vrot.lane.b32.xlu0 %v439, 4
      %v736 = vpop.permute.xlu0 %735
      %737 = vrot.lane.b32.xlu0 %v440, 4
      %v738 = vpop.permute.xlu0 %737
      %739 = vrot.lane.b32.xlu0 %v441, 4
      %v740 = vpop.permute.xlu0 %739
      %741 = vrot.lane.b32.xlu0 %v442, 4
      %v742 = vpop.permute.xlu0 %741
      %743 = vrot.lane.b32.xlu0 %v443, 4
      %v744 = vpop.permute.xlu0 %743
      %745 = vrot.lane.b32.xlu0 %v444, 4
      %v746 = vpop.permute.xlu0 %745
      %747 = vrot.lane.b32.xlu0 %v445, 4
      %v748 = vpop.permute.xlu0 %747
      %749 = vrot.lane.b32.xlu0 %v446, 4
      %v750 = vpop.permute.xlu0 %749
      %751 = vrot.lane.b32.xlu0 %v447, 4
      %v752 = vpop.permute.xlu0 %751
      %753 = vrot.lane.b32.xlu0 %v448, 4
      %v754 = vpop.permute.xlu0 %753
      %755 = vrot.lane.b32.xlu0 %v449, 4
      %v756 = vpop.permute.xlu0 %755
      %757 = vrot.lane.b32.xlu0 %v450, 4
      %v758 = vpop.permute.xlu0 %757
      %759 = vrot.lane.b32.xlu0 %v451, 4
      %v760 = vpop.permute.xlu0 %759
      %761 = vrot.lane.b32.xlu0 %v452, 4
      %v762 = vpop.permute.xlu0 %761
      %763 = vrot.lane.b32.xlu0 %v453, 4
      %v764 = vpop.permute.xlu0 %763
      %765 = vrot.lane.b32.xlu0 %v454, 4
      %v766 = vpop.permute.xlu0 %765
      %767 = vrot.lane.b32.xlu0 %v455, 4
      %v768 = vpop.permute.xlu0 %767
      %769 = vrot.lane.b32.xlu0 %v456, 4
      %v770 = vpop.permute.xlu0 %769
      %771 = vrot.lane.b32.xlu0 %v457, 4
      %v772 = vpop.permute.xlu0 %771
      %773 = vrot.lane.b32.xlu0 %v458, 4
      %v774 = vpop.permute.xlu0 %773
      %775 = vrot.lane.b32.xlu0 %v459, 4
      %v776 = vpop.permute.xlu0 %775
      %777 = vrot.lane.b32.xlu0 %v460, 4
      %v778 = vpop.permute.xlu0 %777
      %779 = vrot.lane.b32.xlu0 %v461, 4
      %v780 = vpop.permute.xlu0 %779
      %781 = vrot.lane.b32.xlu0 %v462, 4
      %v782 = vpop.permute.xlu0 %781
      %783 = vrot.lane.b32.xlu0 %v463, 4
      %v784 = vpop.permute.xlu0 %783
      %849 = vrot.lane.b32.xlu0 %v464, 8
      %v850 = vpop.permute.xlu0 %849
      %851 = vrot.lane.b32.xlu0 %v465, 8
      %v852 = vpop.permute.xlu0 %851
      %853 = vrot.lane.b32.xlu0 %v466, 8
      %v854 = vpop.permute.xlu0 %853
      %855 = vrot.lane.b32.xlu0 %v467, 8
      %v856 = vpop.permute.xlu0 %855
      %857 = vrot.lane.b32.xlu0 %v468, 8
      %v858 = vpop.permute.xlu0 %857
      %859 = vrot.lane.b32.xlu0 %v469, 8
      %v860 = vpop.permute.xlu0 %859
      %861 = vrot.lane.b32.xlu0 %v470, 8
      %v862 = vpop.permute.xlu0 %861
      %863 = vrot.lane.b32.xlu0 %v471, 8
      %v864 = vpop.permute.xlu0 %863
      %865 = vrot.lane.b32.xlu0 %v472, 8
      %v866 = vpop.permute.xlu0 %865
      %867 = vrot.lane.b32.xlu0 %v473, 8
      %v868 = vpop.permute.xlu0 %867
      %869 = vrot.lane.b32.xlu0 %v474, 8
      %v870 = vpop.permute.xlu0 %869
      %871 = vrot.lane.b32.xlu0 %v475, 8
      %v872 = vpop.permute.xlu0 %871
      %873 = vrot.lane.b32.xlu0 %v476, 8
      %v874 = vpop.permute.xlu0 %873
      %875 = vrot.lane.b32.xlu0 %v477, 8
      %v876 = vpop.permute.xlu0 %875
      %877 = vrot.lane.b32.xlu0 %v478, 8
      %v878 = vpop.permute.xlu0 %877
      %879 = vrot.lane.b32.xlu0 %v479, 8
      %v880 = vpop.permute.xlu0 %879
      %881 = vrot.lane.b32.xlu0 %v480, 8
      %v882 = vpop.permute.xlu0 %881
      %883 = vrot.lane.b32.xlu0 %v481, 8
      %v884 = vpop.permute.xlu0 %883
      %885 = vrot.lane.b32.xlu0 %v482, 8
      %v886 = vpop.permute.xlu0 %885
      %887 = vrot.lane.b32.xlu0 %v483, 8
      %v888 = vpop.permute.xlu0 %887
      %889 = vrot.lane.b32.xlu0 %v484, 8
      %v890 = vpop.permute.xlu0 %889
      %891 = vrot.lane.b32.xlu0 %v485, 8
      %v892 = vpop.permute.xlu0 %891
      %893 = vrot.lane.b32.xlu0 %v486, 8
      %v894 = vpop.permute.xlu0 %893
      %895 = vrot.lane.b32.xlu0 %v487, 8
      %v896 = vpop.permute.xlu0 %895
      %897 = vrot.lane.b32.xlu0 %v488, 8
      %v898 = vpop.permute.xlu0 %897
      %899 = vrot.lane.b32.xlu0 %v489, 8
      %v900 = vpop.permute.xlu0 %899
      %901 = vrot.lane.b32.xlu0 %v490, 8
      %v902 = vpop.permute.xlu0 %901
      %903 = vrot.lane.b32.xlu0 %v491, 8
      %v904 = vpop.permute.xlu0 %903
      %905 = vrot.lane.b32.xlu0 %v492, 8
      %v906 = vpop.permute.xlu0 %905
      %907 = vrot.lane.b32.xlu0 %v493, 8
      %v908 = vpop.permute.xlu0 %907
      %909 = vrot.lane.b32.xlu0 %v494, 8
      %v910 = vpop.permute.xlu0 %909
      %911 = vrot.lane.b32.xlu0 %v495, 8
      %v912 = vpop.permute.xlu0 %911
      %977 = vrot.lane.b32.xlu0 %v496, 12
      %v978 = vpop.permute.xlu0 %977
      %979 = vrot.lane.b32.xlu0 %v497, 12
      %v980 = vpop.permute.xlu0 %979
      %981 = vrot.lane.b32.xlu0 %v498, 12
      %v982 = vpop.permute.xlu0 %981
      %983 = vrot.lane.b32.xlu0 %v499, 12
      %v984 = vpop.permute.xlu0 %983
      %985 = vrot.lane.b32.xlu0 %v500, 12
      %v986 = vpop.permute.xlu0 %985
      %987 = vrot.lane.b32.xlu0 %v501, 12
      %v988 = vpop.permute.xlu0 %987
      %989 = vrot.lane.b32.xlu0 %v502, 12
      %v990 = vpop.permute.xlu0 %989
      %991 = vrot.lane.b32.xlu0 %v503, 12
      %v992 = vpop.permute.xlu0 %991
      %993 = vrot.lane.b32.xlu0 %v504, 12
      %v994 = vpop.permute.xlu0 %993
      %995 = vrot.lane.b32.xlu0 %v505, 12
      %v996 = vpop.permute.xlu0 %995
      %997 = vrot.lane.b32.xlu0 %v506, 12
      %v998 = vpop.permute.xlu0 %997
      %999 = vrot.lane.b32.xlu0 %v507, 12
      %v1000 = vpop.permute.xlu0 %999
      %1001 = vrot.lane.b32.xlu0 %v508, 12
      %v1002 = vpop.permute.xlu0 %1001
      %1003 = vrot.lane.b32.xlu0 %v509, 12
      %v1004 = vpop.permute.xlu0 %1003
      %1005 = vrot.lane.b32.xlu0 %v510, 12
      %v1006 = vpop.permute.xlu0 %1005
      %1007 = vrot.lane.b32.xlu0 %v511, 12
      %v1008 = vpop.permute.xlu0 %1007
      %1009 = vrot.lane.b32.xlu0 %v512, 12
      %v1010 = vpop.permute.xlu0 %1009
      %1011 = vrot.lane.b32.xlu0 %v513, 12
      %v1012 = vpop.permute.xlu0 %1011
      %1013 = vrot.lane.b32.xlu0 %v514, 12
      %v1014 = vpop.permute.xlu0 %1013
      %1015 = vrot.lane.b32.xlu0 %v515, 12
      %v1016 = vpop.permute.xlu0 %1015
      %1017 = vrot.lane.b32.xlu0 %v516, 12
      %v1018 = vpop.permute.xlu0 %1017
      %1019 = vrot.lane.b32.xlu0 %v517, 12
      %v1020 = vpop.permute.xlu0 %1019
      %1021 = vrot.lane.b32.xlu0 %v518, 12
      %v1022 = vpop.permute.xlu0 %1021
      %1023 = vrot.lane.b32.xlu0 %v519, 12
      %v1024 = vpop.permute.xlu0 %1023
      %1025 = vrot.lane.b32.xlu0 %v520, 12
      %v1026 = vpop.permute.xlu0 %1025
      %1027 = vrot.lane.b32.xlu0 %v521, 12
      %v1028 = vpop.permute.xlu0 %1027
      %1029 = vrot.lane.b32.xlu0 %v522, 12
      %v1030 = vpop.permute.xlu0 %1029
      %1031 = vrot.lane.b32.xlu0 %v523, 12
      %v1032 = vpop.permute.xlu0 %1031
      %1033 = vrot.lane.b32.xlu0 %v524, 12
      %v1034 = vpop.permute.xlu0 %1033
      %1035 = vrot.lane.b32.xlu0 %v525, 12
      %v1036 = vpop.permute.xlu0 %1035
      %1037 = vrot.lane.b32.xlu0 %v526, 12
      %v1038 = vpop.permute.xlu0 %1037
      %1039 = vrot.lane.b32.xlu0 %v527, 12
      %v1040 = vpop.permute.xlu0 %1039
      %1105 = vrot.lane.b32.xlu0 %v528, 16
      %v1106 = vpop.permute.xlu0 %1105
      %1107 = vrot.lane.b32.xlu0 %v529, 16
      %v1108 = vpop.permute.xlu0 %1107
      %1109 = vrot.lane.b32.xlu0 %v530, 16
      %v1110 = vpop.permute.xlu0 %1109
      %1111 = vrot.lane.b32.xlu0 %v531, 16
      %v1112 = vpop.permute.xlu0 %1111
      %1113 = vrot.lane.b32.xlu0 %v532, 16
      %v1114 = vpop.permute.xlu0 %1113
      %1115 = vrot.lane.b32.xlu0 %v533, 16
      %v1116 = vpop.permute.xlu0 %1115
      %1117 = vrot.lane.b32.xlu0 %v534, 16
      %v1118 = vpop.permute.xlu0 %1117
      %1119 = vrot.lane.b32.xlu0 %v535, 16
      %v1120 = vpop.permute.xlu0 %1119
      %1121 = vrot.lane.b32.xlu0 %v536, 16
      %v1122 = vpop.permute.xlu0 %1121
      %1123 = vrot.lane.b32.xlu0 %v537, 16
      %v1124 = vpop.permute.xlu0 %1123
      %1125 = vrot.lane.b32.xlu0 %v538, 16
      %v1126 = vpop.permute.xlu0 %1125
      %1127 = vrot.lane.b32.xlu0 %v539, 16
      %v1128 = vpop.permute.xlu0 %1127
      %1129 = vrot.lane.b32.xlu0 %v540, 16
      %v1130 = vpop.permute.xlu0 %1129
      %1131 = vrot.lane.b32.xlu0 %v541, 16
      %v1132 = vpop.permute.xlu0 %1131
      %1133 = vrot.lane.b32.xlu0 %v542, 16
      %v1134 = vpop.permute.xlu0 %1133
      %1135 = vrot.lane.b32.xlu0 %v543, 16
      %v1136 = vpop.permute.xlu0 %1135
      %1137 = vrot.lane.b32.xlu0 %v544, 16
      %v1138 = vpop.permute.xlu0 %1137
      %1139 = vrot.lane.b32.xlu0 %v545, 16
      %v1140 = vpop.permute.xlu0 %1139
      %1141 = vrot.lane.b32.xlu0 %v546, 16
      %v1142 = vpop.permute.xlu0 %1141
      %1143 = vrot.lane.b32.xlu0 %v547, 16
      %v1144 = vpop.permute.xlu0 %1143
      %1145 = vrot.lane.b32.xlu0 %v548, 16
      %v1146 = vpop.permute.xlu0 %1145
      %1147 = vrot.lane.b32.xlu0 %v549, 16
      %v1148 = vpop.permute.xlu0 %1147
      %1149 = vrot.lane.b32.xlu0 %v550, 16
      %v1150 = vpop.permute.xlu0 %1149
      %1151 = vrot.lane.b32.xlu0 %v551, 16
      %v1152 = vpop.permute.xlu0 %1151
      %1153 = vrot.lane.b32.xlu0 %v552, 16
      %v1154 = vpop.permute.xlu0 %1153
      %1155 = vrot.lane.b32.xlu0 %v553, 16
      %v1156 = vpop.permute.xlu0 %1155
      %1157 = vrot.lane.b32.xlu0 %v554, 16
      %v1158 = vpop.permute.xlu0 %1157
      %1159 = vrot.lane.b32.xlu0 %v555, 16
      %v1160 = vpop.permute.xlu0 %1159
      %1161 = vrot.lane.b32.xlu0 %v556, 16
      %v1162 = vpop.permute.xlu0 %1161
      %1163 = vrot.lane.b32.xlu0 %v557, 16
      %v1164 = vpop.permute.xlu0 %1163
      %1165 = vrot.lane.b32.xlu0 %v558, 16
      %v1166 = vpop.permute.xlu0 %1165
      %1167 = vrot.lane.b32.xlu0 %v559, 16
      %v1168 = vpop.permute.xlu0 %1167
      %1233 = vrot.lane.b32.xlu0 %v560, 20
      %v1234 = vpop.permute.xlu0 %1233
      %1235 = vrot.lane.b32.xlu0 %v561, 20
      %v1236 = vpop.permute.xlu0 %1235
      %1237 = vrot.lane.b32.xlu0 %v562, 20
      %v1238 = vpop.permute.xlu0 %1237
      %1239 = vrot.lane.b32.xlu0 %v563, 20
      %v1240 = vpop.permute.xlu0 %1239
      %1241 = vrot.lane.b32.xlu0 %v564, 20
      %v1242 = vpop.permute.xlu0 %1241
      %1243 = vrot.lane.b32.xlu0 %v565, 20
      %v1244 = vpop.permute.xlu0 %1243
      %1245 = vrot.lane.b32.xlu0 %v566, 20
      %v1246 = vpop.permute.xlu0 %1245
      %1247 = vrot.lane.b32.xlu0 %v567, 20
      %v1248 = vpop.permute.xlu0 %1247
      %1249 = vrot.lane.b32.xlu0 %v568, 20
      %v1250 = vpop.permute.xlu0 %1249
      %1251 = vrot.lane.b32.xlu0 %v569, 20
      %v1252 = vpop.permute.xlu0 %1251
      %1253 = vrot.lane.b32.xlu0 %v570, 20
      %v1254 = vpop.permute.xlu0 %1253
      %1255 = vrot.lane.b32.xlu0 %v571, 20
      %v1256 = vpop.permute.xlu0 %1255
      %1257 = vrot.lane.b32.xlu0 %v572, 20
      %v1258 = vpop.permute.xlu0 %1257
      %1259 = vrot.lane.b32.xlu0 %v573, 20
      %v1260 = vpop.permute.xlu0 %1259
      %1261 = vrot.lane.b32.xlu0 %v574, 20
      %v1262 = vpop.permute.xlu0 %1261
      %1263 = vrot.lane.b32.xlu0 %v575, 20
      %v1264 = vpop.permute.xlu0 %1263
      %1265 = vrot.lane.b32.xlu0 %v576, 20
      %v1266 = vpop.permute.xlu0 %1265
      %1267 = vrot.lane.b32.xlu0 %v577, 20
      %v1268 = vpop.permute.xlu0 %1267
      %1269 = vrot.lane.b32.xlu0 %v578, 20
      %v1270 = vpop.permute.xlu0 %1269
      %1271 = vrot.lane.b32.xlu0 %v579, 20
      %v1272 = vpop.permute.xlu0 %1271
      %1273 = vrot.lane.b32.xlu0 %v580, 20
      %v1274 = vpop.permute.xlu0 %1273
      %1275 = vrot.lane.b32.xlu0 %v581, 20
      %v1276 = vpop.permute.xlu0 %1275
      %1277 = vrot.lane.b32.xlu0 %v582, 20
      %v1278 = vpop.permute.xlu0 %1277
      %1279 = vrot.lane.b32.xlu0 %v583, 20
      %v1280 = vpop.permute.xlu0 %1279
      %1281 = vrot.lane.b32.xlu0 %v584, 20
      %v1282 = vpop.permute.xlu0 %1281
      %1283 = vrot.lane.b32.xlu0 %v585, 20
      %v1284 = vpop.permute.xlu0 %1283
      %1285 = vrot.lane.b32.xlu0 %v586, 20
      %v1286 = vpop.permute.xlu0 %1285
      %1287 = vrot.lane.b32.xlu0 %v587, 20
      %v1288 = vpop.permute.xlu0 %1287
      %1289 = vrot.lane.b32.xlu0 %v588, 20
      %v1290 = vpop.permute.xlu0 %1289
      %1291 = vrot.lane.b32.xlu0 %v589, 20
      %v1292 = vpop.permute.xlu0 %1291
      %1293 = vrot.lane.b32.xlu0 %v590, 20
      %v1294 = vpop.permute.xlu0 %1293
      %1295 = vrot.lane.b32.xlu0 %v591, 20
      %v1296 = vpop.permute.xlu0 %1295
      %1361 = vrot.lane.b32.xlu0 %v593, 24
      %v1362 = vpop.permute.xlu0 %1361
      %1363 = vrot.lane.b32.xlu0 %v594, 24
      %v1364 = vpop.permute.xlu0 %1363
      %1365 = vrot.lane.b32.xlu0 %v595, 24
      %v1366 = vpop.permute.xlu0 %1365
      %1367 = vrot.lane.b32.xlu0 %v596, 24
      %v1368 = vpop.permute.xlu0 %1367
      %1369 = vrot.lane.b32.xlu0 %v597, 24
      %v1370 = vpop.permute.xlu0 %1369
      %1371 = vrot.lane.b32.xlu0 %v598, 24
      %v1372 = vpop.permute.xlu0 %1371
      %1373 = vrot.lane.b32.xlu0 %v599, 24
      %v1374 = vpop.permute.xlu0 %1373
      %1375 = vrot.lane.b32.xlu0 %v600, 24
      %v1376 = vpop.permute.xlu0 %1375
      %1377 = vrot.lane.b32.xlu0 %v601, 24
      %v1378 = vpop.permute.xlu0 %1377
      %1379 = vrot.lane.b32.xlu0 %v602, 24
      %v1380 = vpop.permute.xlu0 %1379
      %1381 = vrot.lane.b32.xlu0 %v603, 24
      %v1382 = vpop.permute.xlu0 %1381
      %1383 = vrot.lane.b32.xlu0 %v604, 24
      %v1384 = vpop.permute.xlu0 %1383
      %1385 = vrot.lane.b32.xlu0 %v605, 24
      %v1386 = vpop.permute.xlu0 %1385
      %1387 = vrot.lane.b32.xlu0 %v606, 24
      %v1388 = vpop.permute.xlu0 %1387
      %1389 = vrot.lane.b32.xlu0 %v607, 24
      %v1390 = vpop.permute.xlu0 %1389
      %1391 = vrot.lane.b32.xlu0 %v608, 24
      %v1392 = vpop.permute.xlu0 %1391
      %1393 = vrot.lane.b32.xlu0 %v609, 24
      %v1394 = vpop.permute.xlu0 %1393
      %1395 = vrot.lane.b32.xlu0 %v610, 24
      %v1396 = vpop.permute.xlu0 %1395
      %1397 = vrot.lane.b32.xlu0 %v611, 24
      %v1398 = vpop.permute.xlu0 %1397
      %1399 = vrot.lane.b32.xlu0 %v612, 24
      %v1400 = vpop.permute.xlu0 %1399
      %1401 = vrot.lane.b32.xlu0 %v613, 24
      %v1402 = vpop.permute.xlu0 %1401
      %1403 = vrot.lane.b32.xlu0 %v614, 24
      %v1404 = vpop.permute.xlu0 %1403
      %1405 = vrot.lane.b32.xlu0 %v615, 24
      %v1406 = vpop.permute.xlu0 %1405
      %1407 = vrot.lane.b32.xlu0 %v616, 24
      %v1408 = vpop.permute.xlu0 %1407
      %1409 = vrot.lane.b32.xlu0 %v617, 24
      %v1410 = vpop.permute.xlu0 %1409
      %1411 = vrot.lane.b32.xlu0 %v618, 24
      %v1412 = vpop.permute.xlu0 %1411
      %1413 = vrot.lane.b32.xlu0 %v619, 24
      %v1414 = vpop.permute.xlu0 %1413
      %1415 = vrot.lane.b32.xlu0 %v620, 24
      %v1416 = vpop.permute.xlu0 %1415
      %1417 = vrot.lane.b32.xlu0 %v621, 24
      %v1418 = vpop.permute.xlu0 %1417
      %1419 = vrot.lane.b32.xlu0 %v622, 24
      %v1420 = vpop.permute.xlu0 %1419
      %1421 = vrot.lane.b32.xlu0 %v623, 24
      %v1422 = vpop.permute.xlu0 %1421
      %1423 = vrot.lane.b32.xlu0 %v624, 24
      %v1424 = vpop.permute.xlu0 %1423
      %1489 = vrot.lane.b32.xlu0 %v625, 28
      %v1490 = vpop.permute.xlu0 %1489
      %1491 = vrot.lane.b32.xlu0 %v626, 28
      %v1492 = vpop.permute.xlu0 %1491
      %1493 = vrot.lane.b32.xlu0 %v627, 28
      %v1494 = vpop.permute.xlu0 %1493
      %1495 = vrot.lane.b32.xlu0 %v628, 28
      %v1496 = vpop.permute.xlu0 %1495
      %1497 = vrot.lane.b32.xlu0 %v629, 28
      %v1498 = vpop.permute.xlu0 %1497
      %1499 = vrot.lane.b32.xlu0 %v630, 28
      %v1500 = vpop.permute.xlu0 %1499
      %1501 = vrot.lane.b32.xlu0 %v631, 28
      %v1502 = vpop.permute.xlu0 %1501
      %1503 = vrot.lane.b32.xlu0 %v632, 28
      %v1504 = vpop.permute.xlu0 %1503
      %1505 = vrot.lane.b32.xlu0 %v633, 28
      %v1506 = vpop.permute.xlu0 %1505
      %1507 = vrot.lane.b32.xlu0 %v634, 28
      %v1508 = vpop.permute.xlu0 %1507
      %1509 = vrot.lane.b32.xlu0 %v635, 28
      %v1510 = vpop.permute.xlu0 %1509
      %1511 = vrot.lane.b32.xlu0 %v636, 28
      %v1512 = vpop.permute.xlu0 %1511
      %1513 = vrot.lane.b32.xlu0 %v637, 28
      %v1514 = vpop.permute.xlu0 %1513
      %1515 = vrot.lane.b32.xlu0 %v638, 28
      %v1516 = vpop.permute.xlu0 %1515
      %1517 = vrot.lane.b32.xlu0 %v639, 28
      %v1518 = vpop.permute.xlu0 %1517
      %1519 = vrot.lane.b32.xlu0 %v640, 28
      %v1520 = vpop.permute.xlu0 %1519
      %1521 = vrot.lane.b32.xlu0 %v641, 28
      %v1522 = vpop.permute.xlu0 %1521
      %1523 = vrot.lane.b32.xlu0 %v642, 28
      %v1524 = vpop.permute.xlu0 %1523
      %1525 = vrot.lane.b32.xlu0 %v643, 28
      %v1526 = vpop.permute.xlu0 %1525
      %1527 = vrot.lane.b32.xlu0 %v644, 28
      %v1528 = vpop.permute.xlu0 %1527
      %1529 = vrot.lane.b32.xlu0 %v645, 28
      %v1530 = vpop.permute.xlu0 %1529
      %1531 = vrot.lane.b32.xlu0 %v646, 28
      %v1532 = vpop.permute.xlu0 %1531
      %1533 = vrot.lane.b32.xlu0 %v647, 28
      %v1534 = vpop.permute.xlu0 %1533
      %1535 = vrot.lane.b32.xlu0 %v648, 28
      %v1536 = vpop.permute.xlu0 %1535
      %1537 = vrot.lane.b32.xlu0 %v649, 28
      %v1538 = vpop.permute.xlu0 %1537
      %1539 = vrot.lane.b32.xlu0 %v650, 28
      %v1540 = vpop.permute.xlu0 %1539
      %1541 = vrot.lane.b32.xlu0 %v651, 28
      %v1542 = vpop.permute.xlu0 %1541
      %1543 = vrot.lane.b32.xlu0 %v652, 28
      %v1544 = vpop.permute.xlu0 %1543
      %1545 = vrot.lane.b32.xlu0 %v653, 28
      %v1546 = vpop.permute.xlu0 %1545
      %1547 = vrot.lane.b32.xlu0 %v654, 28
      %v1548 = vpop.permute.xlu0 %1547
      %1549 = vrot.lane.b32.xlu0 %v655, 28
      %v1550 = vpop.permute.xlu0 %1549
      %1551 = vrot.lane.b32.xlu0 %v656, 28
      %v1552 = vpop.permute.xlu0 %1551
      %1617 = vrot.lane.b32.xlu0 %v657, 32
      %v1618 = vpop.permute.xlu0 %1617
      %1619 = vrot.lane.b32.xlu0 %v658, 32
      %v1620 = vpop.permute.xlu0 %1619
      %1621 = vrot.lane.b32.xlu0 %v659, 32
      %v1622 = vpop.permute.xlu0 %1621
      %1623 = vrot.lane.b32.xlu0 %v660, 32
      %v1624 = vpop.permute.xlu0 %1623
      %1625 = vrot.lane.b32.xlu0 %v661, 32
      %v1626 = vpop.permute.xlu0 %1625
      %1627 = vrot.lane.b32.xlu0 %v662, 32
      %v1628 = vpop.permute.xlu0 %1627
      %1629 = vrot.lane.b32.xlu0 %v663, 32
      %v1630 = vpop.permute.xlu0 %1629
      %1631 = vrot.lane.b32.xlu0 %v664, 32
      %v1632 = vpop.permute.xlu0 %1631
      %1633 = vrot.lane.b32.xlu0 %v665, 32
      %v1634 = vpop.permute.xlu0 %1633
      %1635 = vrot.lane.b32.xlu0 %v666, 32
      %v1636 = vpop.permute.xlu0 %1635
      %1637 = vrot.lane.b32.xlu0 %v667, 32
      %v1638 = vpop.permute.xlu0 %1637
      %1639 = vrot.lane.b32.xlu0 %v668, 32
      %v1640 = vpop.permute.xlu0 %1639
      %1641 = vrot.lane.b32.xlu0 %v669, 32
      %v1642 = vpop.permute.xlu0 %1641
      %1643 = vrot.lane.b32.xlu0 %v670, 32
      %v1644 = vpop.permute.xlu0 %1643
      %1645 = vrot.lane.b32.xlu0 %v671, 32
      %v1646 = vpop.permute.xlu0 %1645
      %1647 = vrot.lane.b32.xlu0 %v672, 32
      %v1648 = vpop.permute.xlu0 %1647
      %1649 = vrot.lane.b32.xlu0 %v673, 32
      %v1650 = vpop.permute.xlu0 %1649
      %1651 = vrot.lane.b32.xlu0 %v674, 32
      %v1652 = vpop.permute.xlu0 %1651
      %1653 = vrot.lane.b32.xlu0 %v675, 32
      %v1654 = vpop.permute.xlu0 %1653
      %1655 = vrot.lane.b32.xlu0 %v676, 32
      %v1656 = vpop.permute.xlu0 %1655
      %1657 = vrot.lane.b32.xlu0 %v677, 32
      %v1658 = vpop.permute.xlu0 %1657
      %1659 = vrot.lane.b32.xlu0 %v678, 32
      %v1660 = vpop.permute.xlu0 %1659
      %1661 = vrot.lane.b32.xlu0 %v679, 32
      %v1662 = vpop.permute.xlu0 %1661
      %1663 = vrot.lane.b32.xlu0 %v680, 32
      %v1664 = vpop.permute.xlu0 %1663
      %1665 = vrot.lane.b32.xlu0 %v681, 32
      %v1666 = vpop.permute.xlu0 %1665
      %1667 = vrot.lane.b32.xlu0 %v682, 32
      %v1668 = vpop.permute.xlu0 %1667
      %1669 = vrot.lane.b32.xlu0 %v683, 32
      %v1670 = vpop.permute.xlu0 %1669
      %1671 = vrot.lane.b32.xlu0 %v684, 32
      %v1672 = vpop.permute.xlu0 %1671
      %1673 = vrot.lane.b32.xlu0 %v685, 32
      %v1674 = vpop.permute.xlu0 %1673
      %1675 = vrot.lane.b32.xlu0 %v686, 32
      %v1676 = vpop.permute.xlu0 %1675
      %1677 = vrot.lane.b32.xlu0 %v687, 32
      %v1678 = vpop.permute.xlu0 %1677
      %1679 = vrot.lane.b32.xlu0 %v688, 32
      %v1680 = vpop.permute.xlu0 %1679
      %v1713 = vsel %vm279, %v400, %v722
      %v1714 = vsel %vm279, %v401, %v724
      %v1715 = vsel %vm279, %v402, %v726
      %v1716 = vsel %vm279, %v403, %v728
      %v1717 = vsel %vm279, %v404, %v730
      %v1718 = vsel %vm279, %v405, %v732
      %v1719 = vsel %vm279, %v406, %v734
      %v1720 = vsel %vm279, %v407, %v736
      %v1721 = vsel %vm279, %v408, %v738
      %v1722 = vsel %vm279, %v409, %v740
      %v1723 = vsel %vm279, %v410, %v742
      %v1724 = vsel %vm279, %v411, %v744
      %v1725 = vsel %vm279, %v412, %v746
      %v1726 = vsel %vm279, %v413, %v748
      %v1727 = vsel %vm279, %v414, %v750
      %v1728 = vsel %vm279, %v415, %v752
      %v1729 = vsel %vm279, %v416, %v754
      %v1730 = vsel %vm279, %v417, %v756
      %v1731 = vsel %vm279, %v418, %v758
      %v1732 = vsel %vm279, %v419, %v760
      %v1733 = vsel %vm279, %v420, %v762
      %v1734 = vsel %vm279, %v421, %v764
      %v1735 = vsel %vm279, %v422, %v766
      %v1736 = vsel %vm279, %v423, %v768
      %v1737 = vsel %vm279, %v424, %v770
      %v1738 = vsel %vm279, %v425, %v772
      %v1739 = vsel %vm279, %v426, %v774
      %v1740 = vsel %vm279, %v427, %v776
      %v1741 = vsel %vm279, %v428, %v778
      %v1742 = vsel %vm279, %v429, %v780
      %v1743 = vsel %vm279, %v430, %v782
      %v1744 = vsel %vm279, %v431, %v784
      %vm1745 = vcmask 64512
      %v1746 = vsel %vm1745, %v1713, %v850
      %v1747 = vsel %vm1745, %v1714, %v852
      %v1748 = vsel %vm1745, %v1715, %v854
      %v1749 = vsel %vm1745, %v1716, %v856
      %v1750 = vsel %vm1745, %v1717, %v858
      %v1751 = vsel %vm1745, %v1718, %v860
      %v1752 = vsel %vm1745, %v1719, %v862
      %v1753 = vsel %vm1745, %v1720, %v864
      %v1754 = vsel %vm1745, %v1721, %v866
      %v1755 = vsel %vm1745, %v1722, %v868
      %v1756 = vsel %vm1745, %v1723, %v870
      %v1757 = vsel %vm1745, %v1724, %v872
      %v1758 = vsel %vm1745, %v1725, %v874
      %v1759 = vsel %vm1745, %v1726, %v876
      %v1760 = vsel %vm1745, %v1727, %v878
      %v1761 = vsel %vm1745, %v1728, %v880
      %v1762 = vsel %vm1745, %v1729, %v882
      %v1763 = vsel %vm1745, %v1730, %v884
      %v1764 = vsel %vm1745, %v1731, %v886
      %v1765 = vsel %vm1745, %v1732, %v888
      %v1766 = vsel %vm1745, %v1733, %v890
      %v1767 = vsel %vm1745, %v1734, %v892
      %v1768 = vsel %vm1745, %v1735, %v894
      %v1769 = vsel %vm1745, %v1736, %v896
      %v1770 = vsel %vm1745, %v1737, %v898
      %v1771 = vsel %vm1745, %v1738, %v900
      %v1772 = vsel %vm1745, %v1739, %v902
      %v1773 = vsel %vm1745, %v1740, %v904
      %v1774 = vsel %vm1745, %v1741, %v906
      %v1775 = vsel %vm1745, %v1742, %v908
      %v1776 = vsel %vm1745, %v1743, %v910
      %v1777 = vsel %vm1745, %v1744, %v912
      %vm1778 = vcmask 97280
      %v1779 = vsel %vm1778, %v1746, %v978
      %v1780 = vsel %vm1778, %v1747, %v980
      %v1781 = vsel %vm1778, %v1748, %v982
      %v1782 = vsel %vm1778, %v1749, %v984
      %v1783 = vsel %vm1778, %v1750, %v986
      %v1784 = vsel %vm1778, %v1751, %v988
      %v1785 = vsel %vm1778, %v1752, %v990
      %v1786 = vsel %vm1778, %v1753, %v992
      %v1787 = vsel %vm1778, %v1754, %v994
      %v1788 = vsel %vm1778, %v1755, %v996
      %v1789 = vsel %vm1778, %v1756, %v998
      %v1790 = vsel %vm1778, %v1757, %v1000
      %v1791 = vsel %vm1778, %v1758, %v1002
      %v1792 = vsel %vm1778, %v1759, %v1004
      %v1793 = vsel %vm1778, %v1760, %v1006
      %v1794 = vsel %vm1778, %v1761, %v1008
      %v1795 = vsel %vm1778, %v1762, %v1010
      %v1796 = vsel %vm1778, %v1763, %v1012
      %v1797 = vsel %vm1778, %v1764, %v1014
      %v1798 = vsel %vm1778, %v1765, %v1016
      %v1799 = vsel %vm1778, %v1766, %v1018
      %v1800 = vsel %vm1778, %v1767, %v1020
      %v1801 = vsel %vm1778, %v1768, %v1022
      %v1802 = vsel %vm1778, %v1769, %v1024
      %v1803 = vsel %vm1778, %v1770, %v1026
      %v1804 = vsel %vm1778, %v1771, %v1028
      %v1805 = vsel %vm1778, %v1772, %v1030
      %v1806 = vsel %vm1778, %v1773, %v1032
      %v1807 = vsel %vm1778, %v1774, %v1034
      %v1808 = vsel %vm1778, %v1775, %v1036
      %v1809 = vsel %vm1778, %v1776, %v1038
      %v1810 = vsel %vm1778, %v1777, %v1040
      %vm1811 = vcmask 130048
      %v1812 = vsel %vm1811, %v1779, %v1106
      %v1813 = vsel %vm1811, %v1780, %v1108
      %v1814 = vsel %vm1811, %v1781, %v1110
      %v1815 = vsel %vm1811, %v1782, %v1112
      %v1816 = vsel %vm1811, %v1783, %v1114
      %v1817 = vsel %vm1811, %v1784, %v1116
      %v1818 = vsel %vm1811, %v1785, %v1118
      %v1819 = vsel %vm1811, %v1786, %v1120
      %v1820 = vsel %vm1811, %v1787, %v1122
      %v1821 = vsel %vm1811, %v1788, %v1124
      %v1822 = vsel %vm1811, %v1789, %v1126
      %v1823 = vsel %vm1811, %v1790, %v1128
      %v1824 = vsel %vm1811, %v1791, %v1130
      %v1825 = vsel %vm1811, %v1792, %v1132
      %v1826 = vsel %vm1811, %v1793, %v1134
      %v1827 = vsel %vm1811, %v1794, %v1136
      %v1828 = vsel %vm1811, %v1795, %v1138
      %v1829 = vsel %vm1811, %v1796, %v1140
      %v1830 = vsel %vm1811, %v1797, %v1142
      %v1831 = vsel %vm1811, %v1798, %v1144
      %v1832 = vsel %vm1811, %v1799, %v1146
      %v1833 = vsel %vm1811, %v1800, %v1148
      %v1834 = vsel %vm1811, %v1801, %v1150
      %v1835 = vsel %vm1811, %v1802, %v1152
      %v1836 = vsel %vm1811, %v1803, %v1154
      %v1837 = vsel %vm1811, %v1804, %v1156
      %v1838 = vsel %vm1811, %v1805, %v1158
      %v1839 = vsel %vm1811, %v1806, %v1160
      %v1840 = vsel %vm1811, %v1807, %v1162
      %v1841 = vsel %vm1811, %v1808, %v1164
      %v1842 = vsel %vm1811, %v1809, %v1166
      %v1843 = vsel %vm1811, %v1810, %v1168
      %vm1844 = vcmask 162816
      %v1845 = vsel %vm1844, %v1812, %v1234
      %v1846 = vsel %vm1844, %v1813, %v1236
      %v1847 = vsel %vm1844, %v1814, %v1238
      %v1848 = vsel %vm1844, %v1815, %v1240
      %v1849 = vsel %vm1844, %v1816, %v1242
      %v1850 = vsel %vm1844, %v1817, %v1244
      %v1851 = vsel %vm1844, %v1818, %v1246
      %v1852 = vsel %vm1844, %v1819, %v1248
      %v1853 = vsel %vm1844, %v1820, %v1250
      %v1854 = vsel %vm1844, %v1821, %v1252
      %v1855 = vsel %vm1844, %v1822, %v1254
      %v1856 = vsel %vm1844, %v1823, %v1256
      %v1857 = vsel %vm1844, %v1824, %v1258
      %v1858 = vsel %vm1844, %v1825, %v1260
      %v1859 = vsel %vm1844, %v1826, %v1262
      %v1860 = vsel %vm1844, %v1827, %v1264
      %v1861 = vsel %vm1844, %v1828, %v1266
      %v1862 = vsel %vm1844, %v1829, %v1268
      %v1863 = vsel %vm1844, %v1830, %v1270
      %v1864 = vsel %vm1844, %v1831, %v1272
      %v1865 = vsel %vm1844, %v1832, %v1274
      %v1866 = vsel %vm1844, %v1833, %v1276
      %v1867 = vsel %vm1844, %v1834, %v1278
      %v1868 = vsel %vm1844, %v1835, %v1280
      %v1869 = vsel %vm1844, %v1836, %v1282
      %v1870 = vsel %vm1844, %v1837, %v1284
      %v1871 = vsel %vm1844, %v1838, %v1286
      %v1872 = vsel %vm1844, %v1839, %v1288
      %v1873 = vsel %vm1844, %v1840, %v1290
      %v1874 = vsel %vm1844, %v1841, %v1292
      %v1875 = vsel %vm1844, %v1842, %v1294
      %v1876 = vsel %vm1844, %v1843, %v1296
      %vm1877 = vcmask 195584
      %v1878 = vsel %vm1877, %v1845, %v1362
      %v1879 = vsel %vm1877, %v1846, %v1364
      %v1880 = vsel %vm1877, %v1847, %v1366
      %v1881 = vsel %vm1877, %v1848, %v1368
      %v1882 = vsel %vm1877, %v1849, %v1370
      %v1883 = vsel %vm1877, %v1850, %v1372
      %v1884 = vsel %vm1877, %v1851, %v1374
      %v1885 = vsel %vm1877, %v1852, %v1376
      %v1886 = vsel %vm1877, %v1853, %v1378
      %v1887 = vsel %vm1877, %v1854, %v1380
      %v1888 = vsel %vm1877, %v1855, %v1382
      %v1889 = vsel %vm1877, %v1856, %v1384
      %v1890 = vsel %vm1877, %v1857, %v1386
      %v1891 = vsel %vm1877, %v1858, %v1388
      %v1892 = vsel %vm1877, %v1859, %v1390
      %v1893 = vsel %vm1877, %v1860, %v1392
      %v1894 = vsel %vm1877, %v1861, %v1394
      %v1895 = vsel %vm1877, %v1862, %v1396
      %v1896 = vsel %vm1877, %v1863, %v1398
      %v1897 = vsel %vm1877, %v1864, %v1400
      %v1898 = vsel %vm1877, %v1865, %v1402
      %v1899 = vsel %vm1877, %v1866, %v1404
      %v1900 = vsel %vm1877, %v1867, %v1406
      %v1901 = vsel %vm1877, %v1868, %v1408
      %v1902 = vsel %vm1877, %v1869, %v1410
      %v1903 = vsel %vm1877, %v1870, %v1412
      %v1904 = vsel %vm1877, %v1871, %v1414
      %v1905 = vsel %vm1877, %v1872, %v1416
      %v1906 = vsel %vm1877, %v1873, %v1418
      %v1907 = vsel %vm1877, %v1874, %v1420
      %v1908 = vsel %vm1877, %v1875, %v1422
      %v1909 = vsel %vm1877, %v1876, %v1424
      %vm1910 = vcmask 228352
      %v1911 = vsel %vm1910, %v1878, %v1490
      %v1912 = vsel %vm1910, %v1879, %v1492
      %v1913 = vsel %vm1910, %v1880, %v1494
      %v1914 = vsel %vm1910, %v1881, %v1496
      %v1915 = vsel %vm1910, %v1882, %v1498
      %v1916 = vsel %vm1910, %v1883, %v1500
      %v1917 = vsel %vm1910, %v1884, %v1502
      %v1918 = vsel %vm1910, %v1885, %v1504
      %v1919 = vsel %vm1910, %v1886, %v1506
      %v1920 = vsel %vm1910, %v1887, %v1508
      %v1921 = vsel %vm1910, %v1888, %v1510
      %v1922 = vsel %vm1910, %v1889, %v1512
      %v1923 = vsel %vm1910, %v1890, %v1514
      %v1924 = vsel %vm1910, %v1891, %v1516
      %v1925 = vsel %vm1910, %v1892, %v1518
      %v1926 = vsel %vm1910, %v1893, %v1520
      %v1927 = vsel %vm1910, %v1894, %v1522
      %v1928 = vsel %vm1910, %v1895, %v1524
      %v1929 = vsel %vm1910, %v1896, %v1526
      %v1930 = vsel %vm1910, %v1897, %v1528
      %v1931 = vsel %vm1910, %v1898, %v1530
      %v1932 = vsel %vm1910, %v1899, %v1532
      %v1933 = vsel %vm1910, %v1900, %v1534
      %v1934 = vsel %vm1910, %v1901, %v1536
      %v1935 = vsel %vm1910, %v1902, %v1538
      %v1936 = vsel %vm1910, %v1903, %v1540
      %v1937 = vsel %vm1910, %v1904, %v1542
      %v1938 = vsel %vm1910, %v1905, %v1544
      %v1939 = vsel %vm1910, %v1906, %v1546
      %v1940 = vsel %vm1910, %v1907, %v1548
      %v1941 = vsel %vm1910, %v1908, %v1550
      %v1942 = vsel %vm1910, %v1909, %v1552
      %vm1943 = vcmask 261120
      %v1944 = vsel %vm1943, %v1911, %v1618
      %v1945 = vsel %vm1943, %v1912, %v1620
      %v1946 = vsel %vm1943, %v1913, %v1622
      %v1947 = vsel %vm1943, %v1914, %v1624
      %v1948 = vsel %vm1943, %v1915, %v1626
      %v1949 = vsel %vm1943, %v1916, %v1628
      %v1950 = vsel %vm1943, %v1917, %v1630
      %v1951 = vsel %vm1943, %v1918, %v1632
      %v1952 = vsel %vm1943, %v1919, %v1634
      %v1953 = vsel %vm1943, %v1920, %v1636
      %v1954 = vsel %vm1943, %v1921, %v1638
      %v1955 = vsel %vm1943, %v1922, %v1640
      %v1956 = vsel %vm1943, %v1923, %v1642
      %v1957 = vsel %vm1943, %v1924, %v1644
      %v1958 = vsel %vm1943, %v1925, %v1646
      %v1959 = vsel %vm1943, %v1926, %v1648
      %v1960 = vsel %vm1943, %v1927, %v1650
      %v1961 = vsel %vm1943, %v1928, %v1652
      %v1962 = vsel %vm1943, %v1929, %v1654
      %v1963 = vsel %vm1943, %v1930, %v1656
      %v1964 = vsel %vm1943, %v1931, %v1658
      %v1965 = vsel %vm1943, %v1932, %v1660
      %v1966 = vsel %vm1943, %v1933, %v1662
      %v1967 = vsel %vm1943, %v1934, %v1664
      %v1968 = vsel %vm1943, %v1935, %v1666
      %v1969 = vsel %vm1943, %v1936, %v1668
      %v1970 = vsel %vm1943, %v1937, %v1670
      %v1971 = vsel %vm1943, %v1938, %v1672
      %v1972 = vsel %vm1943, %v1939, %v1674
      %v1973 = vsel %vm1943, %v1940, %v1676
      %v1974 = vsel %vm1943, %v1941, %v1678
      %v1975 = vsel %vm1943, %v1942, %v1680
      %v1976 = vld [vmem:[%s1] sm:$0xff]
      %v1977 = vld [vmem:[%s1 + $0x8] sm:$0xff]
      %v1978 = vld [vmem:[%s1 + $0x10] sm:$0xff]
      %v1979 = vld [vmem:[%s1 + $0x18] sm:$0xff]
      %v1980 = vld [vmem:[%s1 + $0x20] sm:$0xf]
      %v1981 = vld [vmem:[%s2] sm:$0x1]
      %v1983 = vperm.slane %v1981, 0
      %vm1985 = vcmask 293888
      %v1987 = vsel %vm1985, %v1944, 0
      %v1990 = vsel %vm1985, %v1945, 0
      %v1993 = vsel %vm1985, %v1946, 0
      %v1996 = vsel %vm1985, %v1947, 0
      %v1999 = vsel %vm1985, %v1948, 0
      %v2002 = vsel %vm1985, %v1949, 0
      %v2005 = vsel %vm1985, %v1950, 0
      %v2008 = vsel %vm1985, %v1951, 0
      %v2011 = vsel %vm1985, %v1952, 0
      %v2014 = vsel %vm1985, %v1953, 0
      %v2017 = vsel %vm1985, %v1954, 0
      %v2020 = vsel %vm1985, %v1955, 0
      %v2023 = vsel %vm1985, %v1956, 0
      %v2026 = vsel %vm1985, %v1957, 0
      %v2029 = vsel %vm1985, %v1958, 0
      %v2032 = vsel %vm1985, %v1959, 0
      %v2035 = vsel %vm1985, %v1960, 0
      %v2038 = vsel %vm1985, %v1961, 0
      %v2041 = vsel %vm1985, %v1962, 0
      %v2044 = vsel %vm1985, %v1963, 0
      %v2047 = vsel %vm1985, %v1964, 0
      %v2050 = vsel %vm1985, %v1965, 0
      %v2053 = vsel %vm1985, %v1966, 0
      %v2056 = vsel %vm1985, %v1967, 0
      %v2059 = vsel %vm1985, %v1968, 0
      %v2062 = vsel %vm1985, %v1969, 0
      %v2065 = vsel %vm1985, %v1970, 0
      %v2068 = vsel %vm1985, %v1971, 0
      %v2071 = vsel %vm1985, %v1972, 0
      %v2074 = vsel %vm1985, %v1973, 0
      %v2077 = vsel %vm1985, %v1974, 0
      %v2080 = vsel %vm1985, %v1975, 0
      %vm2082 = vcmask 1043456
      %v2084 = vsel %vm2082, %v1980, 0
      %2086 = vmatpush.msra.mxu0 0.0
      %2087 = vmatpush.msra.mxu0 0.0
      %2088 = vmatpush.msra.mxu0 0.0
      %2089 = vmatpush.msra.mxu0 0.0
      %2090 = vmatpush.msra.mxu0 0.0
      %2091 = vmatpush.msra.mxu0 0.0
      %2092 = vmatpush.msra.mxu0 0.0
      %2093 = vmatpush.msra.mxu0 0.0
      %2094 = vmatpush.msra.mxu0 0.0
      %2095 = vmatpush.msra.mxu0 0.0
      %2096 = vmatpush.msra.mxu0 0.0
      %2097 = vmatpush.msra.mxu0 %v2084
      %2098 = vmatpush.msra.mxu0 %v1979
      %2099 = vmatpush.msra.mxu0 %v1978
      %2100 = vmatpush.msra.mxu0 %v1977
      %2101 = vmatpush.msra.mxu0 %v1976
      %2102 = vmatmul.f32.gmra.mxu0 %v1987
      %v2103 = vpop.f32.mrf.mxu0
      %v2104 = vadd.f32 %v1983, %v2103
      %2105 = vmatmul.f32.gmra.mxu0 %v1990
      %v2106 = vpop.f32.mrf.mxu0
      %v2107 = vadd.f32 %v1983, %v2106
      %2108 = vmatmul.f32.gmra.mxu0 %v1993
      %v2109 = vpop.f32.mrf.mxu0
      %v2110 = vadd.f32 %v1983, %v2109
      %2111 = vmatmul.f32.gmra.mxu0 %v1996
      %v2112 = vpop.f32.mrf.mxu0
      %v2113 = vadd.f32 %v1983, %v2112
      %2114 = vmatmul.f32.gmra.mxu0 %v1999
      %v2115 = vpop.f32.mrf.mxu0
      %v2116 = vadd.f32 %v1983, %v2115
      %2117 = vmatmul.f32.gmra.mxu0 %v2002
      %v2118 = vpop.f32.mrf.mxu0
      %v2119 = vadd.f32 %v1983, %v2118
      %2120 = vmatmul.f32.gmra.mxu0 %v2005
      %v2121 = vpop.f32.mrf.mxu0
      %v2122 = vadd.f32 %v1983, %v2121
      %2123 = vmatmul.f32.gmra.mxu0 %v2008
      %v2124 = vpop.f32.mrf.mxu0
      %v2125 = vadd.f32 %v1983, %v2124
      %2126 = vmatmul.f32.gmra.mxu0 %v2011
      %v2127 = vpop.f32.mrf.mxu0
      %v2128 = vadd.f32 %v1983, %v2127
      %2129 = vmatmul.f32.gmra.mxu0 %v2014
      %v2130 = vpop.f32.mrf.mxu0
      %v2131 = vadd.f32 %v1983, %v2130
      %2132 = vmatmul.f32.gmra.mxu0 %v2017
      %v2133 = vpop.f32.mrf.mxu0
      %v2134 = vadd.f32 %v1983, %v2133
      %2135 = vmatmul.f32.gmra.mxu0 %v2020
      %v2136 = vpop.f32.mrf.mxu0
      %v2137 = vadd.f32 %v1983, %v2136
      %2138 = vmatmul.f32.gmra.mxu0 %v2023
      %v2139 = vpop.f32.mrf.mxu0
      %v2140 = vadd.f32 %v1983, %v2139
      %2141 = vmatmul.f32.gmra.mxu0 %v2026
      %v2142 = vpop.f32.mrf.mxu0
      %v2143 = vadd.f32 %v1983, %v2142
      %2144 = vmatmul.f32.gmra.mxu0 %v2029
      %v2145 = vpop.f32.mrf.mxu0
      %v2146 = vadd.f32 %v1983, %v2145
      %2147 = vmatmul.f32.gmra.mxu0 %v2032
      %v2148 = vpop.f32.mrf.mxu0
      %v2149 = vadd.f32 %v1983, %v2148
      %2150 = vmatmul.f32.gmra.mxu0 %v2035
      %v2151 = vpop.f32.mrf.mxu0
      %v2152 = vadd.f32 %v1983, %v2151
      %2153 = vmatmul.f32.gmra.mxu0 %v2038
      %v2154 = vpop.f32.mrf.mxu0
      %v2155 = vadd.f32 %v1983, %v2154
      %2156 = vmatmul.f32.gmra.mxu0 %v2041
      %v2157 = vpop.f32.mrf.mxu0
      %v2158 = vadd.f32 %v1983, %v2157
      %2159 = vmatmul.f32.gmra.mxu0 %v2044
      %v2160 = vpop.f32.mrf.mxu0
      %v2161 = vadd.f32 %v1983, %v2160
      %2162 = vmatmul.f32.gmra.mxu0 %v2047
      %v2163 = vpop.f32.mrf.mxu0
      %v2164 = vadd.f32 %v1983, %v2163
      %2165 = vmatmul.f32.gmra.mxu0 %v2050
      %v2166 = vpop.f32.mrf.mxu0
      %v2167 = vadd.f32 %v1983, %v2166
      %2168 = vmatmul.f32.gmra.mxu0 %v2053
      %v2169 = vpop.f32.mrf.mxu0
      %v2170 = vadd.f32 %v1983, %v2169
      %2171 = vmatmul.f32.gmra.mxu0 %v2056
      %v2172 = vpop.f32.mrf.mxu0
      %v2173 = vadd.f32 %v1983, %v2172
      %2174 = vmatmul.f32.gmra.mxu0 %v2059
      %v2175 = vpop.f32.mrf.mxu0
      %v2176 = vadd.f32 %v1983, %v2175
      %2177 = vmatmul.f32.gmra.mxu0 %v2062
      %v2178 = vpop.f32.mrf.mxu0
      %v2179 = vadd.f32 %v1983, %v2178
      %2180 = vmatmul.f32.gmra.mxu0 %v2065
      %v2181 = vpop.f32.mrf.mxu0
      %v2182 = vadd.f32 %v1983, %v2181
      %2183 = vmatmul.f32.gmra.mxu0 %v2068
      %v2184 = vpop.f32.mrf.mxu0
      %v2185 = vadd.f32 %v1983, %v2184
      %2186 = vmatmul.f32.gmra.mxu0 %v2071
      %v2187 = vpop.f32.mrf.mxu0
      %v2188 = vadd.f32 %v1983, %v2187
      %2189 = vmatmul.f32.gmra.mxu0 %v2074
      %v2190 = vpop.f32.mrf.mxu0
      %v2191 = vadd.f32 %v1983, %v2190
      %2192 = vmatmul.f32.gmra.mxu0 %v2077
      %v2193 = vpop.f32.mrf.mxu0
      %v2194 = vadd.f32 %v1983, %v2193
      %2195 = vmatmul.f32.gmra.mxu0 %v2080
      %v2196 = vpop.f32.mrf.mxu0
      %v2197 = vadd.f32 %v1983, %v2196
      %2198 = vdwg.mxu0
      %v2199 = vmax.f32 %v2104, 0.0
      %v2200 = vmax.f32 %v2107, 0.0
      %v2201 = vmax.f32 %v2110, 0.0
      %v2202 = vmax.f32 %v2113, 0.0
      %v2203 = vmax.f32 %v2116, 0.0
      %v2204 = vmax.f32 %v2119, 0.0
      %v2205 = vmax.f32 %v2122, 0.0
      %v2206 = vmax.f32 %v2125, 0.0
      %v2207 = vmax.f32 %v2128, 0.0
      %v2208 = vmax.f32 %v2131, 0.0
      %v2209 = vmax.f32 %v2134, 0.0
      %v2210 = vmax.f32 %v2137, 0.0
      %v2211 = vmax.f32 %v2140, 0.0
      %v2212 = vmax.f32 %v2143, 0.0
      %v2213 = vmax.f32 %v2146, 0.0
      %v2214 = vmax.f32 %v2149, 0.0
      %v2215 = vmax.f32 %v2152, 0.0
      %v2216 = vmax.f32 %v2155, 0.0
      %v2217 = vmax.f32 %v2158, 0.0
      %v2218 = vmax.f32 %v2161, 0.0
      %v2219 = vmax.f32 %v2164, 0.0
      %v2220 = vmax.f32 %v2167, 0.0
      %v2221 = vmax.f32 %v2170, 0.0
      %v2222 = vmax.f32 %v2173, 0.0
      %v2223 = vmax.f32 %v2176, 0.0
      %v2224 = vmax.f32 %v2179, 0.0
      %v2225 = vmax.f32 %v2182, 0.0
      %v2226 = vmax.f32 %v2185, 0.0
      %v2227 = vmax.f32 %v2188, 0.0
      %v2228 = vmax.f32 %v2191, 0.0
      %v2229 = vmax.f32 %v2194, 0.0
      %v2230 = vmax.f32 %v2197, 0.0
      %vm2231 = vcmask 15360
      %2232 = vst.msk [vmem:[#allocation3] sm:$0xff] %vm2231, 0.0
      %2233 = vst.msk [vmem:[#allocation3 + $0x8] sm:$0xff] %vm2231, 0.0
      %vm2234 = vcmask 11264
      %2235 = vst.msk [vmem:[#allocation3 + $0x10] sm:$0xf] %vm2234, 0.0
      %2236 = vst.msk [vmem:[#allocation3 + $0x18] sm:$0xff] %vm2231, 0.0
      %2237 = vst.msk [vmem:[#allocation3 + $0x20] sm:$0xff] %vm2231, 0.0
      %2238 = vst.msk [vmem:[#allocation3 + $0x28] sm:$0xf] %vm2234, 0.0
      %2239 = vst.msk [vmem:[#allocation3 + $0x30] sm:$0xff] %vm2231, 0.0
      %2240 = vst.msk [vmem:[#allocation3 + $0x38] sm:$0xff] %vm2231, 0.0
      %2241 = vst.msk [vmem:[#allocation3 + $0x40] sm:$0xf] %vm2234, 0.0
      %2242 = vst.msk [vmem:[#allocation3 + $0x48] sm:$0xff] %vm2231, 0.0
      %2243 = vst.msk [vmem:[#allocation3 + $0x50] sm:$0xff] %vm2231, 0.0
      %2244 = vst.msk [vmem:[#allocation3 + $0x58] sm:$0xf] %vm2234, 0.0
      %2245 = vst.msk [vmem:[#allocation3 + $0x60] sm:$0xff] %vm2231, 0.0
      %2246 = vst.msk [vmem:[#allocation3 + $0x68] sm:$0xff] %vm2231, 0.0
      %2247 = vst.msk [vmem:[#allocation3 + $0x70] sm:$0xf] %vm2234, 0.0
      %2248 = vst.msk [vmem:[#allocation3 + $0x78] sm:$0xff] %vm2231, 0.0
      %2249 = vst.msk [vmem:[#allocation3 + $0x80] sm:$0xff] %vm2231, 0.0
      %2250 = vst.msk [vmem:[#allocation3 + $0x88] sm:$0xf] %vm2234, 0.0
      %2251 = vst.msk [vmem:[#allocation3 + $0x90] sm:$0xff] %vm2231, 0.0
      %2252 = vst.msk [vmem:[#allocation3 + $0x98] sm:$0xff] %vm2231, 0.0
      %2253 = vst.msk [vmem:[#allocation3 + $0xa0] sm:$0xf] %vm2234, 0.0
      %2254 = vst.msk [vmem:[#allocation3 + $0xa8] sm:$0xff] %vm2231, 0.0
      %2255 = vst.msk [vmem:[#allocation3 + $0xb0] sm:$0xff] %vm2231, 0.0
      %2256 = vst.msk [vmem:[#allocation3 + $0xb8] sm:$0xf] %vm2234, 0.0
      %2257 = vst.msk [vmem:[#allocation3 + $0xc0] sm:$0xff] %vm2231, 0.0
      %2258 = vst.msk [vmem:[#allocation3 + $0xc8] sm:$0xff] %vm2231, 0.0
      %2259 = vst.msk [vmem:[#allocation3 + $0xd0] sm:$0xf] %vm2234, 0.0
      %2260 = vst.msk [vmem:[#allocation3 + $0xd8] sm:$0xff] %vm2231, 0.0
      %2261 = vst.msk [vmem:[#allocation3 + $0xe0] sm:$0xff] %vm2231, 0.0
      %2262 = vst.msk [vmem:[#allocation3 + $0xe8] sm:$0xf] %vm2234, 0.0
      %2263 = vst.msk [vmem:[#allocation3 + $0xf0] sm:$0xff] %vm2231, 0.0
      %2264 = vst.msk [vmem:[#allocation3 + $0xf8] sm:$0xff] %vm2231, 0.0
      %2265 = vst.msk [vmem:[#allocation3 + $0x100] sm:$0xf] %vm2234, 0.0
      %2266 = vst.msk [vmem:[#allocation3 + $0x108] sm:$0xff] %vm2231, 0.0
      %2267 = vst.msk [vmem:[#allocation3 + $0x110] sm:$0xff] %vm2231, 0.0
      %2268 = vst.msk [vmem:[#allocation3 + $0x118] sm:$0xf] %vm2234, 0.0
      %2269 = vst.msk [vmem:[#allocation3 + $0x120] sm:$0xff] %vm2231, 0.0
      %2270 = vst.msk [vmem:[#allocation3 + $0x128] sm:$0xff] %vm2231, 0.0
      %2271 = vst.msk [vmem:[#allocation3 + $0x130] sm:$0xf] %vm2234, 0.0
      %2272 = vst.msk [vmem:[#allocation3 + $0x138] sm:$0xff] %vm2231, 0.0
      %2273 = vst.msk [vmem:[#allocation3 + $0x140] sm:$0xff] %vm2231, 0.0
      %2274 = vst.msk [vmem:[#allocation3 + $0x148] sm:$0xf] %vm2234, 0.0
      %2275 = vst.msk [vmem:[#allocation3 + $0x150] sm:$0xff] %vm2231, 0.0
      %2276 = vst.msk [vmem:[#allocation3 + $0x158] sm:$0xff] %vm2231, 0.0
      %2277 = vst.msk [vmem:[#allocation3 + $0x160] sm:$0xf] %vm2234, 0.0
      %2278 = vst.msk [vmem:[#allocation3 + $0x168] sm:$0xff] %vm2231, 0.0
      %2279 = vst.msk [vmem:[#allocation3 + $0x170] sm:$0xff] %vm2231, 0.0
      %2280 = vst.msk [vmem:[#allocation3 + $0x178] sm:$0xf] %vm2234, 0.0
      %2281 = vst.msk [vmem:[#allocation3 + $0x180] sm:$0xff] %vm2231, 0.0
      %2282 = vst.msk [vmem:[#allocation3 + $0x188] sm:$0xff] %vm2231, 0.0
      %2283 = vst.msk [vmem:[#allocation3 + $0x190] sm:$0xf] %vm2234, 0.0
      %2284 = vst.msk [vmem:[#allocation3 + $0x198] sm:$0xff] %vm2231, 0.0
      %2285 = vst.msk [vmem:[#allocation3 + $0x1a0] sm:$0xff] %vm2231, 0.0
      %2286 = vst.msk [vmem:[#allocation3 + $0x1a8] sm:$0xf] %vm2234, 0.0
      %2287 = vst.msk [vmem:[#allocation3 + $0x1b0] sm:$0xff] %vm2231, 0.0
      %2288 = vst.msk [vmem:[#allocation3 + $0x1b8] sm:$0xff] %vm2231, 0.0
      %2289 = vst.msk [vmem:[#allocation3 + $0x1c0] sm:$0xf] %vm2234, 0.0
      %2290 = vst.msk [vmem:[#allocation3 + $0x1c8] sm:$0xff] %vm2231, 0.0
      %2291 = vst.msk [vmem:[#allocation3 + $0x1d0] sm:$0xff] %vm2231, 0.0
      %2292 = vst.msk [vmem:[#allocation3 + $0x1d8] sm:$0xf] %vm2234, 0.0
      %s2293 = scalar_lea.vmem [#allocation3], 48
      %2294 = vst.msk [vmem:[%s2293 + $0x2] sm:$0xff] %vm2231, %v2199
      %2295 = vst.msk [vmem:[%s2293 + $0xa] sm:$0xff] %vm2231, %v2200
      %2296 = vst.msk [vmem:[%s2293 + $0x1a] sm:$0xff] %vm2231, %v2201
      %2297 = vst.msk [vmem:[%s2293 + $0x22] sm:$0xff] %vm2231, %v2202
      %2298 = vst.msk [vmem:[%s2293 + $0x32] sm:$0xff] %vm2231, %v2203
      %2299 = vst.msk [vmem:[%s2293 + $0x3a] sm:$0xff] %vm2231, %v2204
      %2300 = vst.msk [vmem:[%s2293 + $0x4a] sm:$0xff] %vm2231, %v2205
      %2301 = vst.msk [vmem:[%s2293 + $0x52] sm:$0xff] %vm2231, %v2206
      %2302 = vst.msk [vmem:[%s2293 + $0x62] sm:$0xff] %vm2231, %v2207
      %2303 = vst.msk [vmem:[%s2293 + $0x6a] sm:$0xff] %vm2231, %v2208
      %2304 = vst.msk [vmem:[%s2293 + $0x7a] sm:$0xff] %vm2231, %v2209
      %2305 = vst.msk [vmem:[%s2293 + $0x82] sm:$0xff] %vm2231, %v2210
      %2306 = vst.msk [vmem:[%s2293 + $0x92] sm:$0xff] %vm2231, %v2211
      %2307 = vst.msk [vmem:[%s2293 + $0x9a] sm:$0xff] %vm2231, %v2212
      %2308 = vst.msk [vmem:[%s2293 + $0xaa] sm:$0xff] %vm2231, %v2213
      %2309 = vst.msk [vmem:[%s2293 + $0xb2] sm:$0xff] %vm2231, %v2214
      %2310 = vst.msk [vmem:[%s2293 + $0xc2] sm:$0xff] %vm2231, %v2215
      %2311 = vst.msk [vmem:[%s2293 + $0xca] sm:$0xff] %vm2231, %v2216
      %2312 = vst.msk [vmem:[%s2293 + $0xda] sm:$0xff] %vm2231, %v2217
      %2313 = vst.msk [vmem:[%s2293 + $0xe2] sm:$0xff] %vm2231, %v2218
      %2314 = vst.msk [vmem:[%s2293 + $0xf2] sm:$0xff] %vm2231, %v2219
      %2315 = vst.msk [vmem:[%s2293 + $0xfa] sm:$0xff] %vm2231, %v2220
      %2316 = vst.msk [vmem:[%s2293 + $0x10a] sm:$0xff] %vm2231, %v2221
      %2317 = vst.msk [vmem:[%s2293 + $0x112] sm:$0xff] %vm2231, %v2222
      %2318 = vst.msk [vmem:[%s2293 + $0x122] sm:$0xff] %vm2231, %v2223
      %2319 = vst.msk [vmem:[%s2293 + $0x12a] sm:$0xff] %vm2231, %v2224
      %2320 = vst.msk [vmem:[%s2293 + $0x13a] sm:$0xff] %vm2231, %v2225
      %2321 = vst.msk [vmem:[%s2293 + $0x142] sm:$0xff] %vm2231, %v2226
      %2322 = vst.msk [vmem:[%s2293 + $0x152] sm:$0xff] %vm2231, %v2227
      %2323 = vst.msk [vmem:[%s2293 + $0x15a] sm:$0xff] %vm2231, %v2228
      %2324 = vst.msk [vmem:[%s2293 + $0x16a] sm:$0xff] %vm2231, %v2229
      %2325 = vst.msk [vmem:[%s2293 + $0x172] sm:$0xff] %vm2231, %v2230
      %v2326 = vld [vmem:[#allocation3] sm:$0xff]
      %v2327 = vld [vmem:[#allocation3 + $0x8] sm:$0xff]
      %v2328 = vld [vmem:[#allocation3 + $0x18] sm:$0xff]
      %v2329 = vld [vmem:[#allocation3 + $0x20] sm:$0xff]
      %v2330 = vld [vmem:[#allocation3 + $0x30] sm:$0xff]
      %v2331 = vld [vmem:[#allocation3 + $0x38] sm:$0xff]
      %v2332 = vld [vmem:[#allocation3 + $0x48] sm:$0xff]
      %v2333 = vld [vmem:[#allocation3 + $0x50] sm:$0xff]
      %v2334 = vld [vmem:[#allocation3 + $0x60] sm:$0xff]
      %v2335 = vld [vmem:[#allocation3 + $0x68] sm:$0xff]
      %v2336 = vld [vmem:[#allocation3 + $0x78] sm:$0xff]
      %v2337 = vld [vmem:[#allocation3 + $0x80] sm:$0xff]
      %v2338 = vld [vmem:[#allocation3 + $0x90] sm:$0xff]
      %v2339 = vld [vmem:[#allocation3 + $0x98] sm:$0xff]
      %v2340 = vld [vmem:[#allocation3 + $0xa8] sm:$0xff]
      %v2341 = vld [vmem:[#allocation3 + $0xb0] sm:$0xff]
      %v2342 = vld [vmem:[#allocation3 + $0xc0] sm:$0xff]
      %v2343 = vld [vmem:[#allocation3 + $0xc8] sm:$0xff]
      %v2344 = vld [vmem:[#allocation3 + $0xd8] sm:$0xff]
      %v2345 = vld [vmem:[#allocation3 + $0xe0] sm:$0xff]
      %v2346 = vld [vmem:[#allocation3 + $0xf0] sm:$0xff]
      %v2347 = vld [vmem:[#allocation3 + $0xf8] sm:$0xff]
      %v2348 = vld [vmem:[#allocation3 + $0x108] sm:$0xff]
      %v2349 = vld [vmem:[#allocation3 + $0x110] sm:$0xff]
      %v2350 = vld [vmem:[#allocation3 + $0x120] sm:$0xff]
      %v2351 = vld [vmem:[#allocation3 + $0x128] sm:$0xff]
      %v2352 = vld [vmem:[#allocation3 + $0x138] sm:$0xff]
      %v2353 = vld [vmem:[#allocation3 + $0x140] sm:$0xff]
      %v2354 = vld [vmem:[#allocation3 + $0x150] sm:$0xff]
      %v2355 = vld [vmem:[#allocation3 + $0x158] sm:$0xff]
      %v2356 = vld [vmem:[#allocation3 + $0x168] sm:$0xff]
      %v2357 = vld [vmem:[#allocation3 + $0x170] sm:$0xff]
      %v2358 = vld [vmem:[#allocation3 + $0x2] sm:$0xff]
      %v2359 = vld [vmem:[#allocation3 + $0xa] sm:$0xff]
      %v2360 = vld [vmem:[#allocation3 + $0x1a] sm:$0xff]
      %v2361 = vld [vmem:[#allocation3 + $0x22] sm:$0xff]
      %v2362 = vld [vmem:[#allocation3 + $0x32] sm:$0xff]
      %v2363 = vld [vmem:[#allocation3 + $0x3a] sm:$0xff]
      %v2364 = vld [vmem:[#allocation3 + $0x4a] sm:$0xff]
      %v2365 = vld [vmem:[#allocation3 + $0x52] sm:$0xff]
      %v2366 = vld [vmem:[#allocation3 + $0x62] sm:$0xff]
      %v2367 = vld [vmem:[#allocation3 + $0x6a] sm:$0xff]
      %v2368 = vld [vmem:[#allocation3 + $0x7a] sm:$0xff]
      %v2369 = vld [vmem:[#allocation3 + $0x82] sm:$0xff]
      %v2370 = vld [vmem:[#allocation3 + $0x92] sm:$0xff]
      %v2371 = vld [vmem:[#allocation3 + $0x9a] sm:$0xff]
      %v2372 = vld [vmem:[#allocation3 + $0xaa] sm:$0xff]
      %v2373 = vld [vmem:[#allocation3 + $0xb2] sm:$0xff]
      %v2374 = vld [vmem:[#allocation3 + $0xc2] sm:$0xff]
      %v2375 = vld [vmem:[#allocation3 + $0xca] sm:$0xff]
      %v2376 = vld [vmem:[#allocation3 + $0xda] sm:$0xff]
      %v2377 = vld [vmem:[#allocation3 + $0xe2] sm:$0xff]
      %v2378 = vld [vmem:[#allocation3 + $0xf2] sm:$0xff]
      %v2379 = vld [vmem:[#allocation3 + $0xfa] sm:$0xff]
      %v2380 = vld [vmem:[#allocation3 + $0x10a] sm:$0xff]
      %v2381 = vld [vmem:[#allocation3 + $0x112] sm:$0xff]
      %v2382 = vld [vmem:[#allocation3 + $0x122] sm:$0xff]
      %v2383 = vld [vmem:[#allocation3 + $0x12a] sm:$0xff]
      %v2384 = vld [vmem:[#allocation3 + $0x13a] sm:$0xff]
      %v2385 = vld [vmem:[#allocation3 + $0x142] sm:$0xff]
      %v2386 = vld [vmem:[#allocation3 + $0x152] sm:$0xff]
      %v2387 = vld [vmem:[#allocation3 + $0x15a] sm:$0xff]
      %v2388 = vld [vmem:[#allocation3 + $0x16a] sm:$0xff]
      %v2389 = vld [vmem:[#allocation3 + $0x172] sm:$0xff]
      %v2390 = vld [vmem:[#allocation3 + $0x4] sm:$0xff]
      %v2391 = vld [vmem:[#allocation3 + $0xc] sm:$0xff]
      %v2392 = vld [vmem:[#allocation3 + $0x1c] sm:$0xff]
      %v2393 = vld [vmem:[#allocation3 + $0x24] sm:$0xff]
      %v2394 = vld [vmem:[#allocation3 + $0x34] sm:$0xff]
      %v2395 = vld [vmem:[#allocation3 + $0x3c] sm:$0xff]
      %v2396 = vld [vmem:[#allocation3 + $0x4c] sm:$0xff]
      %v2397 = vld [vmem:[#allocation3 + $0x54] sm:$0xff]
      %v2398 = vld [vmem:[#allocation3 + $0x64] sm:$0xff]
      %v2399 = vld [vmem:[#allocation3 + $0x6c] sm:$0xff]
      %v2400 = vld [vmem:[#allocation3 + $0x7c] sm:$0xff]
      %v2401 = vld [vmem:[#allocation3 + $0x84] sm:$0xff]
      %v2402 = vld [vmem:[#allocation3 + $0x94] sm:$0xff]
      %v2403 = vld [vmem:[#allocation3 + $0x9c] sm:$0xff]
      %v2404 = vld [vmem:[#allocation3 + $0xac] sm:$0xff]
      %v2405 = vld [vmem:[#allocation3 + $0xb4] sm:$0xff]
      %v2406 = vld [vmem:[#allocation3 + $0xc4] sm:$0xff]
      %v2407 = vld [vmem:[#allocation3 + $0xcc] sm:$0xff]
      %v2408 = vld [vmem:[#allocation3 + $0xdc] sm:$0xff]
      %v2409 = vld [vmem:[#allocation3 + $0xe4] sm:$0xff]
      %v2410 = vld [vmem:[#allocation3 + $0xf4] sm:$0xff]
      %v2411 = vld [vmem:[#allocation3 + $0xfc] sm:$0xff]
      %v2412 = vld [vmem:[#allocation3 + $0x10c] sm:$0xff]
      %v2413 = vld [vmem:[#allocation3 + $0x114] sm:$0xff]
      %v2414 = vld [vmem:[#allocation3 + $0x124] sm:$0xff]
      %v2415 = vld [vmem:[#allocation3 + $0x12c] sm:$0xff]
      %v2416 = vld [vmem:[#allocation3 + $0x13c] sm:$0xff]
      %v2417 = vld [vmem:[#allocation3 + $0x144] sm:$0xff]
      %v2418 = vld [vmem:[#allocation3 + $0x154] sm:$0xff]
      %v2419 = vld [vmem:[#allocation3 + $0x15c] sm:$0xff]
      %v2420 = vld [vmem:[#allocation3 + $0x16c] sm:$0xff]
      %v2421 = vld [vmem:[#allocation3 + $0x174] sm:$0xff]
      %v2422 = vld [vmem:[%s2293] sm:$0xff]
      %v2423 = vld [vmem:[%s2293 + $0x8] sm:$0xff]
      %v2424 = vld [vmem:[%s2293 + $0x18] sm:$0xff]
      %v2425 = vld [vmem:[%s2293 + $0x20] sm:$0xff]
      %v2426 = vld [vmem:[%s2293 + $0x30] sm:$0xff]
      %v2427 = vld [vmem:[%s2293 + $0x38] sm:$0xff]
      %v2428 = vld [vmem:[%s2293 + $0x48] sm:$0xff]
      %v2429 = vld [vmem:[%s2293 + $0x50] sm:$0xff]
      %v2430 = vld [vmem:[%s2293 + $0x60] sm:$0xff]
      %v2431 = vld [vmem:[%s2293 + $0x68] sm:$0xff]
      %v2432 = vld [vmem:[%s2293 + $0x78] sm:$0xff]
      %v2433 = vld [vmem:[%s2293 + $0x80] sm:$0xff]
      %v2434 = vld [vmem:[%s2293 + $0x90] sm:$0xff]
      %v2435 = vld [vmem:[%s2293 + $0x98] sm:$0xff]
      %v2436 = vld [vmem:[%s2293 + $0xa8] sm:$0xff]
      %v2437 = vld [vmem:[%s2293 + $0xb0] sm:$0xff]
      %v2438 = vld [vmem:[%s2293 + $0xc0] sm:$0xff]
      %v2439 = vld [vmem:[%s2293 + $0xc8] sm:$0xff]
      %v2440 = vld [vmem:[%s2293 + $0xd8] sm:$0xff]
      %v2441 = vld [vmem:[%s2293 + $0xe0] sm:$0xff]
      %v2442 = vld [vmem:[%s2293 + $0xf0] sm:$0xff]
      %v2443 = vld [vmem:[%s2293 + $0xf8] sm:$0xff]
      %v2444 = vld [vmem:[%s2293 + $0x108] sm:$0xff]
      %v2445 = vld [vmem:[%s2293 + $0x110] sm:$0xff]
      %v2446 = vld [vmem:[%s2293 + $0x120] sm:$0xff]
      %v2447 = vld [vmem:[%s2293 + $0x128] sm:$0xff]
      %v2448 = vld [vmem:[%s2293 + $0x138] sm:$0xff]
      %v2449 = vld [vmem:[%s2293 + $0x140] sm:$0xff]
      %v2450 = vld [vmem:[%s2293 + $0x150] sm:$0xff]
      %v2451 = vld [vmem:[%s2293 + $0x158] sm:$0xff]
      %v2452 = vld [vmem:[%s2293 + $0x168] sm:$0xff]
      %v2453 = vld [vmem:[%s2293 + $0x170] sm:$0xff]
      %v2454 = vld [vmem:[%s2293 + $0x2] sm:$0xff]
      %v2455 = vld [vmem:[%s2293 + $0xa] sm:$0xff]
      %v2456 = vld [vmem:[%s2293 + $0x1a] sm:$0xff]
      %v2457 = vld [vmem:[%s2293 + $0x22] sm:$0xff]
      %v2458 = vld [vmem:[%s2293 + $0x32] sm:$0xff]
      %v2459 = vld [vmem:[%s2293 + $0x3a] sm:$0xff]
      %v2460 = vld [vmem:[%s2293 + $0x4a] sm:$0xff]
      %v2461 = vld [vmem:[%s2293 + $0x52] sm:$0xff]
      %v2462 = vld [vmem:[%s2293 + $0x62] sm:$0xff]
      %v2463 = vld [vmem:[%s2293 + $0x6a] sm:$0xff]
      %v2464 = vld [vmem:[%s2293 + $0x7a] sm:$0xff]
      %v2465 = vld [vmem:[%s2293 + $0x82] sm:$0xff]
      %v2466 = vld [vmem:[%s2293 + $0x92] sm:$0xff]
      %v2467 = vld [vmem:[%s2293 + $0x9a] sm:$0xff]
      %v2468 = vld [vmem:[%s2293 + $0xaa] sm:$0xff]
      %v2469 = vld [vmem:[%s2293 + $0xb2] sm:$0xff]
      %v2470 = vld [vmem:[%s2293 + $0xc2] sm:$0xff]
      %v2471 = vld [vmem:[%s2293 + $0xca] sm:$0xff]
      %v2472 = vld [vmem:[%s2293 + $0xda] sm:$0xff]
      %v2473 = vld [vmem:[%s2293 + $0xe2] sm:$0xff]
      %v2474 = vld [vmem:[%s2293 + $0xf2] sm:$0xff]
      %v2475 = vld [vmem:[%s2293 + $0xfa] sm:$0xff]
      %v2476 = vld [vmem:[%s2293 + $0x10a] sm:$0xff]
      %v2477 = vld [vmem:[%s2293 + $0x112] sm:$0xff]
      %v2478 = vld [vmem:[%s2293 + $0x122] sm:$0xff]
      %v2479 = vld [vmem:[%s2293 + $0x12a] sm:$0xff]
      %v2480 = vld [vmem:[%s2293 + $0x13a] sm:$0xff]
      %v2481 = vld [vmem:[%s2293 + $0x142] sm:$0xff]
      %v2482 = vld [vmem:[%s2293 + $0x152] sm:$0xff]
      %v2483 = vld [vmem:[%s2293 + $0x15a] sm:$0xff]
      %v2484 = vld [vmem:[%s2293 + $0x16a] sm:$0xff]
      %v2485 = vld [vmem:[%s2293 + $0x172] sm:$0xff]
      %v2486 = vld [vmem:[%s2293 + $0x4] sm:$0xff]
      %v2487 = vld [vmem:[%s2293 + $0xc] sm:$0xff]
      %v2488 = vld [vmem:[%s2293 + $0x1c] sm:$0xff]
      %v2489 = vld [vmem:[%s2293 + $0x24] sm:$0xff]
      %v2490 = vld [vmem:[%s2293 + $0x34] sm:$0xff]
      %v2491 = vld [vmem:[%s2293 + $0x3c] sm:$0xff]
      %v2492 = vld [vmem:[%s2293 + $0x4c] sm:$0xff]
      %v2493 = vld [vmem:[%s2293 + $0x54] sm:$0xff]
      %v2494 = vld [vmem:[%s2293 + $0x64] sm:$0xff]
      %v2495 = vld [vmem:[%s2293 + $0x6c] sm:$0xff]
      %v2496 = vld [vmem:[%s2293 + $0x7c] sm:$0xff]
      %v2497 = vld [vmem:[%s2293 + $0x84] sm:$0xff]
      %v2498 = vld [vmem:[%s2293 + $0x94] sm:$0xff]
      %v2499 = vld [vmem:[%s2293 + $0x9c] sm:$0xff]
      %v2500 = vld [vmem:[%s2293 + $0xac] sm:$0xff]
      %v2501 = vld [vmem:[%s2293 + $0xb4] sm:$0xff]
      %v2502 = vld [vmem:[%s2293 + $0xc4] sm:$0xff]
      %v2503 = vld [vmem:[%s2293 + $0xcc] sm:$0xff]
      %v2504 = vld [vmem:[%s2293 + $0xdc] sm:$0xff]
      %v2505 = vld [vmem:[%s2293 + $0xe4] sm:$0xff]
      %v2506 = vld [vmem:[%s2293 + $0xf4] sm:$0xff]
      %v2507 = vld [vmem:[%s2293 + $0xfc] sm:$0xff]
      %v2508 = vld [vmem:[%s2293 + $0x10c] sm:$0xff]
      %v2509 = vld [vmem:[%s2293 + $0x114] sm:$0xff]
      %v2510 = vld [vmem:[%s2293 + $0x124] sm:$0xff]
      %v2511 = vld [vmem:[%s2293 + $0x12c] sm:$0xff]
      %v2512 = vld [vmem:[%s2293 + $0x13c] sm:$0xff]
      %v2513 = vld [vmem:[%s2293 + $0x144] sm:$0xff]
      %v2514 = vld [vmem:[%s2293 + $0x154] sm:$0xff]
      %v2515 = vld [vmem:[%s2293 + $0x15c] sm:$0xff]
      %v2516 = vld [vmem:[%s2293 + $0x16c] sm:$0xff]
      %v2517 = vld [vmem:[%s2293 + $0x174] sm:$0xff]
      %s2518 = scalar_lea.vmem [#allocation3], 96
      %v2519 = vld [vmem:[%s2518] sm:$0xff]
      %v2520 = vld [vmem:[%s2518 + $0x8] sm:$0xff]
      %v2521 = vld [vmem:[%s2518 + $0x18] sm:$0xff]
      %v2522 = vld [vmem:[%s2518 + $0x20] sm:$0xff]
      %v2523 = vld [vmem:[%s2518 + $0x30] sm:$0xff]
      %v2524 = vld [vmem:[%s2518 + $0x38] sm:$0xff]
      %v2525 = vld [vmem:[%s2518 + $0x48] sm:$0xff]
      %v2526 = vld [vmem:[%s2518 + $0x50] sm:$0xff]
      %v2527 = vld [vmem:[%s2518 + $0x60] sm:$0xff]
      %v2528 = vld [vmem:[%s2518 + $0x68] sm:$0xff]
      %v2529 = vld [vmem:[%s2518 + $0x78] sm:$0xff]
      %v2530 = vld [vmem:[%s2518 + $0x80] sm:$0xff]
      %v2531 = vld [vmem:[%s2518 + $0x90] sm:$0xff]
      %v2532 = vld [vmem:[%s2518 + $0x98] sm:$0xff]
      %v2533 = vld [vmem:[%s2518 + $0xa8] sm:$0xff]
      %v2534 = vld [vmem:[%s2518 + $0xb0] sm:$0xff]
      %v2535 = vld [vmem:[%s2518 + $0xc0] sm:$0xff]
      %v2536 = vld [vmem:[%s2518 + $0xc8] sm:$0xff]
      %v2537 = vld [vmem:[%s2518 + $0xd8] sm:$0xff]
      %v2538 = vld [vmem:[%s2518 + $0xe0] sm:$0xff]
      %v2539 = vld [vmem:[%s2518 + $0xf0] sm:$0xff]
      %v2540 = vld [vmem:[%s2518 + $0xf8] sm:$0xff]
      %v2541 = vld [vmem:[%s2518 + $0x108] sm:$0xff]
      %v2542 = vld [vmem:[%s2518 + $0x110] sm:$0xff]
      %v2543 = vld [vmem:[%s2518 + $0x120] sm:$0xff]
      %v2544 = vld [vmem:[%s2518 + $0x128] sm:$0xff]
      %v2545 = vld [vmem:[%s2518 + $0x138] sm:$0xff]
      %v2546 = vld [vmem:[%s2518 + $0x140] sm:$0xff]
      %v2547 = vld [vmem:[%s2518 + $0x150] sm:$0xff]
      %v2548 = vld [vmem:[%s2518 + $0x158] sm:$0xff]
      %v2549 = vld [vmem:[%s2518 + $0x168] sm:$0xff]
      %v2550 = vld [vmem:[%s2518 + $0x170] sm:$0xff]
      %v2551 = vld [vmem:[%s2518 + $0x2] sm:$0xff]
      %v2552 = vld [vmem:[%s2518 + $0xa] sm:$0xff]
      %v2553 = vld [vmem:[%s2518 + $0x1a] sm:$0xff]
      %v2554 = vld [vmem:[%s2518 + $0x22] sm:$0xff]
      %v2555 = vld [vmem:[%s2518 + $0x32] sm:$0xff]
      %v2556 = vld [vmem:[%s2518 + $0x3a] sm:$0xff]
      %v2557 = vld [vmem:[%s2518 + $0x4a] sm:$0xff]
      %v2558 = vld [vmem:[%s2518 + $0x52] sm:$0xff]
      %v2559 = vld [vmem:[%s2518 + $0x62] sm:$0xff]
      %v2560 = vld [vmem:[%s2518 + $0x6a] sm:$0xff]
      %v2561 = vld [vmem:[%s2518 + $0x7a] sm:$0xff]
      %v2562 = vld [vmem:[%s2518 + $0x82] sm:$0xff]
      %v2563 = vld [vmem:[%s2518 + $0x92] sm:$0xff]
      %v2564 = vld [vmem:[%s2518 + $0x9a] sm:$0xff]
      %v2565 = vld [vmem:[%s2518 + $0xaa] sm:$0xff]
      %v2566 = vld [vmem:[%s2518 + $0xb2] sm:$0xff]
      %v2567 = vld [vmem:[%s2518 + $0xc2] sm:$0xff]
      %v2568 = vld [vmem:[%s2518 + $0xca] sm:$0xff]
      %v2569 = vld [vmem:[%s2518 + $0xda] sm:$0xff]
      %v2570 = vld [vmem:[%s2518 + $0xe2] sm:$0xff]
      %v2571 = vld [vmem:[%s2518 + $0xf2] sm:$0xff]
      %v2572 = vld [vmem:[%s2518 + $0xfa] sm:$0xff]
      %v2573 = vld [vmem:[%s2518 + $0x10a] sm:$0xff]
      %v2574 = vld [vmem:[%s2518 + $0x112] sm:$0xff]
      %v2575 = vld [vmem:[%s2518 + $0x122] sm:$0xff]
      %v2576 = vld [vmem:[%s2518 + $0x12a] sm:$0xff]
      %v2577 = vld [vmem:[%s2518 + $0x13a] sm:$0xff]
      %v2578 = vld [vmem:[%s2518 + $0x142] sm:$0xff]
      %v2579 = vld [vmem:[%s2518 + $0x152] sm:$0xff]
      %v2580 = vld [vmem:[%s2518 + $0x15a] sm:$0xff]
      %v2581 = vld [vmem:[%s2518 + $0x16a] sm:$0xff]
      %v2582 = vld [vmem:[%s2518 + $0x172] sm:$0xff]
      %v2583 = vld [vmem:[%s2518 + $0x4] sm:$0xff]
      %v2584 = vld [vmem:[%s2518 + $0xc] sm:$0xff]
      %v2585 = vld [vmem:[%s2518 + $0x1c] sm:$0xff]
      %v2586 = vld [vmem:[%s2518 + $0x24] sm:$0xff]
      %v2587 = vld [vmem:[%s2518 + $0x34] sm:$0xff]
      %v2588 = vld [vmem:[%s2518 + $0x3c] sm:$0xff]
      %v2589 = vld [vmem:[%s2518 + $0x4c] sm:$0xff]
      %v2590 = vld [vmem:[%s2518 + $0x54] sm:$0xff]
      %v2591 = vld [vmem:[%s2518 + $0x64] sm:$0xff]
      %v2592 = vld [vmem:[%s2518 + $0x6c] sm:$0xff]
      %v2593 = vld [vmem:[%s2518 + $0x7c] sm:$0xff]
      %v2594 = vld [vmem:[%s2518 + $0x84] sm:$0xff]
      %v2595 = vld [vmem:[%s2518 + $0x94] sm:$0xff]
      %v2596 = vld [vmem:[%s2518 + $0x9c] sm:$0xff]
      %v2597 = vld [vmem:[%s2518 + $0xac] sm:$0xff]
      %v2598 = vld [vmem:[%s2518 + $0xb4] sm:$0xff]
      %v2599 = vld [vmem:[%s2518 + $0xc4] sm:$0xff]
      %v2600 = vld [vmem:[%s2518 + $0xcc] sm:$0xff]
      %v2601 = vld [vmem:[%s2518 + $0xdc] sm:$0xff]
      %v2602 = vld [vmem:[%s2518 + $0xe4] sm:$0xff]
      %v2603 = vld [vmem:[%s2518 + $0xf4] sm:$0xff]
      %v2604 = vld [vmem:[%s2518 + $0xfc] sm:$0xff]
      %v2605 = vld [vmem:[%s2518 + $0x10c] sm:$0xff]
      %v2606 = vld [vmem:[%s2518 + $0x114] sm:$0xff]
      %v2607 = vld [vmem:[%s2518 + $0x124] sm:$0xff]
      %v2608 = vld [vmem:[%s2518 + $0x12c] sm:$0xff]
      %v2609 = vld [vmem:[%s2518 + $0x13c] sm:$0xff]
      %v2610 = vld [vmem:[%s2518 + $0x144] sm:$0xff]
      %v2611 = vld [vmem:[%s2518 + $0x154] sm:$0xff]
      %v2612 = vld [vmem:[%s2518 + $0x15c] sm:$0xff]
      %v2613 = vld [vmem:[%s2518 + $0x16c] sm:$0xff]
      %v2614 = vld [vmem:[%s2518 + $0x174] sm:$0xff]
      %2647 = vrot.lane.b32.xlu0 %v2358, 2
      %v2648 = vpop.permute.xlu0 %2647
      %2649 = vrot.lane.b32.xlu0 %v2359, 2
      %v2650 = vpop.permute.xlu0 %2649
      %2651 = vrot.lane.b32.xlu0 %v2360, 2
      %v2652 = vpop.permute.xlu0 %2651
      %2653 = vrot.lane.b32.xlu0 %v2361, 2
      %v2654 = vpop.permute.xlu0 %2653
      %2655 = vrot.lane.b32.xlu0 %v2362, 2
      %v2656 = vpop.permute.xlu0 %2655
      %2657 = vrot.lane.b32.xlu0 %v2363, 2
      %v2658 = vpop.permute.xlu0 %2657
      %2659 = vrot.lane.b32.xlu0 %v2364, 2
      %v2660 = vpop.permute.xlu0 %2659
      %2661 = vrot.lane.b32.xlu0 %v2365, 2
      %v2662 = vpop.permute.xlu0 %2661
      %2663 = vrot.lane.b32.xlu0 %v2366, 2
      %v2664 = vpop.permute.xlu0 %2663
      %2665 = vrot.lane.b32.xlu0 %v2367, 2
      %v2666 = vpop.permute.xlu0 %2665
      %2667 = vrot.lane.b32.xlu0 %v2368, 2
      %v2668 = vpop.permute.xlu0 %2667
      %2669 = vrot.lane.b32.xlu0 %v2369, 2
      %v2670 = vpop.permute.xlu0 %2669
      %2671 = vrot.lane.b32.xlu0 %v2370, 2
      %v2672 = vpop.permute.xlu0 %2671
      %2673 = vrot.lane.b32.xlu0 %v2371, 2
      %v2674 = vpop.permute.xlu0 %2673
      %2675 = vrot.lane.b32.xlu0 %v2372, 2
      %v2676 = vpop.permute.xlu0 %2675
      %2677 = vrot.lane.b32.xlu0 %v2373, 2
      %v2678 = vpop.permute.xlu0 %2677
      %2679 = vrot.lane.b32.xlu0 %v2374, 2
      %v2680 = vpop.permute.xlu0 %2679
      %2681 = vrot.lane.b32.xlu0 %v2375, 2
      %v2682 = vpop.permute.xlu0 %2681
      %2683 = vrot.lane.b32.xlu0 %v2376, 2
      %v2684 = vpop.permute.xlu0 %2683
      %2685 = vrot.lane.b32.xlu0 %v2377, 2
      %v2686 = vpop.permute.xlu0 %2685
      %2687 = vrot.lane.b32.xlu0 %v2378, 2
      %v2688 = vpop.permute.xlu0 %2687
      %2689 = vrot.lane.b32.xlu0 %v2379, 2
      %v2690 = vpop.permute.xlu0 %2689
      %2691 = vrot.lane.b32.xlu0 %v2380, 2
      %v2692 = vpop.permute.xlu0 %2691
      %2693 = vrot.lane.b32.xlu0 %v2381, 2
      %v2694 = vpop.permute.xlu0 %2693
      %2695 = vrot.lane.b32.xlu0 %v2382, 2
      %v2696 = vpop.permute.xlu0 %2695
      %2697 = vrot.lane.b32.xlu0 %v2383, 2
      %v2698 = vpop.permute.xlu0 %2697
      %2699 = vrot.lane.b32.xlu0 %v2384, 2
      %v2700 = vpop.permute.xlu0 %2699
      %2701 = vrot.lane.b32.xlu0 %v2385, 2
      %v2702 = vpop.permute.xlu0 %2701
      %2703 = vrot.lane.b32.xlu0 %v2386, 2
      %v2704 = vpop.permute.xlu0 %2703
      %2705 = vrot.lane.b32.xlu0 %v2387, 2
      %v2706 = vpop.permute.xlu0 %2705
      %2707 = vrot.lane.b32.xlu0 %v2388, 2
      %v2708 = vpop.permute.xlu0 %2707
      %2709 = vrot.lane.b32.xlu0 %v2389, 2
      %v2710 = vpop.permute.xlu0 %2709
      %2775 = vrot.lane.b32.xlu0 %v2390, 4
      %v2776 = vpop.permute.xlu0 %2775
      %2777 = vrot.lane.b32.xlu0 %v2391, 4
      %v2778 = vpop.permute.xlu0 %2777
      %2779 = vrot.lane.b32.xlu0 %v2392, 4
      %v2780 = vpop.permute.xlu0 %2779
      %2781 = vrot.lane.b32.xlu0 %v2393, 4
      %v2782 = vpop.permute.xlu0 %2781
      %2783 = vrot.lane.b32.xlu0 %v2394, 4
      %v2784 = vpop.permute.xlu0 %2783
      %2785 = vrot.lane.b32.xlu0 %v2395, 4
      %v2786 = vpop.permute.xlu0 %2785
      %2787 = vrot.lane.b32.xlu0 %v2396, 4
      %v2788 = vpop.permute.xlu0 %2787
      %2789 = vrot.lane.b32.xlu0 %v2397, 4
      %v2790 = vpop.permute.xlu0 %2789
      %2791 = vrot.lane.b32.xlu0 %v2398, 4
      %v2792 = vpop.permute.xlu0 %2791
      %2793 = vrot.lane.b32.xlu0 %v2399, 4
      %v2794 = vpop.permute.xlu0 %2793
      %2795 = vrot.lane.b32.xlu0 %v2400, 4
      %v2796 = vpop.permute.xlu0 %2795
      %2797 = vrot.lane.b32.xlu0 %v2401, 4
      %v2798 = vpop.permute.xlu0 %2797
      %2799 = vrot.lane.b32.xlu0 %v2402, 4
      %v2800 = vpop.permute.xlu0 %2799
      %2801 = vrot.lane.b32.xlu0 %v2403, 4
      %v2802 = vpop.permute.xlu0 %2801
      %2803 = vrot.lane.b32.xlu0 %v2404, 4
      %v2804 = vpop.permute.xlu0 %2803
      %2805 = vrot.lane.b32.xlu0 %v2405, 4
      %v2806 = vpop.permute.xlu0 %2805
      %2807 = vrot.lane.b32.xlu0 %v2406, 4
      %v2808 = vpop.permute.xlu0 %2807
      %2809 = vrot.lane.b32.xlu0 %v2407, 4
      %v2810 = vpop.permute.xlu0 %2809
      %2811 = vrot.lane.b32.xlu0 %v2408, 4
      %v2812 = vpop.permute.xlu0 %2811
      %2813 = vrot.lane.b32.xlu0 %v2409, 4
      %v2814 = vpop.permute.xlu0 %2813
      %2815 = vrot.lane.b32.xlu0 %v2410, 4
      %v2816 = vpop.permute.xlu0 %2815
      %2817 = vrot.lane.b32.xlu0 %v2411, 4
      %v2818 = vpop.permute.xlu0 %2817
      %2819 = vrot.lane.b32.xlu0 %v2412, 4
      %v2820 = vpop.permute.xlu0 %2819
      %2821 = vrot.lane.b32.xlu0 %v2413, 4
      %v2822 = vpop.permute.xlu0 %2821
      %2823 = vrot.lane.b32.xlu0 %v2414, 4
      %v2824 = vpop.permute.xlu0 %2823
      %2825 = vrot.lane.b32.xlu0 %v2415, 4
      %v2826 = vpop.permute.xlu0 %2825
      %2827 = vrot.lane.b32.xlu0 %v2416, 4
      %v2828 = vpop.permute.xlu0 %2827
      %2829 = vrot.lane.b32.xlu0 %v2417, 4
      %v2830 = vpop.permute.xlu0 %2829
      %2831 = vrot.lane.b32.xlu0 %v2418, 4
      %v2832 = vpop.permute.xlu0 %2831
      %2833 = vrot.lane.b32.xlu0 %v2419, 4
      %v2834 = vpop.permute.xlu0 %2833
      %2835 = vrot.lane.b32.xlu0 %v2420, 4
      %v2836 = vpop.permute.xlu0 %2835
      %2837 = vrot.lane.b32.xlu0 %v2421, 4
      %v2838 = vpop.permute.xlu0 %2837
      %2903 = vrot.lane.b32.xlu0 %v2422, 6
      %v2904 = vpop.permute.xlu0 %2903
      %2905 = vrot.lane.b32.xlu0 %v2423, 6
      %v2906 = vpop.permute.xlu0 %2905
      %2907 = vrot.lane.b32.xlu0 %v2424, 6
      %v2908 = vpop.permute.xlu0 %2907
      %2909 = vrot.lane.b32.xlu0 %v2425, 6
      %v2910 = vpop.permute.xlu0 %2909
      %2911 = vrot.lane.b32.xlu0 %v2426, 6
      %v2912 = vpop.permute.xlu0 %2911
      %2913 = vrot.lane.b32.xlu0 %v2427, 6
      %v2914 = vpop.permute.xlu0 %2913
      %2915 = vrot.lane.b32.xlu0 %v2428, 6
      %v2916 = vpop.permute.xlu0 %2915
      %2917 = vrot.lane.b32.xlu0 %v2429, 6
      %v2918 = vpop.permute.xlu0 %2917
      %2919 = vrot.lane.b32.xlu0 %v2430, 6
      %v2920 = vpop.permute.xlu0 %2919
      %2921 = vrot.lane.b32.xlu0 %v2431, 6
      %v2922 = vpop.permute.xlu0 %2921
      %2923 = vrot.lane.b32.xlu0 %v2432, 6
      %v2924 = vpop.permute.xlu0 %2923
      %2925 = vrot.lane.b32.xlu0 %v2433, 6
      %v2926 = vpop.permute.xlu0 %2925
      %2927 = vrot.lane.b32.xlu0 %v2434, 6
      %v2928 = vpop.permute.xlu0 %2927
      %2929 = vrot.lane.b32.xlu0 %v2435, 6
      %v2930 = vpop.permute.xlu0 %2929
      %2931 = vrot.lane.b32.xlu0 %v2436, 6
      %v2932 = vpop.permute.xlu0 %2931
      %2933 = vrot.lane.b32.xlu0 %v2437, 6
      %v2934 = vpop.permute.xlu0 %2933
      %2935 = vrot.lane.b32.xlu0 %v2438, 6
      %v2936 = vpop.permute.xlu0 %2935
      %2937 = vrot.lane.b32.xlu0 %v2439, 6
      %v2938 = vpop.permute.xlu0 %2937
      %2939 = vrot.lane.b32.xlu0 %v2440, 6
      %v2940 = vpop.permute.xlu0 %2939
      %2941 = vrot.lane.b32.xlu0 %v2441, 6
      %v2942 = vpop.permute.xlu0 %2941
      %2943 = vrot.lane.b32.xlu0 %v2442, 6
      %v2944 = vpop.permute.xlu0 %2943
      %2945 = vrot.lane.b32.xlu0 %v2443, 6
      %v2946 = vpop.permute.xlu0 %2945
      %2947 = vrot.lane.b32.xlu0 %v2444, 6
      %v2948 = vpop.permute.xlu0 %2947
      %2949 = vrot.lane.b32.xlu0 %v2445, 6
      %v2950 = vpop.permute.xlu0 %2949
      %2951 = vrot.lane.b32.xlu0 %v2446, 6
      %v2952 = vpop.permute.xlu0 %2951
      %2953 = vrot.lane.b32.xlu0 %v2447, 6
      %v2954 = vpop.permute.xlu0 %2953
      %2955 = vrot.lane.b32.xlu0 %v2448, 6
      %v2956 = vpop.permute.xlu0 %2955
      %2957 = vrot.lane.b32.xlu0 %v2449, 6
      %v2958 = vpop.permute.xlu0 %2957
      %2959 = vrot.lane.b32.xlu0 %v2450, 6
      %v2960 = vpop.permute.xlu0 %2959
      %2961 = vrot.lane.b32.xlu0 %v2451, 6
      %v2962 = vpop.permute.xlu0 %2961
      %2963 = vrot.lane.b32.xlu0 %v2452, 6
      %v2964 = vpop.permute.xlu0 %2963
      %2965 = vrot.lane.b32.xlu0 %v2453, 6
      %v2966 = vpop.permute.xlu0 %2965
      %3031 = vrot.lane.b32.xlu0 %v2454, 8
      %v3032 = vpop.permute.xlu0 %3031
      %3033 = vrot.lane.b32.xlu0 %v2455, 8
      %v3034 = vpop.permute.xlu0 %3033
      %3035 = vrot.lane.b32.xlu0 %v2456, 8
      %v3036 = vpop.permute.xlu0 %3035
      %3037 = vrot.lane.b32.xlu0 %v2457, 8
      %v3038 = vpop.permute.xlu0 %3037
      %3039 = vrot.lane.b32.xlu0 %v2458, 8
      %v3040 = vpop.permute.xlu0 %3039
      %3041 = vrot.lane.b32.xlu0 %v2459, 8
      %v3042 = vpop.permute.xlu0 %3041
      %3043 = vrot.lane.b32.xlu0 %v2460, 8
      %v3044 = vpop.permute.xlu0 %3043
      %3045 = vrot.lane.b32.xlu0 %v2461, 8
      %v3046 = vpop.permute.xlu0 %3045
      %3047 = vrot.lane.b32.xlu0 %v2462, 8
      %v3048 = vpop.permute.xlu0 %3047
      %3049 = vrot.lane.b32.xlu0 %v2463, 8
      %v3050 = vpop.permute.xlu0 %3049
      %3051 = vrot.lane.b32.xlu0 %v2464, 8
      %v3052 = vpop.permute.xlu0 %3051
      %3053 = vrot.lane.b32.xlu0 %v2465, 8
      %v3054 = vpop.permute.xlu0 %3053
      %3055 = vrot.lane.b32.xlu0 %v2466, 8
      %v3056 = vpop.permute.xlu0 %3055
      %3057 = vrot.lane.b32.xlu0 %v2467, 8
      %v3058 = vpop.permute.xlu0 %3057
      %3059 = vrot.lane.b32.xlu0 %v2468, 8
      %v3060 = vpop.permute.xlu0 %3059
      %3061 = vrot.lane.b32.xlu0 %v2469, 8
      %v3062 = vpop.permute.xlu0 %3061
      %3063 = vrot.lane.b32.xlu0 %v2470, 8
      %v3064 = vpop.permute.xlu0 %3063
      %3065 = vrot.lane.b32.xlu0 %v2471, 8
      %v3066 = vpop.permute.xlu0 %3065
      %3067 = vrot.lane.b32.xlu0 %v2472, 8
      %v3068 = vpop.permute.xlu0 %3067
      %3069 = vrot.lane.b32.xlu0 %v2473, 8
      %v3070 = vpop.permute.xlu0 %3069
      %3071 = vrot.lane.b32.xlu0 %v2474, 8
      %v3072 = vpop.permute.xlu0 %3071
      %3073 = vrot.lane.b32.xlu0 %v2475, 8
      %v3074 = vpop.permute.xlu0 %3073
      %3075 = vrot.lane.b32.xlu0 %v2476, 8
      %v3076 = vpop.permute.xlu0 %3075
      %3077 = vrot.lane.b32.xlu0 %v2477, 8
      %v3078 = vpop.permute.xlu0 %3077
      %3079 = vrot.lane.b32.xlu0 %v2478, 8
      %v3080 = vpop.permute.xlu0 %3079
      %3081 = vrot.lane.b32.xlu0 %v2479, 8
      %v3082 = vpop.permute.xlu0 %3081
      %3083 = vrot.lane.b32.xlu0 %v2480, 8
      %v3084 = vpop.permute.xlu0 %3083
      %3085 = vrot.lane.b32.xlu0 %v2481, 8
      %v3086 = vpop.permute.xlu0 %3085
      %3087 = vrot.lane.b32.xlu0 %v2482, 8
      %v3088 = vpop.permute.xlu0 %3087
      %3089 = vrot.lane.b32.xlu0 %v2483, 8
      %v3090 = vpop.permute.xlu0 %3089
      %3091 = vrot.lane.b32.xlu0 %v2484, 8
      %v3092 = vpop.permute.xlu0 %3091
      %3093 = vrot.lane.b32.xlu0 %v2485, 8
      %v3094 = vpop.permute.xlu0 %3093
      %3159 = vrot.lane.b32.xlu0 %v2486, 10
      %v3160 = vpop.permute.xlu0 %3159
      %3161 = vrot.lane.b32.xlu0 %v2487, 10
      %v3162 = vpop.permute.xlu0 %3161
      %3163 = vrot.lane.b32.xlu0 %v2488, 10
      %v3164 = vpop.permute.xlu0 %3163
      %3165 = vrot.lane.b32.xlu0 %v2489, 10
      %v3166 = vpop.permute.xlu0 %3165
      %3167 = vrot.lane.b32.xlu0 %v2490, 10
      %v3168 = vpop.permute.xlu0 %3167
      %3169 = vrot.lane.b32.xlu0 %v2491, 10
      %v3170 = vpop.permute.xlu0 %3169
      %3171 = vrot.lane.b32.xlu0 %v2492, 10
      %v3172 = vpop.permute.xlu0 %3171
      %3173 = vrot.lane.b32.xlu0 %v2493, 10
      %v3174 = vpop.permute.xlu0 %3173
      %3175 = vrot.lane.b32.xlu0 %v2494, 10
      %v3176 = vpop.permute.xlu0 %3175
      %3177 = vrot.lane.b32.xlu0 %v2495, 10
      %v3178 = vpop.permute.xlu0 %3177
      %3179 = vrot.lane.b32.xlu0 %v2496, 10
      %v3180 = vpop.permute.xlu0 %3179
      %3181 = vrot.lane.b32.xlu0 %v2497, 10
      %v3182 = vpop.permute.xlu0 %3181
      %3183 = vrot.lane.b32.xlu0 %v2498, 10
      %v3184 = vpop.permute.xlu0 %3183
      %3185 = vrot.lane.b32.xlu0 %v2499, 10
      %v3186 = vpop.permute.xlu0 %3185
      %3187 = vrot.lane.b32.xlu0 %v2500, 10
      %v3188 = vpop.permute.xlu0 %3187
      %3189 = vrot.lane.b32.xlu0 %v2501, 10
      %v3190 = vpop.permute.xlu0 %3189
      %3191 = vrot.lane.b32.xlu0 %v2502, 10
      %v3192 = vpop.permute.xlu0 %3191
      %3193 = vrot.lane.b32.xlu0 %v2503, 10
      %v3194 = vpop.permute.xlu0 %3193
      %3195 = vrot.lane.b32.xlu0 %v2504, 10
      %v3196 = vpop.permute.xlu0 %3195
      %3197 = vrot.lane.b32.xlu0 %v2505, 10
      %v3198 = vpop.permute.xlu0 %3197
      %3199 = vrot.lane.b32.xlu0 %v2506, 10
      %v3200 = vpop.permute.xlu0 %3199
      %3201 = vrot.lane.b32.xlu0 %v2507, 10
      %v3202 = vpop.permute.xlu0 %3201
      %3203 = vrot.lane.b32.xlu0 %v2508, 10
      %v3204 = vpop.permute.xlu0 %3203
      %3205 = vrot.lane.b32.xlu0 %v2509, 10
      %v3206 = vpop.permute.xlu0 %3205
      %3207 = vrot.lane.b32.xlu0 %v2510, 10
      %v3208 = vpop.permute.xlu0 %3207
      %3209 = vrot.lane.b32.xlu0 %v2511, 10
      %v3210 = vpop.permute.xlu0 %3209
      %3211 = vrot.lane.b32.xlu0 %v2512, 10
      %v3212 = vpop.permute.xlu0 %3211
      %3213 = vrot.lane.b32.xlu0 %v2513, 10
      %v3214 = vpop.permute.xlu0 %3213
      %3215 = vrot.lane.b32.xlu0 %v2514, 10
      %v3216 = vpop.permute.xlu0 %3215
      %3217 = vrot.lane.b32.xlu0 %v2515, 10
      %v3218 = vpop.permute.xlu0 %3217
      %3219 = vrot.lane.b32.xlu0 %v2516, 10
      %v3220 = vpop.permute.xlu0 %3219
      %3221 = vrot.lane.b32.xlu0 %v2517, 10
      %v3222 = vpop.permute.xlu0 %3221
      %3287 = vrot.lane.b32.xlu0 %v2519, 12
      %v3288 = vpop.permute.xlu0 %3287
      %3289 = vrot.lane.b32.xlu0 %v2520, 12
      %v3290 = vpop.permute.xlu0 %3289
      %3291 = vrot.lane.b32.xlu0 %v2521, 12
      %v3292 = vpop.permute.xlu0 %3291
      %3293 = vrot.lane.b32.xlu0 %v2522, 12
      %v3294 = vpop.permute.xlu0 %3293
      %3295 = vrot.lane.b32.xlu0 %v2523, 12
      %v3296 = vpop.permute.xlu0 %3295
      %3297 = vrot.lane.b32.xlu0 %v2524, 12
      %v3298 = vpop.permute.xlu0 %3297
      %3299 = vrot.lane.b32.xlu0 %v2525, 12
      %v3300 = vpop.permute.xlu0 %3299
      %3301 = vrot.lane.b32.xlu0 %v2526, 12
      %v3302 = vpop.permute.xlu0 %3301
      %3303 = vrot.lane.b32.xlu0 %v2527, 12
      %v3304 = vpop.permute.xlu0 %3303
      %3305 = vrot.lane.b32.xlu0 %v2528, 12
      %v3306 = vpop.permute.xlu0 %3305
      %3307 = vrot.lane.b32.xlu0 %v2529, 12
      %v3308 = vpop.permute.xlu0 %3307
      %3309 = vrot.lane.b32.xlu0 %v2530, 12
      %v3310 = vpop.permute.xlu0 %3309
      %3311 = vrot.lane.b32.xlu0 %v2531, 12
      %v3312 = vpop.permute.xlu0 %3311
      %3313 = vrot.lane.b32.xlu0 %v2532, 12
      %v3314 = vpop.permute.xlu0 %3313
      %3315 = vrot.lane.b32.xlu0 %v2533, 12
      %v3316 = vpop.permute.xlu0 %3315
      %3317 = vrot.lane.b32.xlu0 %v2534, 12
      %v3318 = vpop.permute.xlu0 %3317
      %3319 = vrot.lane.b32.xlu0 %v2535, 12
      %v3320 = vpop.permute.xlu0 %3319
      %3321 = vrot.lane.b32.xlu0 %v2536, 12
      %v3322 = vpop.permute.xlu0 %3321
      %3323 = vrot.lane.b32.xlu0 %v2537, 12
      %v3324 = vpop.permute.xlu0 %3323
      %3325 = vrot.lane.b32.xlu0 %v2538, 12
      %v3326 = vpop.permute.xlu0 %3325
      %3327 = vrot.lane.b32.xlu0 %v2539, 12
      %v3328 = vpop.permute.xlu0 %3327
      %3329 = vrot.lane.b32.xlu0 %v2540, 12
      %v3330 = vpop.permute.xlu0 %3329
      %3331 = vrot.lane.b32.xlu0 %v2541, 12
      %v3332 = vpop.permute.xlu0 %3331
      %3333 = vrot.lane.b32.xlu0 %v2542, 12
      %v3334 = vpop.permute.xlu0 %3333
      %3335 = vrot.lane.b32.xlu0 %v2543, 12
      %v3336 = vpop.permute.xlu0 %3335
      %3337 = vrot.lane.b32.xlu0 %v2544, 12
      %v3338 = vpop.permute.xlu0 %3337
      %3339 = vrot.lane.b32.xlu0 %v2545, 12
      %v3340 = vpop.permute.xlu0 %3339
      %3341 = vrot.lane.b32.xlu0 %v2546, 12
      %v3342 = vpop.permute.xlu0 %3341
      %3343 = vrot.lane.b32.xlu0 %v2547, 12
      %v3344 = vpop.permute.xlu0 %3343
      %3345 = vrot.lane.b32.xlu0 %v2548, 12
      %v3346 = vpop.permute.xlu0 %3345
      %3347 = vrot.lane.b32.xlu0 %v2549, 12
      %v3348 = vpop.permute.xlu0 %3347
      %3349 = vrot.lane.b32.xlu0 %v2550, 12
      %v3350 = vpop.permute.xlu0 %3349
      %3415 = vrot.lane.b32.xlu0 %v2551, 14
      %v3416 = vpop.permute.xlu0 %3415
      %3417 = vrot.lane.b32.xlu0 %v2552, 14
      %v3418 = vpop.permute.xlu0 %3417
      %3419 = vrot.lane.b32.xlu0 %v2553, 14
      %v3420 = vpop.permute.xlu0 %3419
      %3421 = vrot.lane.b32.xlu0 %v2554, 14
      %v3422 = vpop.permute.xlu0 %3421
      %3423 = vrot.lane.b32.xlu0 %v2555, 14
      %v3424 = vpop.permute.xlu0 %3423
      %3425 = vrot.lane.b32.xlu0 %v2556, 14
      %v3426 = vpop.permute.xlu0 %3425
      %3427 = vrot.lane.b32.xlu0 %v2557, 14
      %v3428 = vpop.permute.xlu0 %3427
      %3429 = vrot.lane.b32.xlu0 %v2558, 14
      %v3430 = vpop.permute.xlu0 %3429
      %3431 = vrot.lane.b32.xlu0 %v2559, 14
      %v3432 = vpop.permute.xlu0 %3431
      %3433 = vrot.lane.b32.xlu0 %v2560, 14
      %v3434 = vpop.permute.xlu0 %3433
      %3435 = vrot.lane.b32.xlu0 %v2561, 14
      %v3436 = vpop.permute.xlu0 %3435
      %3437 = vrot.lane.b32.xlu0 %v2562, 14
      %v3438 = vpop.permute.xlu0 %3437
      %3439 = vrot.lane.b32.xlu0 %v2563, 14
      %v3440 = vpop.permute.xlu0 %3439
      %3441 = vrot.lane.b32.xlu0 %v2564, 14
      %v3442 = vpop.permute.xlu0 %3441
      %3443 = vrot.lane.b32.xlu0 %v2565, 14
      %v3444 = vpop.permute.xlu0 %3443
      %3445 = vrot.lane.b32.xlu0 %v2566, 14
      %v3446 = vpop.permute.xlu0 %3445
      %3447 = vrot.lane.b32.xlu0 %v2567, 14
      %v3448 = vpop.permute.xlu0 %3447
      %3449 = vrot.lane.b32.xlu0 %v2568, 14
      %v3450 = vpop.permute.xlu0 %3449
      %3451 = vrot.lane.b32.xlu0 %v2569, 14
      %v3452 = vpop.permute.xlu0 %3451
      %3453 = vrot.lane.b32.xlu0 %v2570, 14
      %v3454 = vpop.permute.xlu0 %3453
      %3455 = vrot.lane.b32.xlu0 %v2571, 14
      %v3456 = vpop.permute.xlu0 %3455
      %3457 = vrot.lane.b32.xlu0 %v2572, 14
      %v3458 = vpop.permute.xlu0 %3457
      %3459 = vrot.lane.b32.xlu0 %v2573, 14
      %v3460 = vpop.permute.xlu0 %3459
      %3461 = vrot.lane.b32.xlu0 %v2574, 14
      %v3462 = vpop.permute.xlu0 %3461
      %3463 = vrot.lane.b32.xlu0 %v2575, 14
      %v3464 = vpop.permute.xlu0 %3463
      %3465 = vrot.lane.b32.xlu0 %v2576, 14
      %v3466 = vpop.permute.xlu0 %3465
      %3467 = vrot.lane.b32.xlu0 %v2577, 14
      %v3468 = vpop.permute.xlu0 %3467
      %3469 = vrot.lane.b32.xlu0 %v2578, 14
      %v3470 = vpop.permute.xlu0 %3469
      %3471 = vrot.lane.b32.xlu0 %v2579, 14
      %v3472 = vpop.permute.xlu0 %3471
      %3473 = vrot.lane.b32.xlu0 %v2580, 14
      %v3474 = vpop.permute.xlu0 %3473
      %3475 = vrot.lane.b32.xlu0 %v2581, 14
      %v3476 = vpop.permute.xlu0 %3475
      %3477 = vrot.lane.b32.xlu0 %v2582, 14
      %v3478 = vpop.permute.xlu0 %3477
      %3543 = vrot.lane.b32.xlu0 %v2583, 16
      %v3544 = vpop.permute.xlu0 %3543
      %3545 = vrot.lane.b32.xlu0 %v2584, 16
      %v3546 = vpop.permute.xlu0 %3545
      %3547 = vrot.lane.b32.xlu0 %v2585, 16
      %v3548 = vpop.permute.xlu0 %3547
      %3549 = vrot.lane.b32.xlu0 %v2586, 16
      %v3550 = vpop.permute.xlu0 %3549
      %3551 = vrot.lane.b32.xlu0 %v2587, 16
      %v3552 = vpop.permute.xlu0 %3551
      %3553 = vrot.lane.b32.xlu0 %v2588, 16
      %v3554 = vpop.permute.xlu0 %3553
      %3555 = vrot.lane.b32.xlu0 %v2589, 16
      %v3556 = vpop.permute.xlu0 %3555
      %3557 = vrot.lane.b32.xlu0 %v2590, 16
      %v3558 = vpop.permute.xlu0 %3557
      %3559 = vrot.lane.b32.xlu0 %v2591, 16
      %v3560 = vpop.permute.xlu0 %3559
      %3561 = vrot.lane.b32.xlu0 %v2592, 16
      %v3562 = vpop.permute.xlu0 %3561
      %3563 = vrot.lane.b32.xlu0 %v2593, 16
      %v3564 = vpop.permute.xlu0 %3563
      %3565 = vrot.lane.b32.xlu0 %v2594, 16
      %v3566 = vpop.permute.xlu0 %3565
      %3567 = vrot.lane.b32.xlu0 %v2595, 16
      %v3568 = vpop.permute.xlu0 %3567
      %3569 = vrot.lane.b32.xlu0 %v2596, 16
      %v3570 = vpop.permute.xlu0 %3569
      %3571 = vrot.lane.b32.xlu0 %v2597, 16
      %v3572 = vpop.permute.xlu0 %3571
      %3573 = vrot.lane.b32.xlu0 %v2598, 16
      %v3574 = vpop.permute.xlu0 %3573
      %3575 = vrot.lane.b32.xlu0 %v2599, 16
      %v3576 = vpop.permute.xlu0 %3575
      %3577 = vrot.lane.b32.xlu0 %v2600, 16
      %v3578 = vpop.permute.xlu0 %3577
      %3579 = vrot.lane.b32.xlu0 %v2601, 16
      %v3580 = vpop.permute.xlu0 %3579
      %3581 = vrot.lane.b32.xlu0 %v2602, 16
      %v3582 = vpop.permute.xlu0 %3581
      %3583 = vrot.lane.b32.xlu0 %v2603, 16
      %v3584 = vpop.permute.xlu0 %3583
      %3585 = vrot.lane.b32.xlu0 %v2604, 16
      %v3586 = vpop.permute.xlu0 %3585
      %3587 = vrot.lane.b32.xlu0 %v2605, 16
      %v3588 = vpop.permute.xlu0 %3587
      %3589 = vrot.lane.b32.xlu0 %v2606, 16
      %v3590 = vpop.permute.xlu0 %3589
      %3591 = vrot.lane.b32.xlu0 %v2607, 16
      %v3592 = vpop.permute.xlu0 %3591
      %3593 = vrot.lane.b32.xlu0 %v2608, 16
      %v3594 = vpop.permute.xlu0 %3593
      %3595 = vrot.lane.b32.xlu0 %v2609, 16
      %v3596 = vpop.permute.xlu0 %3595
      %3597 = vrot.lane.b32.xlu0 %v2610, 16
      %v3598 = vpop.permute.xlu0 %3597
      %3599 = vrot.lane.b32.xlu0 %v2611, 16
      %v3600 = vpop.permute.xlu0 %3599
      %3601 = vrot.lane.b32.xlu0 %v2612, 16
      %v3602 = vpop.permute.xlu0 %3601
      %3603 = vrot.lane.b32.xlu0 %v2613, 16
      %v3604 = vpop.permute.xlu0 %3603
      %3605 = vrot.lane.b32.xlu0 %v2614, 16
      %v3606 = vpop.permute.xlu0 %3605
      %v3639 = vsel %vm2231, %v2326, %v2648
      %v3640 = vsel %vm2231, %v2327, %v2650
      %v3641 = vsel %vm2231, %v2328, %v2652
      %v3642 = vsel %vm2231, %v2329, %v2654
      %v3643 = vsel %vm2231, %v2330, %v2656
      %v3644 = vsel %vm2231, %v2331, %v2658
      %v3645 = vsel %vm2231, %v2332, %v2660
      %v3646 = vsel %vm2231, %v2333, %v2662
      %v3647 = vsel %vm2231, %v2334, %v2664
      %v3648 = vsel %vm2231, %v2335, %v2666
      %v3649 = vsel %vm2231, %v2336, %v2668
      %v3650 = vsel %vm2231, %v2337, %v2670
      %v3651 = vsel %vm2231, %v2338, %v2672
      %v3652 = vsel %vm2231, %v2339, %v2674
      %v3653 = vsel %vm2231, %v2340, %v2676
      %v3654 = vsel %vm2231, %v2341, %v2678
      %v3655 = vsel %vm2231, %v2342, %v2680
      %v3656 = vsel %vm2231, %v2343, %v2682
      %v3657 = vsel %vm2231, %v2344, %v2684
      %v3658 = vsel %vm2231, %v2345, %v2686
      %v3659 = vsel %vm2231, %v2346, %v2688
      %v3660 = vsel %vm2231, %v2347, %v2690
      %v3661 = vsel %vm2231, %v2348, %v2692
      %v3662 = vsel %vm2231, %v2349, %v2694
      %v3663 = vsel %vm2231, %v2350, %v2696
      %v3664 = vsel %vm2231, %v2351, %v2698
      %v3665 = vsel %vm2231, %v2352, %v2700
      %v3666 = vsel %vm2231, %v2353, %v2702
      %v3667 = vsel %vm2231, %v2354, %v2704
      %v3668 = vsel %vm2231, %v2355, %v2706
      %v3669 = vsel %vm2231, %v2356, %v2708
      %v3670 = vsel %vm2231, %v2357, %v2710
      %v3671 = vsel %vm279, %v3639, %v2776
      %v3672 = vsel %vm279, %v3640, %v2778
      %v3673 = vsel %vm279, %v3641, %v2780
      %v3674 = vsel %vm279, %v3642, %v2782
      %v3675 = vsel %vm279, %v3643, %v2784
      %v3676 = vsel %vm279, %v3644, %v2786
      %v3677 = vsel %vm279, %v3645, %v2788
      %v3678 = vsel %vm279, %v3646, %v2790
      %v3679 = vsel %vm279, %v3647, %v2792
      %v3680 = vsel %vm279, %v3648, %v2794
      %v3681 = vsel %vm279, %v3649, %v2796
      %v3682 = vsel %vm279, %v3650, %v2798
      %v3683 = vsel %vm279, %v3651, %v2800
      %v3684 = vsel %vm279, %v3652, %v2802
      %v3685 = vsel %vm279, %v3653, %v2804
      %v3686 = vsel %vm279, %v3654, %v2806
      %v3687 = vsel %vm279, %v3655, %v2808
      %v3688 = vsel %vm279, %v3656, %v2810
      %v3689 = vsel %vm279, %v3657, %v2812
      %v3690 = vsel %vm279, %v3658, %v2814
      %v3691 = vsel %vm279, %v3659, %v2816
      %v3692 = vsel %vm279, %v3660, %v2818
      %v3693 = vsel %vm279, %v3661, %v2820
      %v3694 = vsel %vm279, %v3662, %v2822
      %v3695 = vsel %vm279, %v3663, %v2824
      %v3696 = vsel %vm279, %v3664, %v2826
      %v3697 = vsel %vm279, %v3665, %v2828
      %v3698 = vsel %vm279, %v3666, %v2830
      %v3699 = vsel %vm279, %v3667, %v2832
      %v3700 = vsel %vm279, %v3668, %v2834
      %v3701 = vsel %vm279, %v3669, %v2836
      %v3702 = vsel %vm279, %v3670, %v2838
      %vm3703 = vcmask 48128
      %v3704 = vsel %vm3703, %v3671, %v2904
      %v3705 = vsel %vm3703, %v3672, %v2906
      %v3706 = vsel %vm3703, %v3673, %v2908
      %v3707 = vsel %vm3703, %v3674, %v2910
      %v3708 = vsel %vm3703, %v3675, %v2912
      %v3709 = vsel %vm3703, %v3676, %v2914
      %v3710 = vsel %vm3703, %v3677, %v2916
      %v3711 = vsel %vm3703, %v3678, %v2918
      %v3712 = vsel %vm3703, %v3679, %v2920
      %v3713 = vsel %vm3703, %v3680, %v2922
      %v3714 = vsel %vm3703, %v3681, %v2924
      %v3715 = vsel %vm3703, %v3682, %v2926
      %v3716 = vsel %vm3703, %v3683, %v2928
      %v3717 = vsel %vm3703, %v3684, %v2930
      %v3718 = vsel %vm3703, %v3685, %v2932
      %v3719 = vsel %vm3703, %v3686, %v2934
      %v3720 = vsel %vm3703, %v3687, %v2936
      %v3721 = vsel %vm3703, %v3688, %v2938
      %v3722 = vsel %vm3703, %v3689, %v2940
      %v3723 = vsel %vm3703, %v3690, %v2942
      %v3724 = vsel %vm3703, %v3691, %v2944
      %v3725 = vsel %vm3703, %v3692, %v2946
      %v3726 = vsel %vm3703, %v3693, %v2948
      %v3727 = vsel %vm3703, %v3694, %v2950
      %v3728 = vsel %vm3703, %v3695, %v2952
      %v3729 = vsel %vm3703, %v3696, %v2954
      %v3730 = vsel %vm3703, %v3697, %v2956
      %v3731 = vsel %vm3703, %v3698, %v2958
      %v3732 = vsel %vm3703, %v3699, %v2960
      %v3733 = vsel %vm3703, %v3700, %v2962
      %v3734 = vsel %vm3703, %v3701, %v2964
      %v3735 = vsel %vm3703, %v3702, %v2966
      %v3736 = vsel %vm1745, %v3704, %v3032
      %v3737 = vsel %vm1745, %v3705, %v3034
      %v3738 = vsel %vm1745, %v3706, %v3036
      %v3739 = vsel %vm1745, %v3707, %v3038
      %v3740 = vsel %vm1745, %v3708, %v3040
      %v3741 = vsel %vm1745, %v3709, %v3042
      %v3742 = vsel %vm1745, %v3710, %v3044
      %v3743 = vsel %vm1745, %v3711, %v3046
      %v3744 = vsel %vm1745, %v3712, %v3048
      %v3745 = vsel %vm1745, %v3713, %v3050
      %v3746 = vsel %vm1745, %v3714, %v3052
      %v3747 = vsel %vm1745, %v3715, %v3054
      %v3748 = vsel %vm1745, %v3716, %v3056
      %v3749 = vsel %vm1745, %v3717, %v3058
      %v3750 = vsel %vm1745, %v3718, %v3060
      %v3751 = vsel %vm1745, %v3719, %v3062
      %v3752 = vsel %vm1745, %v3720, %v3064
      %v3753 = vsel %vm1745, %v3721, %v3066
      %v3754 = vsel %vm1745, %v3722, %v3068
      %v3755 = vsel %vm1745, %v3723, %v3070
      %v3756 = vsel %vm1745, %v3724, %v3072
      %v3757 = vsel %vm1745, %v3725, %v3074
      %v3758 = vsel %vm1745, %v3726, %v3076
      %v3759 = vsel %vm1745, %v3727, %v3078
      %v3760 = vsel %vm1745, %v3728, %v3080
      %v3761 = vsel %vm1745, %v3729, %v3082
      %v3762 = vsel %vm1745, %v3730, %v3084
      %v3763 = vsel %vm1745, %v3731, %v3086
      %v3764 = vsel %vm1745, %v3732, %v3088
      %v3765 = vsel %vm1745, %v3733, %v3090
      %v3766 = vsel %vm1745, %v3734, %v3092
      %v3767 = vsel %vm1745, %v3735, %v3094
      %vm3768 = vcmask 80896
      %v3769 = vsel %vm3768, %v3736, %v3160
      %v3770 = vsel %vm3768, %v3737, %v3162
      %v3771 = vsel %vm3768, %v3738, %v3164
      %v3772 = vsel %vm3768, %v3739, %v3166
      %v3773 = vsel %vm3768, %v3740, %v3168
      %v3774 = vsel %vm3768, %v3741, %v3170
      %v3775 = vsel %vm3768, %v3742, %v3172
      %v3776 = vsel %vm3768, %v3743, %v3174
      %v3777 = vsel %vm3768, %v3744, %v3176
      %v3778 = vsel %vm3768, %v3745, %v3178
      %v3779 = vsel %vm3768, %v3746, %v3180
      %v3780 = vsel %vm3768, %v3747, %v3182
      %v3781 = vsel %vm3768, %v3748, %v3184
      %v3782 = vsel %vm3768, %v3749, %v3186
      %v3783 = vsel %vm3768, %v3750, %v3188
      %v3784 = vsel %vm3768, %v3751, %v3190
      %v3785 = vsel %vm3768, %v3752, %v3192
      %v3786 = vsel %vm3768, %v3753, %v3194
      %v3787 = vsel %vm3768, %v3754, %v3196
      %v3788 = vsel %vm3768, %v3755, %v3198
      %v3789 = vsel %vm3768, %v3756, %v3200
      %v3790 = vsel %vm3768, %v3757, %v3202
      %v3791 = vsel %vm3768, %v3758, %v3204
      %v3792 = vsel %vm3768, %v3759, %v3206
      %v3793 = vsel %vm3768, %v3760, %v3208
      %v3794 = vsel %vm3768, %v3761, %v3210
      %v3795 = vsel %vm3768, %v3762, %v3212
      %v3796 = vsel %vm3768, %v3763, %v3214
      %v3797 = vsel %vm3768, %v3764, %v3216
      %v3798 = vsel %vm3768, %v3765, %v3218
      %v3799 = vsel %vm3768, %v3766, %v3220
      %v3800 = vsel %vm3768, %v3767, %v3222
      %v3801 = vsel %vm1778, %v3769, %v3288
      %v3802 = vsel %vm1778, %v3770, %v3290
      %v3803 = vsel %vm1778, %v3771, %v3292
      %v3804 = vsel %vm1778, %v3772, %v3294
      %v3805 = vsel %vm1778, %v3773, %v3296
      %v3806 = vsel %vm1778, %v3774, %v3298
      %v3807 = vsel %vm1778, %v3775, %v3300
      %v3808 = vsel %vm1778, %v3776, %v3302
      %v3809 = vsel %vm1778, %v3777, %v3304
      %v3810 = vsel %vm1778, %v3778, %v3306
      %v3811 = vsel %vm1778, %v3779, %v3308
      %v3812 = vsel %vm1778, %v3780, %v3310
      %v3813 = vsel %vm1778, %v3781, %v3312
      %v3814 = vsel %vm1778, %v3782, %v3314
      %v3815 = vsel %vm1778, %v3783, %v3316
      %v3816 = vsel %vm1778, %v3784, %v3318
      %v3817 = vsel %vm1778, %v3785, %v3320
      %v3818 = vsel %vm1778, %v3786, %v3322
      %v3819 = vsel %vm1778, %v3787, %v3324
      %v3820 = vsel %vm1778, %v3788, %v3326
      %v3821 = vsel %vm1778, %v3789, %v3328
      %v3822 = vsel %vm1778, %v3790, %v3330
      %v3823 = vsel %vm1778, %v3791, %v3332
      %v3824 = vsel %vm1778, %v3792, %v3334
      %v3825 = vsel %vm1778, %v3793, %v3336
      %v3826 = vsel %vm1778, %v3794, %v3338
      %v3827 = vsel %vm1778, %v3795, %v3340
      %v3828 = vsel %vm1778, %v3796, %v3342
      %v3829 = vsel %vm1778, %v3797, %v3344
      %v3830 = vsel %vm1778, %v3798, %v3346
      %v3831 = vsel %vm1778, %v3799, %v3348
      %v3832 = vsel %vm1778, %v3800, %v3350
      %vm3833 = vcmask 113664
      %v3834 = vsel %vm3833, %v3801, %v3416
      %v3835 = vsel %vm3833, %v3802, %v3418
      %v3836 = vsel %vm3833, %v3803, %v3420
      %v3837 = vsel %vm3833, %v3804, %v3422
      %v3838 = vsel %vm3833, %v3805, %v3424
      %v3839 = vsel %vm3833, %v3806, %v3426
      %v3840 = vsel %vm3833, %v3807, %v3428
      %v3841 = vsel %vm3833, %v3808, %v3430
      %v3842 = vsel %vm3833, %v3809, %v3432
      %v3843 = vsel %vm3833, %v3810, %v3434
      %v3844 = vsel %vm3833, %v3811, %v3436
      %v3845 = vsel %vm3833, %v3812, %v3438
      %v3846 = vsel %vm3833, %v3813, %v3440
      %v3847 = vsel %vm3833, %v3814, %v3442
      %v3848 = vsel %vm3833, %v3815, %v3444
      %v3849 = vsel %vm3833, %v3816, %v3446
      %v3850 = vsel %vm3833, %v3817, %v3448
      %v3851 = vsel %vm3833, %v3818, %v3450
      %v3852 = vsel %vm3833, %v3819, %v3452
      %v3853 = vsel %vm3833, %v3820, %v3454
      %v3854 = vsel %vm3833, %v3821, %v3456
      %v3855 = vsel %vm3833, %v3822, %v3458
      %v3856 = vsel %vm3833, %v3823, %v3460
      %v3857 = vsel %vm3833, %v3824, %v3462
      %v3858 = vsel %vm3833, %v3825, %v3464
      %v3859 = vsel %vm3833, %v3826, %v3466
      %v3860 = vsel %vm3833, %v3827, %v3468
      %v3861 = vsel %vm3833, %v3828, %v3470
      %v3862 = vsel %vm3833, %v3829, %v3472
      %v3863 = vsel %vm3833, %v3830, %v3474
      %v3864 = vsel %vm3833, %v3831, %v3476
      %v3865 = vsel %vm3833, %v3832, %v3478
      %v3866 = vsel %vm1811, %v3834, %v3544
      %v3867 = vsel %vm1811, %v3835, %v3546
      %v3868 = vsel %vm1811, %v3836, %v3548
      %v3869 = vsel %vm1811, %v3837, %v3550
      %v3870 = vsel %vm1811, %v3838, %v3552
      %v3871 = vsel %vm1811, %v3839, %v3554
      %v3872 = vsel %vm1811, %v3840, %v3556
      %v3873 = vsel %vm1811, %v3841, %v3558
      %v3874 = vsel %vm1811, %v3842, %v3560
      %v3875 = vsel %vm1811, %v3843, %v3562
      %v3876 = vsel %vm1811, %v3844, %v3564
      %v3877 = vsel %vm1811, %v3845, %v3566
      %v3878 = vsel %vm1811, %v3846, %v3568
      %v3879 = vsel %vm1811, %v3847, %v3570
      %v3880 = vsel %vm1811, %v3848, %v3572
      %v3881 = vsel %vm1811, %v3849, %v3574
      %v3882 = vsel %vm1811, %v3850, %v3576
      %v3883 = vsel %vm1811, %v3851, %v3578
      %v3884 = vsel %vm1811, %v3852, %v3580
      %v3885 = vsel %vm1811, %v3853, %v3582
      %v3886 = vsel %vm1811, %v3854, %v3584
      %v3887 = vsel %vm1811, %v3855, %v3586
      %v3888 = vsel %vm1811, %v3856, %v3588
      %v3889 = vsel %vm1811, %v3857, %v3590
      %v3890 = vsel %vm1811, %v3858, %v3592
      %v3891 = vsel %vm1811, %v3859, %v3594
      %v3892 = vsel %vm1811, %v3860, %v3596
      %v3893 = vsel %vm1811, %v3861, %v3598
      %v3894 = vsel %vm1811, %v3862, %v3600
      %v3895 = vsel %vm1811, %v3863, %v3602
      %v3896 = vsel %vm1811, %v3864, %v3604
      %v3897 = vsel %vm1811, %v3865, %v3606
      %v3898 = vld [vmem:[%s3] sm:$0xff]
      %v3899 = vld [vmem:[%s3 + $0x8] sm:$0xff]
      %v3900 = vld [vmem:[%s3 + $0x10] sm:$0x3]
      %v3901 = vld [vmem:[%s4] sm:$0x1]
      %v3903 = vperm.slane %v3901, 0
      %vm3905 = vcmask 146432
      %v3907 = vsel %vm3905, %v3866, 0
      %v3910 = vsel %vm3905, %v3867, 0
      %v3913 = vsel %vm3905, %v3868, 0
      %v3916 = vsel %vm3905, %v3869, 0
      %v3919 = vsel %vm3905, %v3870, 0
      %v3922 = vsel %vm3905, %v3871, 0
      %v3925 = vsel %vm3905, %v3872, 0
      %v3928 = vsel %vm3905, %v3873, 0
      %v3931 = vsel %vm3905, %v3874, 0
      %v3934 = vsel %vm3905, %v3875, 0
      %v3937 = vsel %vm3905, %v3876, 0
      %v3940 = vsel %vm3905, %v3877, 0
      %v3943 = vsel %vm3905, %v3878, 0
      %v3946 = vsel %vm3905, %v3879, 0
      %v3949 = vsel %vm3905, %v3880, 0
      %v3952 = vsel %vm3905, %v3881, 0
      %v3955 = vsel %vm3905, %v3882, 0
      %v3958 = vsel %vm3905, %v3883, 0
      %v3961 = vsel %vm3905, %v3884, 0
      %v3964 = vsel %vm3905, %v3885, 0
      %v3967 = vsel %vm3905, %v3886, 0
      %v3970 = vsel %vm3905, %v3887, 0
      %v3973 = vsel %vm3905, %v3888, 0
      %v3976 = vsel %vm3905, %v3889, 0
      %v3979 = vsel %vm3905, %v3890, 0
      %v3982 = vsel %vm3905, %v3891, 0
      %v3985 = vsel %vm3905, %v3892, 0
      %v3988 = vsel %vm3905, %v3893, 0
      %v3991 = vsel %vm3905, %v3894, 0
      %v3994 = vsel %vm3905, %v3895, 0
      %v3997 = vsel %vm3905, %v3896, 0
      %v4000 = vsel %vm3905, %v3897, 0
      %vm4002 = vcmask 1041408
      %v4004 = vsel %vm4002, %v3900, 0
      %4006 = vmatpush.msra.mxu0 0.0
      %4007 = vmatpush.msra.mxu0 0.0
      %4008 = vmatpush.msra.mxu0 0.0
      %4009 = vmatpush.msra.mxu0 0.0
      %4010 = vmatpush.msra.mxu0 0.0
      %4011 = vmatpush.msra.mxu0 0.0
      %4012 = vmatpush.msra.mxu0 0.0
      %4013 = vmatpush.msra.mxu0 0.0
      %4014 = vmatpush.msra.mxu0 0.0
      %4015 = vmatpush.msra.mxu0 0.0
      %4016 = vmatpush.msra.mxu0 0.0
      %4017 = vmatpush.msra.mxu0 0.0
      %4018 = vmatpush.msra.mxu0 0.0
      %4019 = vmatpush.msra.mxu0 %v4004
      %4020 = vmatpush.msra.mxu0 %v3899
      %4021 = vmatpush.msra.mxu0 %v3898
      %4022 = vmatmul.f32.gmra.mxu0 %v3907
      %v4023 = vpop.f32.mrf.mxu0
      %v4024 = vadd.f32 %v3903, %v4023
      %4025 = vmatmul.f32.gmra.mxu0 %v3910
      %v4026 = vpop.f32.mrf.mxu0
      %v4027 = vadd.f32 %v3903, %v4026
      %4028 = vmatmul.f32.gmra.mxu0 %v3913
      %v4029 = vpop.f32.mrf.mxu0
      %v4030 = vadd.f32 %v3903, %v4029
      %4031 = vmatmul.f32.gmra.mxu0 %v3916
      %v4032 = vpop.f32.mrf.mxu0
      %v4033 = vadd.f32 %v3903, %v4032
      %4034 = vmatmul.f32.gmra.mxu0 %v3919
      %v4035 = vpop.f32.mrf.mxu0
      %v4036 = vadd.f32 %v3903, %v4035
      %4037 = vmatmul.f32.gmra.mxu0 %v3922
      %v4038 = vpop.f32.mrf.mxu0
      %v4039 = vadd.f32 %v3903, %v4038
      %4040 = vmatmul.f32.gmra.mxu0 %v3925
      %v4041 = vpop.f32.mrf.mxu0
      %v4042 = vadd.f32 %v3903, %v4041
      %4043 = vmatmul.f32.gmra.mxu0 %v3928
      %v4044 = vpop.f32.mrf.mxu0
      %v4045 = vadd.f32 %v3903, %v4044
      %4046 = vmatmul.f32.gmra.mxu0 %v3931
      %v4047 = vpop.f32.mrf.mxu0
      %v4048 = vadd.f32 %v3903, %v4047
      %4049 = vmatmul.f32.gmra.mxu0 %v3934
      %v4050 = vpop.f32.mrf.mxu0
      %v4051 = vadd.f32 %v3903, %v4050
      %4052 = vmatmul.f32.gmra.mxu0 %v3937
      %v4053 = vpop.f32.mrf.mxu0
      %v4054 = vadd.f32 %v3903, %v4053
      %4055 = vmatmul.f32.gmra.mxu0 %v3940
      %v4056 = vpop.f32.mrf.mxu0
      %v4057 = vadd.f32 %v3903, %v4056
      %4058 = vmatmul.f32.gmra.mxu0 %v3943
      %v4059 = vpop.f32.mrf.mxu0
      %v4060 = vadd.f32 %v3903, %v4059
      %4061 = vmatmul.f32.gmra.mxu0 %v3946
      %v4062 = vpop.f32.mrf.mxu0
      %v4063 = vadd.f32 %v3903, %v4062
      %4064 = vmatmul.f32.gmra.mxu0 %v3949
      %v4065 = vpop.f32.mrf.mxu0
      %v4066 = vadd.f32 %v3903, %v4065
      %4067 = vmatmul.f32.gmra.mxu0 %v3952
      %v4068 = vpop.f32.mrf.mxu0
      %v4069 = vadd.f32 %v3903, %v4068
      %4070 = vmatmul.f32.gmra.mxu0 %v3955
      %v4071 = vpop.f32.mrf.mxu0
      %v4072 = vadd.f32 %v3903, %v4071
      %4073 = vmatmul.f32.gmra.mxu0 %v3958
      %v4074 = vpop.f32.mrf.mxu0
      %v4075 = vadd.f32 %v3903, %v4074
      %4076 = vmatmul.f32.gmra.mxu0 %v3961
      %v4077 = vpop.f32.mrf.mxu0
      %v4078 = vadd.f32 %v3903, %v4077
      %4079 = vmatmul.f32.gmra.mxu0 %v3964
      %v4080 = vpop.f32.mrf.mxu0
      %v4081 = vadd.f32 %v3903, %v4080
      %4082 = vmatmul.f32.gmra.mxu0 %v3967
      %v4083 = vpop.f32.mrf.mxu0
      %v4084 = vadd.f32 %v3903, %v4083
      %4085 = vmatmul.f32.gmra.mxu0 %v3970
      %v4086 = vpop.f32.mrf.mxu0
      %v4087 = vadd.f32 %v3903, %v4086
      %4088 = vmatmul.f32.gmra.mxu0 %v3973
      %v4089 = vpop.f32.mrf.mxu0
      %v4090 = vadd.f32 %v3903, %v4089
      %4091 = vmatmul.f32.gmra.mxu0 %v3976
      %v4092 = vpop.f32.mrf.mxu0
      %v4093 = vadd.f32 %v3903, %v4092
      %4094 = vmatmul.f32.gmra.mxu0 %v3979
      %v4095 = vpop.f32.mrf.mxu0
      %v4096 = vadd.f32 %v3903, %v4095
      %4097 = vmatmul.f32.gmra.mxu0 %v3982
      %v4098 = vpop.f32.mrf.mxu0
      %v4099 = vadd.f32 %v3903, %v4098
      %4100 = vmatmul.f32.gmra.mxu0 %v3985
      %v4101 = vpop.f32.mrf.mxu0
      %v4102 = vadd.f32 %v3903, %v4101
      %4103 = vmatmul.f32.gmra.mxu0 %v3988
      %v4104 = vpop.f32.mrf.mxu0
      %v4105 = vadd.f32 %v3903, %v4104
      %4106 = vmatmul.f32.gmra.mxu0 %v3991
      %v4107 = vpop.f32.mrf.mxu0
      %v4108 = vadd.f32 %v3903, %v4107
      %4109 = vmatmul.f32.gmra.mxu0 %v3994
      %v4110 = vpop.f32.mrf.mxu0
      %v4111 = vadd.f32 %v3903, %v4110
      %4112 = vmatmul.f32.gmra.mxu0 %v3997
      %v4113 = vpop.f32.mrf.mxu0
      %v4114 = vadd.f32 %v3903, %v4113
      %4115 = vmatmul.f32.gmra.mxu0 %v4000
      %v4116 = vpop.f32.mrf.mxu0
      %v4117 = vadd.f32 %v3903, %v4116
      %4118 = vdwg.mxu0
      %v4119 = vmax.f32 %v4024, 0.0
      %v4120 = vmax.f32 %v4027, 0.0
      %v4121 = vmax.f32 %v4030, 0.0
      %v4122 = vmax.f32 %v4033, 0.0
      %v4123 = vmax.f32 %v4036, 0.0
      %v4124 = vmax.f32 %v4039, 0.0
      %v4125 = vmax.f32 %v4042, 0.0
      %v4126 = vmax.f32 %v4045, 0.0
      %v4127 = vmax.f32 %v4048, 0.0
      %v4128 = vmax.f32 %v4051, 0.0
      %v4129 = vmax.f32 %v4054, 0.0
      %v4130 = vmax.f32 %v4057, 0.0
      %v4131 = vmax.f32 %v4060, 0.0
      %v4132 = vmax.f32 %v4063, 0.0
      %v4133 = vmax.f32 %v4066, 0.0
      %v4134 = vmax.f32 %v4069, 0.0
      %v4135 = vmax.f32 %v4072, 0.0
      %v4136 = vmax.f32 %v4075, 0.0
      %v4137 = vmax.f32 %v4078, 0.0
      %v4138 = vmax.f32 %v4081, 0.0
      %v4139 = vmax.f32 %v4084, 0.0
      %v4140 = vmax.f32 %v4087, 0.0
      %v4141 = vmax.f32 %v4090, 0.0
      %v4142 = vmax.f32 %v4093, 0.0
      %v4143 = vmax.f32 %v4096, 0.0
      %v4144 = vmax.f32 %v4099, 0.0
      %v4145 = vmax.f32 %v4102, 0.0
      %v4146 = vmax.f32 %v4105, 0.0
      %v4147 = vmax.f32 %v4108, 0.0
      %v4148 = vmax.f32 %v4111, 0.0
      %v4149 = vmax.f32 %v4114, 0.0
      %v4150 = vmax.f32 %v4117, 0.0
      %4151 = vst.msk [vmem:[#allocation4] sm:$0xff] %vm2231, 0.0
      %4152 = vst.msk [vmem:[#allocation4 + $0x8] sm:$0xff] %vm2231, 0.0
      %vm4153 = vcmask 13312
      %4154 = vst.msk [vmem:[#allocation4 + $0x10] sm:$0x3f] %vm4153, 0.0
      %4155 = vst.msk [vmem:[#allocation4 + $0x18] sm:$0xff] %vm2231, 0.0
      %4156 = vst.msk [vmem:[#allocation4 + $0x20] sm:$0xff] %vm2231, 0.0
      %4157 = vst.msk [vmem:[#allocation4 + $0x28] sm:$0x3f] %vm4153, 0.0
      %4158 = vst.msk [vmem:[#allocation4 + $0x30] sm:$0xff] %vm2231, 0.0
      %4159 = vst.msk [vmem:[#allocation4 + $0x38] sm:$0xff] %vm2231, 0.0
      %4160 = vst.msk [vmem:[#allocation4 + $0x40] sm:$0x3f] %vm4153, 0.0
      %4161 = vst.msk [vmem:[#allocation4 + $0x48] sm:$0xff] %vm2231, 0.0
      %4162 = vst.msk [vmem:[#allocation4 + $0x50] sm:$0xff] %vm2231, 0.0
      %4163 = vst.msk [vmem:[#allocation4 + $0x58] sm:$0x3f] %vm4153, 0.0
      %4164 = vst.msk [vmem:[#allocation4 + $0x60] sm:$0xff] %vm2231, 0.0
      %4165 = vst.msk [vmem:[#allocation4 + $0x68] sm:$0xff] %vm2231, 0.0
      %4166 = vst.msk [vmem:[#allocation4 + $0x70] sm:$0x3f] %vm4153, 0.0
      %4167 = vst.msk [vmem:[#allocation4 + $0x78] sm:$0xff] %vm2231, 0.0
      %4168 = vst.msk [vmem:[#allocation4 + $0x80] sm:$0xff] %vm2231, 0.0
      %4169 = vst.msk [vmem:[#allocation4 + $0x88] sm:$0x3f] %vm4153, 0.0
      %4170 = vst.msk [vmem:[#allocation4 + $0x90] sm:$0xff] %vm2231, 0.0
      %4171 = vst.msk [vmem:[#allocation4 + $0x98] sm:$0xff] %vm2231, 0.0
      %4172 = vst.msk [vmem:[#allocation4 + $0xa0] sm:$0x3f] %vm4153, 0.0
      %4173 = vst.msk [vmem:[#allocation4 + $0xa8] sm:$0xff] %vm2231, 0.0
      %4174 = vst.msk [vmem:[#allocation4 + $0xb0] sm:$0xff] %vm2231, 0.0
      %4175 = vst.msk [vmem:[#allocation4 + $0xb8] sm:$0x3f] %vm4153, 0.0
      %4176 = vst.msk [vmem:[#allocation4 + $0xc0] sm:$0xff] %vm2231, 0.0
      %4177 = vst.msk [vmem:[#allocation4 + $0xc8] sm:$0xff] %vm2231, 0.0
      %4178 = vst.msk [vmem:[#allocation4 + $0xd0] sm:$0x3f] %vm4153, 0.0
      %4179 = vst.msk [vmem:[#allocation4 + $0xd8] sm:$0xff] %vm2231, 0.0
      %4180 = vst.msk [vmem:[#allocation4 + $0xe0] sm:$0xff] %vm2231, 0.0
      %4181 = vst.msk [vmem:[#allocation4 + $0xe8] sm:$0x3f] %vm4153, 0.0
      %4182 = vst.msk [vmem:[#allocation4 + $0xf0] sm:$0xff] %vm2231, 0.0
      %4183 = vst.msk [vmem:[#allocation4 + $0xf8] sm:$0xff] %vm2231, 0.0
      %4184 = vst.msk [vmem:[#allocation4 + $0x100] sm:$0x3f] %vm4153, 0.0
      %4185 = vst.msk [vmem:[#allocation4 + $0x108] sm:$0xff] %vm2231, 0.0
      %4186 = vst.msk [vmem:[#allocation4 + $0x110] sm:$0xff] %vm2231, 0.0
      %4187 = vst.msk [vmem:[#allocation4 + $0x118] sm:$0x3f] %vm4153, 0.0
      %4188 = vst.msk [vmem:[#allocation4 + $0x120] sm:$0xff] %vm2231, 0.0
      %4189 = vst.msk [vmem:[#allocation4 + $0x128] sm:$0xff] %vm2231, 0.0
      %4190 = vst.msk [vmem:[#allocation4 + $0x130] sm:$0x3f] %vm4153, 0.0
      %4191 = vst.msk [vmem:[#allocation4 + $0x138] sm:$0xff] %vm2231, 0.0
      %4192 = vst.msk [vmem:[#allocation4 + $0x140] sm:$0xff] %vm2231, 0.0
      %4193 = vst.msk [vmem:[#allocation4 + $0x148] sm:$0x3f] %vm4153, 0.0
      %4194 = vst.msk [vmem:[#allocation4 + $0x150] sm:$0xff] %vm2231, 0.0
      %4195 = vst.msk [vmem:[#allocation4 + $0x158] sm:$0xff] %vm2231, 0.0
      %4196 = vst.msk [vmem:[#allocation4 + $0x160] sm:$0x3f] %vm4153, 0.0
      %4197 = vst.msk [vmem:[#allocation4 + $0x168] sm:$0xff] %vm2231, 0.0
      %4198 = vst.msk [vmem:[#allocation4 + $0x170] sm:$0xff] %vm2231, 0.0
      %4199 = vst.msk [vmem:[#allocation4 + $0x178] sm:$0x3f] %vm4153, 0.0
      %4200 = vst.msk [vmem:[#allocation4 + $0x180] sm:$0xff] %vm2231, 0.0
      %4201 = vst.msk [vmem:[#allocation4 + $0x188] sm:$0xff] %vm2231, 0.0
      %4202 = vst.msk [vmem:[#allocation4 + $0x190] sm:$0x3f] %vm4153, 0.0
      %4203 = vst.msk [vmem:[#allocation4 + $0x198] sm:$0xff] %vm2231, 0.0
      %4204 = vst.msk [vmem:[#allocation4 + $0x1a0] sm:$0xff] %vm2231, 0.0
      %4205 = vst.msk [vmem:[#allocation4 + $0x1a8] sm:$0x3f] %vm4153, 0.0
      %4206 = vst.msk [vmem:[#allocation4 + $0x1b0] sm:$0xff] %vm2231, 0.0
      %4207 = vst.msk [vmem:[#allocation4 + $0x1b8] sm:$0xff] %vm2231, 0.0
      %4208 = vst.msk [vmem:[#allocation4 + $0x1c0] sm:$0x3f] %vm4153, 0.0
      %4209 = vst.msk [vmem:[#allocation4 + $0x1c8] sm:$0xff] %vm2231, 0.0
      %4210 = vst.msk [vmem:[#allocation4 + $0x1d0] sm:$0xff] %vm2231, 0.0
      %4211 = vst.msk [vmem:[#allocation4 + $0x1d8] sm:$0x3f] %vm4153, 0.0
      %4212 = vst.msk [vmem:[#allocation4 + $0x1e0] sm:$0xff] %vm2231, 0.0
      %4213 = vst.msk [vmem:[#allocation4 + $0x1e8] sm:$0xff] %vm2231, 0.0
      %4214 = vst.msk [vmem:[#allocation4 + $0x1f0] sm:$0x3f] %vm4153, 0.0
      %4215 = vst.msk [vmem:[#allocation4 + $0x1f8] sm:$0xff] %vm2231, 0.0
      %4216 = vst.msk [vmem:[#allocation4 + $0x200] sm:$0xff] %vm2231, 0.0
      %4217 = vst.msk [vmem:[#allocation4 + $0x208] sm:$0x3f] %vm4153, 0.0
      %s4218 = scalar_lea.vmem [#allocation4], 72
      %4219 = vst.msk [vmem:[%s4218 + $0x3] sm:$0xff] %vm2231, %v4119
      %4220 = vst.msk [vmem:[%s4218 + $0xb] sm:$0xff] %vm2231, %v4120
      %4221 = vst.msk [vmem:[%s4218 + $0x1b] sm:$0xff] %vm2231, %v4121
      %4222 = vst.msk [vmem:[%s4218 + $0x23] sm:$0xff] %vm2231, %v4122
      %4223 = vst.msk [vmem:[%s4218 + $0x33] sm:$0xff] %vm2231, %v4123
      %4224 = vst.msk [vmem:[%s4218 + $0x3b] sm:$0xff] %vm2231, %v4124
      %4225 = vst.msk [vmem:[%s4218 + $0x4b] sm:$0xff] %vm2231, %v4125
      %4226 = vst.msk [vmem:[%s4218 + $0x53] sm:$0xff] %vm2231, %v4126
      %4227 = vst.msk [vmem:[%s4218 + $0x63] sm:$0xff] %vm2231, %v4127
      %4228 = vst.msk [vmem:[%s4218 + $0x6b] sm:$0xff] %vm2231, %v4128
      %4229 = vst.msk [vmem:[%s4218 + $0x7b] sm:$0xff] %vm2231, %v4129
      %4230 = vst.msk [vmem:[%s4218 + $0x83] sm:$0xff] %vm2231, %v4130
      %4231 = vst.msk [vmem:[%s4218 + $0x93] sm:$0xff] %vm2231, %v4131
      %4232 = vst.msk [vmem:[%s4218 + $0x9b] sm:$0xff] %vm2231, %v4132
      %4233 = vst.msk [vmem:[%s4218 + $0xab] sm:$0xff] %vm2231, %v4133
      %4234 = vst.msk [vmem:[%s4218 + $0xb3] sm:$0xff] %vm2231, %v4134
      %4235 = vst.msk [vmem:[%s4218 + $0xc3] sm:$0xff] %vm2231, %v4135
      %4236 = vst.msk [vmem:[%s4218 + $0xcb] sm:$0xff] %vm2231, %v4136
      %4237 = vst.msk [vmem:[%s4218 + $0xdb] sm:$0xff] %vm2231, %v4137
      %4238 = vst.msk [vmem:[%s4218 + $0xe3] sm:$0xff] %vm2231, %v4138
      %4239 = vst.msk [vmem:[%s4218 + $0xf3] sm:$0xff] %vm2231, %v4139
      %4240 = vst.msk [vmem:[%s4218 + $0xfb] sm:$0xff] %vm2231, %v4140
      %4241 = vst.msk [vmem:[%s4218 + $0x10b] sm:$0xff] %vm2231, %v4141
      %4242 = vst.msk [vmem:[%s4218 + $0x113] sm:$0xff] %vm2231, %v4142
      %4243 = vst.msk [vmem:[%s4218 + $0x123] sm:$0xff] %vm2231, %v4143
      %4244 = vst.msk [vmem:[%s4218 + $0x12b] sm:$0xff] %vm2231, %v4144
      %4245 = vst.msk [vmem:[%s4218 + $0x13b] sm:$0xff] %vm2231, %v4145
      %4246 = vst.msk [vmem:[%s4218 + $0x143] sm:$0xff] %vm2231, %v4146
      %4247 = vst.msk [vmem:[%s4218 + $0x153] sm:$0xff] %vm2231, %v4147
      %4248 = vst.msk [vmem:[%s4218 + $0x15b] sm:$0xff] %vm2231, %v4148
      %4249 = vst.msk [vmem:[%s4218 + $0x16b] sm:$0xff] %vm2231, %v4149
      %4250 = vst.msk [vmem:[%s4218 + $0x173] sm:$0xff] %vm2231, %v4150
      %v4251 = vld [vmem:[#allocation4] sm:$0xff]
      %v4252 = vld [vmem:[#allocation4 + $0x8] sm:$0xff]
      %v4253 = vld [vmem:[#allocation4 + $0x18] sm:$0xff]
      %v4254 = vld [vmem:[#allocation4 + $0x20] sm:$0xff]
      %v4255 = vld [vmem:[#allocation4 + $0x30] sm:$0xff]
      %v4256 = vld [vmem:[#allocation4 + $0x38] sm:$0xff]
      %v4257 = vld [vmem:[#allocation4 + $0x48] sm:$0xff]
      %v4258 = vld [vmem:[#allocation4 + $0x50] sm:$0xff]
      %v4259 = vld [vmem:[#allocation4 + $0x60] sm:$0xff]
      %v4260 = vld [vmem:[#allocation4 + $0x68] sm:$0xff]
      %v4261 = vld [vmem:[#allocation4 + $0x78] sm:$0xff]
      %v4262 = vld [vmem:[#allocation4 + $0x80] sm:$0xff]
      %v4263 = vld [vmem:[#allocation4 + $0x90] sm:$0xff]
      %v4264 = vld [vmem:[#allocation4 + $0x98] sm:$0xff]
      %v4265 = vld [vmem:[#allocation4 + $0xa8] sm:$0xff]
      %v4266 = vld [vmem:[#allocation4 + $0xb0] sm:$0xff]
      %v4267 = vld [vmem:[#allocation4 + $0xc0] sm:$0xff]
      %v4268 = vld [vmem:[#allocation4 + $0xc8] sm:$0xff]
      %v4269 = vld [vmem:[#allocation4 + $0xd8] sm:$0xff]
      %v4270 = vld [vmem:[#allocation4 + $0xe0] sm:$0xff]
      %v4271 = vld [vmem:[#allocation4 + $0xf0] sm:$0xff]
      %v4272 = vld [vmem:[#allocation4 + $0xf8] sm:$0xff]
      %v4273 = vld [vmem:[#allocation4 + $0x108] sm:$0xff]
      %v4274 = vld [vmem:[#allocation4 + $0x110] sm:$0xff]
      %v4275 = vld [vmem:[#allocation4 + $0x120] sm:$0xff]
      %v4276 = vld [vmem:[#allocation4 + $0x128] sm:$0xff]
      %v4277 = vld [vmem:[#allocation4 + $0x138] sm:$0xff]
      %v4278 = vld [vmem:[#allocation4 + $0x140] sm:$0xff]
      %v4279 = vld [vmem:[#allocation4 + $0x150] sm:$0xff]
      %v4280 = vld [vmem:[#allocation4 + $0x158] sm:$0xff]
      %v4281 = vld [vmem:[#allocation4 + $0x168] sm:$0xff]
      %v4282 = vld [vmem:[#allocation4 + $0x170] sm:$0xff]
      %v4283 = vld [vmem:[#allocation4 + $0x3] sm:$0xff]
      %v4284 = vld [vmem:[#allocation4 + $0xb] sm:$0xff]
      %v4285 = vld [vmem:[#allocation4 + $0x1b] sm:$0xff]
      %v4286 = vld [vmem:[#allocation4 + $0x23] sm:$0xff]
      %v4287 = vld [vmem:[#allocation4 + $0x33] sm:$0xff]
      %v4288 = vld [vmem:[#allocation4 + $0x3b] sm:$0xff]
      %v4289 = vld [vmem:[#allocation4 + $0x4b] sm:$0xff]
      %v4290 = vld [vmem:[#allocation4 + $0x53] sm:$0xff]
      %v4291 = vld [vmem:[#allocation4 + $0x63] sm:$0xff]
      %v4292 = vld [vmem:[#allocation4 + $0x6b] sm:$0xff]
      %v4293 = vld [vmem:[#allocation4 + $0x7b] sm:$0xff]
      %v4294 = vld [vmem:[#allocation4 + $0x83] sm:$0xff]
      %v4295 = vld [vmem:[#allocation4 + $0x93] sm:$0xff]
      %v4296 = vld [vmem:[#allocation4 + $0x9b] sm:$0xff]
      %v4297 = vld [vmem:[#allocation4 + $0xab] sm:$0xff]
      %v4298 = vld [vmem:[#allocation4 + $0xb3] sm:$0xff]
      %v4299 = vld [vmem:[#allocation4 + $0xc3] sm:$0xff]
      %v4300 = vld [vmem:[#allocation4 + $0xcb] sm:$0xff]
      %v4301 = vld [vmem:[#allocation4 + $0xdb] sm:$0xff]
      %v4302 = vld [vmem:[#allocation4 + $0xe3] sm:$0xff]
      %v4303 = vld [vmem:[#allocation4 + $0xf3] sm:$0xff]
      %v4304 = vld [vmem:[#allocation4 + $0xfb] sm:$0xff]
      %v4305 = vld [vmem:[#allocation4 + $0x10b] sm:$0xff]
      %v4306 = vld [vmem:[#allocation4 + $0x113] sm:$0xff]
      %v4307 = vld [vmem:[#allocation4 + $0x123] sm:$0xff]
      %v4308 = vld [vmem:[#allocation4 + $0x12b] sm:$0xff]
      %v4309 = vld [vmem:[#allocation4 + $0x13b] sm:$0xff]
      %v4310 = vld [vmem:[#allocation4 + $0x143] sm:$0xff]
      %v4311 = vld [vmem:[#allocation4 + $0x153] sm:$0xff]
      %v4312 = vld [vmem:[#allocation4 + $0x15b] sm:$0xff]
      %v4313 = vld [vmem:[#allocation4 + $0x16b] sm:$0xff]
      %v4314 = vld [vmem:[#allocation4 + $0x173] sm:$0xff]
      %v4315 = vld [vmem:[#allocation4 + $0x6] sm:$0xff]
      %v4316 = vld [vmem:[#allocation4 + $0xe] sm:$0xff]
      %v4317 = vld [vmem:[#allocation4 + $0x1e] sm:$0xff]
      %v4318 = vld [vmem:[#allocation4 + $0x26] sm:$0xff]
      %v4319 = vld [vmem:[#allocation4 + $0x36] sm:$0xff]
      %v4320 = vld [vmem:[#allocation4 + $0x3e] sm:$0xff]
      %v4321 = vld [vmem:[#allocation4 + $0x4e] sm:$0xff]
      %v4322 = vld [vmem:[#allocation4 + $0x56] sm:$0xff]
      %v4323 = vld [vmem:[#allocation4 + $0x66] sm:$0xff]
      %v4324 = vld [vmem:[#allocation4 + $0x6e] sm:$0xff]
      %v4325 = vld [vmem:[#allocation4 + $0x7e] sm:$0xff]
      %v4326 = vld [vmem:[#allocation4 + $0x86] sm:$0xff]
      %v4327 = vld [vmem:[#allocation4 + $0x96] sm:$0xff]
      %v4328 = vld [vmem:[#allocation4 + $0x9e] sm:$0xff]
      %v4329 = vld [vmem:[#allocation4 + $0xae] sm:$0xff]
      %v4330 = vld [vmem:[#allocation4 + $0xb6] sm:$0xff]
      %v4331 = vld [vmem:[#allocation4 + $0xc6] sm:$0xff]
      %v4332 = vld [vmem:[#allocation4 + $0xce] sm:$0xff]
      %v4333 = vld [vmem:[#allocation4 + $0xde] sm:$0xff]
      %v4334 = vld [vmem:[#allocation4 + $0xe6] sm:$0xff]
      %v4335 = vld [vmem:[#allocation4 + $0xf6] sm:$0xff]
      %v4336 = vld [vmem:[#allocation4 + $0xfe] sm:$0xff]
      %v4337 = vld [vmem:[#allocation4 + $0x10e] sm:$0xff]
      %v4338 = vld [vmem:[#allocation4 + $0x116] sm:$0xff]
      %v4339 = vld [vmem:[#allocation4 + $0x126] sm:$0xff]
      %v4340 = vld [vmem:[#allocation4 + $0x12e] sm:$0xff]
      %v4341 = vld [vmem:[#allocation4 + $0x13e] sm:$0xff]
      %v4342 = vld [vmem:[#allocation4 + $0x146] sm:$0xff]
      %v4343 = vld [vmem:[#allocation4 + $0x156] sm:$0xff]
      %v4344 = vld [vmem:[#allocation4 + $0x15e] sm:$0xff]
      %v4345 = vld [vmem:[#allocation4 + $0x16e] sm:$0xff]
      %v4346 = vld [vmem:[#allocation4 + $0x176] sm:$0xff]
      %v4347 = vld [vmem:[%s4218] sm:$0xff]
      %v4348 = vld [vmem:[%s4218 + $0x8] sm:$0xff]
      %v4349 = vld [vmem:[%s4218 + $0x18] sm:$0xff]
      %v4350 = vld [vmem:[%s4218 + $0x20] sm:$0xff]
      %v4351 = vld [vmem:[%s4218 + $0x30] sm:$0xff]
      %v4352 = vld [vmem:[%s4218 + $0x38] sm:$0xff]
      %v4353 = vld [vmem:[%s4218 + $0x48] sm:$0xff]
      %v4354 = vld [vmem:[%s4218 + $0x50] sm:$0xff]
      %v4355 = vld [vmem:[%s4218 + $0x60] sm:$0xff]
      %v4356 = vld [vmem:[%s4218 + $0x68] sm:$0xff]
      %v4357 = vld [vmem:[%s4218 + $0x78] sm:$0xff]
      %v4358 = vld [vmem:[%s4218 + $0x80] sm:$0xff]
      %v4359 = vld [vmem:[%s4218 + $0x90] sm:$0xff]
      %v4360 = vld [vmem:[%s4218 + $0x98] sm:$0xff]
      %v4361 = vld [vmem:[%s4218 + $0xa8] sm:$0xff]
      %v4362 = vld [vmem:[%s4218 + $0xb0] sm:$0xff]
      %v4363 = vld [vmem:[%s4218 + $0xc0] sm:$0xff]
      %v4364 = vld [vmem:[%s4218 + $0xc8] sm:$0xff]
      %v4365 = vld [vmem:[%s4218 + $0xd8] sm:$0xff]
      %v4366 = vld [vmem:[%s4218 + $0xe0] sm:$0xff]
      %v4367 = vld [vmem:[%s4218 + $0xf0] sm:$0xff]
      %v4368 = vld [vmem:[%s4218 + $0xf8] sm:$0xff]
      %v4369 = vld [vmem:[%s4218 + $0x108] sm:$0xff]
      %v4370 = vld [vmem:[%s4218 + $0x110] sm:$0xff]
      %v4371 = vld [vmem:[%s4218 + $0x120] sm:$0xff]
      %v4372 = vld [vmem:[%s4218 + $0x128] sm:$0xff]
      %v4373 = vld [vmem:[%s4218 + $0x138] sm:$0xff]
      %v4374 = vld [vmem:[%s4218 + $0x140] sm:$0xff]
      %v4375 = vld [vmem:[%s4218 + $0x150] sm:$0xff]
      %v4376 = vld [vmem:[%s4218 + $0x158] sm:$0xff]
      %v4377 = vld [vmem:[%s4218 + $0x168] sm:$0xff]
      %v4378 = vld [vmem:[%s4218 + $0x170] sm:$0xff]
      %v4379 = vld [vmem:[%s4218 + $0x3] sm:$0xff]
      %v4380 = vld [vmem:[%s4218 + $0xb] sm:$0xff]
      %v4381 = vld [vmem:[%s4218 + $0x1b] sm:$0xff]
      %v4382 = vld [vmem:[%s4218 + $0x23] sm:$0xff]
      %v4383 = vld [vmem:[%s4218 + $0x33] sm:$0xff]
      %v4384 = vld [vmem:[%s4218 + $0x3b] sm:$0xff]
      %v4385 = vld [vmem:[%s4218 + $0x4b] sm:$0xff]
      %v4386 = vld [vmem:[%s4218 + $0x53] sm:$0xff]
      %v4387 = vld [vmem:[%s4218 + $0x63] sm:$0xff]
      %v4388 = vld [vmem:[%s4218 + $0x6b] sm:$0xff]
      %v4389 = vld [vmem:[%s4218 + $0x7b] sm:$0xff]
      %v4390 = vld [vmem:[%s4218 + $0x83] sm:$0xff]
      %v4391 = vld [vmem:[%s4218 + $0x93] sm:$0xff]
      %v4392 = vld [vmem:[%s4218 + $0x9b] sm:$0xff]
      %v4393 = vld [vmem:[%s4218 + $0xab] sm:$0xff]
      %v4394 = vld [vmem:[%s4218 + $0xb3] sm:$0xff]
      %v4395 = vld [vmem:[%s4218 + $0xc3] sm:$0xff]
      %v4396 = vld [vmem:[%s4218 + $0xcb] sm:$0xff]
      %v4397 = vld [vmem:[%s4218 + $0xdb] sm:$0xff]
      %v4398 = vld [vmem:[%s4218 + $0xe3] sm:$0xff]
      %v4399 = vld [vmem:[%s4218 + $0xf3] sm:$0xff]
      %v4400 = vld [vmem:[%s4218 + $0xfb] sm:$0xff]
      %v4401 = vld [vmem:[%s4218 + $0x10b] sm:$0xff]
      %v4402 = vld [vmem:[%s4218 + $0x113] sm:$0xff]
      %v4403 = vld [vmem:[%s4218 + $0x123] sm:$0xff]
      %v4404 = vld [vmem:[%s4218 + $0x12b] sm:$0xff]
      %v4405 = vld [vmem:[%s4218 + $0x13b] sm:$0xff]
      %v4406 = vld [vmem:[%s4218 + $0x143] sm:$0xff]
      %v4407 = vld [vmem:[%s4218 + $0x153] sm:$0xff]
      %v4408 = vld [vmem:[%s4218 + $0x15b] sm:$0xff]
      %v4409 = vld [vmem:[%s4218 + $0x16b] sm:$0xff]
      %v4410 = vld [vmem:[%s4218 + $0x173] sm:$0xff]
      %v4411 = vld [vmem:[%s4218 + $0x6] sm:$0xff]
      %v4412 = vld [vmem:[%s4218 + $0xe] sm:$0xff]
      %v4413 = vld [vmem:[%s4218 + $0x1e] sm:$0xff]
      %v4414 = vld [vmem:[%s4218 + $0x26] sm:$0xff]
      %v4415 = vld [vmem:[%s4218 + $0x36] sm:$0xff]
      %v4416 = vld [vmem:[%s4218 + $0x3e] sm:$0xff]
      %v4417 = vld [vmem:[%s4218 + $0x4e] sm:$0xff]
      %v4418 = vld [vmem:[%s4218 + $0x56] sm:$0xff]
      %v4419 = vld [vmem:[%s4218 + $0x66] sm:$0xff]
      %v4420 = vld [vmem:[%s4218 + $0x6e] sm:$0xff]
      %v4421 = vld [vmem:[%s4218 + $0x7e] sm:$0xff]
      %v4422 = vld [vmem:[%s4218 + $0x86] sm:$0xff]
      %v4423 = vld [vmem:[%s4218 + $0x96] sm:$0xff]
      %v4424 = vld [vmem:[%s4218 + $0x9e] sm:$0xff]
      %v4425 = vld [vmem:[%s4218 + $0xae] sm:$0xff]
      %v4426 = vld [vmem:[%s4218 + $0xb6] sm:$0xff]
      %v4427 = vld [vmem:[%s4218 + $0xc6] sm:$0xff]
      %v4428 = vld [vmem:[%s4218 + $0xce] sm:$0xff]
      %v4429 = vld [vmem:[%s4218 + $0xde] sm:$0xff]
      %v4430 = vld [vmem:[%s4218 + $0xe6] sm:$0xff]
      %v4431 = vld [vmem:[%s4218 + $0xf6] sm:$0xff]
      %v4432 = vld [vmem:[%s4218 + $0xfe] sm:$0xff]
      %v4433 = vld [vmem:[%s4218 + $0x10e] sm:$0xff]
      %v4434 = vld [vmem:[%s4218 + $0x116] sm:$0xff]
      %v4435 = vld [vmem:[%s4218 + $0x126] sm:$0xff]
      %v4436 = vld [vmem:[%s4218 + $0x12e] sm:$0xff]
      %v4437 = vld [vmem:[%s4218 + $0x13e] sm:$0xff]
      %v4438 = vld [vmem:[%s4218 + $0x146] sm:$0xff]
      %v4439 = vld [vmem:[%s4218 + $0x156] sm:$0xff]
      %v4440 = vld [vmem:[%s4218 + $0x15e] sm:$0xff]
      %v4441 = vld [vmem:[%s4218 + $0x16e] sm:$0xff]
      %v4442 = vld [vmem:[%s4218 + $0x176] sm:$0xff]
      %s4443 = scalar_lea.vmem [#allocation4], 144
      %v4444 = vld [vmem:[%s4443] sm:$0xff]
      %v4445 = vld [vmem:[%s4443 + $0x8] sm:$0xff]
      %v4446 = vld [vmem:[%s4443 + $0x18] sm:$0xff]
      %v4447 = vld [vmem:[%s4443 + $0x20] sm:$0xff]
      %v4448 = vld [vmem:[%s4443 + $0x30] sm:$0xff]
      %v4449 = vld [vmem:[%s4443 + $0x38] sm:$0xff]
      %v4450 = vld [vmem:[%s4443 + $0x48] sm:$0xff]
      %v4451 = vld [vmem:[%s4443 + $0x50] sm:$0xff]
      %v4452 = vld [vmem:[%s4443 + $0x60] sm:$0xff]
      %v4453 = vld [vmem:[%s4443 + $0x68] sm:$0xff]
      %v4454 = vld [vmem:[%s4443 + $0x78] sm:$0xff]
      %v4455 = vld [vmem:[%s4443 + $0x80] sm:$0xff]
      %v4456 = vld [vmem:[%s4443 + $0x90] sm:$0xff]
      %v4457 = vld [vmem:[%s4443 + $0x98] sm:$0xff]
      %v4458 = vld [vmem:[%s4443 + $0xa8] sm:$0xff]
      %v4459 = vld [vmem:[%s4443 + $0xb0] sm:$0xff]
      %v4460 = vld [vmem:[%s4443 + $0xc0] sm:$0xff]
      %v4461 = vld [vmem:[%s4443 + $0xc8] sm:$0xff]
      %v4462 = vld [vmem:[%s4443 + $0xd8] sm:$0xff]
      %v4463 = vld [vmem:[%s4443 + $0xe0] sm:$0xff]
      %v4464 = vld [vmem:[%s4443 + $0xf0] sm:$0xff]
      %v4465 = vld [vmem:[%s4443 + $0xf8] sm:$0xff]
      %v4466 = vld [vmem:[%s4443 + $0x108] sm:$0xff]
      %v4467 = vld [vmem:[%s4443 + $0x110] sm:$0xff]
      %v4468 = vld [vmem:[%s4443 + $0x120] sm:$0xff]
      %v4469 = vld [vmem:[%s4443 + $0x128] sm:$0xff]
      %v4470 = vld [vmem:[%s4443 + $0x138] sm:$0xff]
      %v4471 = vld [vmem:[%s4443 + $0x140] sm:$0xff]
      %v4472 = vld [vmem:[%s4443 + $0x150] sm:$0xff]
      %v4473 = vld [vmem:[%s4443 + $0x158] sm:$0xff]
      %v4474 = vld [vmem:[%s4443 + $0x168] sm:$0xff]
      %v4475 = vld [vmem:[%s4443 + $0x170] sm:$0xff]
      %v4476 = vld [vmem:[%s4443 + $0x3] sm:$0xff]
      %v4477 = vld [vmem:[%s4443 + $0xb] sm:$0xff]
      %v4478 = vld [vmem:[%s4443 + $0x1b] sm:$0xff]
      %v4479 = vld [vmem:[%s4443 + $0x23] sm:$0xff]
      %v4480 = vld [vmem:[%s4443 + $0x33] sm:$0xff]
      %v4481 = vld [vmem:[%s4443 + $0x3b] sm:$0xff]
      %v4482 = vld [vmem:[%s4443 + $0x4b] sm:$0xff]
      %v4483 = vld [vmem:[%s4443 + $0x53] sm:$0xff]
      %v4484 = vld [vmem:[%s4443 + $0x63] sm:$0xff]
      %v4485 = vld [vmem:[%s4443 + $0x6b] sm:$0xff]
      %v4486 = vld [vmem:[%s4443 + $0x7b] sm:$0xff]
      %v4487 = vld [vmem:[%s4443 + $0x83] sm:$0xff]
      %v4488 = vld [vmem:[%s4443 + $0x93] sm:$0xff]
      %v4489 = vld [vmem:[%s4443 + $0x9b] sm:$0xff]
      %v4490 = vld [vmem:[%s4443 + $0xab] sm:$0xff]
      %v4491 = vld [vmem:[%s4443 + $0xb3] sm:$0xff]
      %v4492 = vld [vmem:[%s4443 + $0xc3] sm:$0xff]
      %v4493 = vld [vmem:[%s4443 + $0xcb] sm:$0xff]
      %v4494 = vld [vmem:[%s4443 + $0xdb] sm:$0xff]
      %v4495 = vld [vmem:[%s4443 + $0xe3] sm:$0xff]
      %v4496 = vld [vmem:[%s4443 + $0xf3] sm:$0xff]
      %v4497 = vld [vmem:[%s4443 + $0xfb] sm:$0xff]
      %v4498 = vld [vmem:[%s4443 + $0x10b] sm:$0xff]
      %v4499 = vld [vmem:[%s4443 + $0x113] sm:$0xff]
      %v4500 = vld [vmem:[%s4443 + $0x123] sm:$0xff]
      %v4501 = vld [vmem:[%s4443 + $0x12b] sm:$0xff]
      %v4502 = vld [vmem:[%s4443 + $0x13b] sm:$0xff]
      %v4503 = vld [vmem:[%s4443 + $0x143] sm:$0xff]
      %v4504 = vld [vmem:[%s4443 + $0x153] sm:$0xff]
      %v4505 = vld [vmem:[%s4443 + $0x15b] sm:$0xff]
      %v4506 = vld [vmem:[%s4443 + $0x16b] sm:$0xff]
      %v4507 = vld [vmem:[%s4443 + $0x173] sm:$0xff]
      %v4508 = vld [vmem:[%s4443 + $0x6] sm:$0xff]
      %v4509 = vld [vmem:[%s4443 + $0xe] sm:$0xff]
      %v4510 = vld [vmem:[%s4443 + $0x1e] sm:$0xff]
      %v4511 = vld [vmem:[%s4443 + $0x26] sm:$0xff]
      %v4512 = vld [vmem:[%s4443 + $0x36] sm:$0xff]
      %v4513 = vld [vmem:[%s4443 + $0x3e] sm:$0xff]
      %v4514 = vld [vmem:[%s4443 + $0x4e] sm:$0xff]
      %v4515 = vld [vmem:[%s4443 + $0x56] sm:$0xff]
      %v4516 = vld [vmem:[%s4443 + $0x66] sm:$0xff]
      %v4517 = vld [vmem:[%s4443 + $0x6e] sm:$0xff]
      %v4518 = vld [vmem:[%s4443 + $0x7e] sm:$0xff]
      %v4519 = vld [vmem:[%s4443 + $0x86] sm:$0xff]
      %v4520 = vld [vmem:[%s4443 + $0x96] sm:$0xff]
      %v4521 = vld [vmem:[%s4443 + $0x9e] sm:$0xff]
      %v4522 = vld [vmem:[%s4443 + $0xae] sm:$0xff]
      %v4523 = vld [vmem:[%s4443 + $0xb6] sm:$0xff]
      %v4524 = vld [vmem:[%s4443 + $0xc6] sm:$0xff]
      %v4525 = vld [vmem:[%s4443 + $0xce] sm:$0xff]
      %v4526 = vld [vmem:[%s4443 + $0xde] sm:$0xff]
      %v4527 = vld [vmem:[%s4443 + $0xe6] sm:$0xff]
      %v4528 = vld [vmem:[%s4443 + $0xf6] sm:$0xff]
      %v4529 = vld [vmem:[%s4443 + $0xfe] sm:$0xff]
      %v4530 = vld [vmem:[%s4443 + $0x10e] sm:$0xff]
      %v4531 = vld [vmem:[%s4443 + $0x116] sm:$0xff]
      %v4532 = vld [vmem:[%s4443 + $0x126] sm:$0xff]
      %v4533 = vld [vmem:[%s4443 + $0x12e] sm:$0xff]
      %v4534 = vld [vmem:[%s4443 + $0x13e] sm:$0xff]
      %v4535 = vld [vmem:[%s4443 + $0x146] sm:$0xff]
      %v4536 = vld [vmem:[%s4443 + $0x156] sm:$0xff]
      %v4537 = vld [vmem:[%s4443 + $0x15e] sm:$0xff]
      %v4538 = vld [vmem:[%s4443 + $0x16e] sm:$0xff]
      %v4539 = vld [vmem:[%s4443 + $0x176] sm:$0xff]
      %4572 = vrot.lane.b32.xlu0 %v4283, 2
      %v4573 = vpop.permute.xlu0 %4572
      %4574 = vrot.lane.b32.xlu0 %v4284, 2
      %v4575 = vpop.permute.xlu0 %4574
      %4576 = vrot.lane.b32.xlu0 %v4285, 2
      %v4577 = vpop.permute.xlu0 %4576
      %4578 = vrot.lane.b32.xlu0 %v4286, 2
      %v4579 = vpop.permute.xlu0 %4578
      %4580 = vrot.lane.b32.xlu0 %v4287, 2
      %v4581 = vpop.permute.xlu0 %4580
      %4582 = vrot.lane.b32.xlu0 %v4288, 2
      %v4583 = vpop.permute.xlu0 %4582
      %4584 = vrot.lane.b32.xlu0 %v4289, 2
      %v4585 = vpop.permute.xlu0 %4584
      %4586 = vrot.lane.b32.xlu0 %v4290, 2
      %v4587 = vpop.permute.xlu0 %4586
      %4588 = vrot.lane.b32.xlu0 %v4291, 2
      %v4589 = vpop.permute.xlu0 %4588
      %4590 = vrot.lane.b32.xlu0 %v4292, 2
      %v4591 = vpop.permute.xlu0 %4590
      %4592 = vrot.lane.b32.xlu0 %v4293, 2
      %v4593 = vpop.permute.xlu0 %4592
      %4594 = vrot.lane.b32.xlu0 %v4294, 2
      %v4595 = vpop.permute.xlu0 %4594
      %4596 = vrot.lane.b32.xlu0 %v4295, 2
      %v4597 = vpop.permute.xlu0 %4596
      %4598 = vrot.lane.b32.xlu0 %v4296, 2
      %v4599 = vpop.permute.xlu0 %4598
      %4600 = vrot.lane.b32.xlu0 %v4297, 2
      %v4601 = vpop.permute.xlu0 %4600
      %4602 = vrot.lane.b32.xlu0 %v4298, 2
      %v4603 = vpop.permute.xlu0 %4602
      %4604 = vrot.lane.b32.xlu0 %v4299, 2
      %v4605 = vpop.permute.xlu0 %4604
      %4606 = vrot.lane.b32.xlu0 %v4300, 2
      %v4607 = vpop.permute.xlu0 %4606
      %4608 = vrot.lane.b32.xlu0 %v4301, 2
      %v4609 = vpop.permute.xlu0 %4608
      %4610 = vrot.lane.b32.xlu0 %v4302, 2
      %v4611 = vpop.permute.xlu0 %4610
      %4612 = vrot.lane.b32.xlu0 %v4303, 2
      %v4613 = vpop.permute.xlu0 %4612
      %4614 = vrot.lane.b32.xlu0 %v4304, 2
      %v4615 = vpop.permute.xlu0 %4614
      %4616 = vrot.lane.b32.xlu0 %v4305, 2
      %v4617 = vpop.permute.xlu0 %4616
      %4618 = vrot.lane.b32.xlu0 %v4306, 2
      %v4619 = vpop.permute.xlu0 %4618
      %4620 = vrot.lane.b32.xlu0 %v4307, 2
      %v4621 = vpop.permute.xlu0 %4620
      %4622 = vrot.lane.b32.xlu0 %v4308, 2
      %v4623 = vpop.permute.xlu0 %4622
      %4624 = vrot.lane.b32.xlu0 %v4309, 2
      %v4625 = vpop.permute.xlu0 %4624
      %4626 = vrot.lane.b32.xlu0 %v4310, 2
      %v4627 = vpop.permute.xlu0 %4626
      %4628 = vrot.lane.b32.xlu0 %v4311, 2
      %v4629 = vpop.permute.xlu0 %4628
      %4630 = vrot.lane.b32.xlu0 %v4312, 2
      %v4631 = vpop.permute.xlu0 %4630
      %4632 = vrot.lane.b32.xlu0 %v4313, 2
      %v4633 = vpop.permute.xlu0 %4632
      %4634 = vrot.lane.b32.xlu0 %v4314, 2
      %v4635 = vpop.permute.xlu0 %4634
      %4700 = vrot.lane.b32.xlu0 %v4315, 4
      %v4701 = vpop.permute.xlu0 %4700
      %4702 = vrot.lane.b32.xlu0 %v4316, 4
      %v4703 = vpop.permute.xlu0 %4702
      %4704 = vrot.lane.b32.xlu0 %v4317, 4
      %v4705 = vpop.permute.xlu0 %4704
      %4706 = vrot.lane.b32.xlu0 %v4318, 4
      %v4707 = vpop.permute.xlu0 %4706
      %4708 = vrot.lane.b32.xlu0 %v4319, 4
      %v4709 = vpop.permute.xlu0 %4708
      %4710 = vrot.lane.b32.xlu0 %v4320, 4
      %v4711 = vpop.permute.xlu0 %4710
      %4712 = vrot.lane.b32.xlu0 %v4321, 4
      %v4713 = vpop.permute.xlu0 %4712
      %4714 = vrot.lane.b32.xlu0 %v4322, 4
      %v4715 = vpop.permute.xlu0 %4714
      %4716 = vrot.lane.b32.xlu0 %v4323, 4
      %v4717 = vpop.permute.xlu0 %4716
      %4718 = vrot.lane.b32.xlu0 %v4324, 4
      %v4719 = vpop.permute.xlu0 %4718
      %4720 = vrot.lane.b32.xlu0 %v4325, 4
      %v4721 = vpop.permute.xlu0 %4720
      %4722 = vrot.lane.b32.xlu0 %v4326, 4
      %v4723 = vpop.permute.xlu0 %4722
      %4724 = vrot.lane.b32.xlu0 %v4327, 4
      %v4725 = vpop.permute.xlu0 %4724
      %4726 = vrot.lane.b32.xlu0 %v4328, 4
      %v4727 = vpop.permute.xlu0 %4726
      %4728 = vrot.lane.b32.xlu0 %v4329, 4
      %v4729 = vpop.permute.xlu0 %4728
      %4730 = vrot.lane.b32.xlu0 %v4330, 4
      %v4731 = vpop.permute.xlu0 %4730
      %4732 = vrot.lane.b32.xlu0 %v4331, 4
      %v4733 = vpop.permute.xlu0 %4732
      %4734 = vrot.lane.b32.xlu0 %v4332, 4
      %v4735 = vpop.permute.xlu0 %4734
      %4736 = vrot.lane.b32.xlu0 %v4333, 4
      %v4737 = vpop.permute.xlu0 %4736
      %4738 = vrot.lane.b32.xlu0 %v4334, 4
      %v4739 = vpop.permute.xlu0 %4738
      %4740 = vrot.lane.b32.xlu0 %v4335, 4
      %v4741 = vpop.permute.xlu0 %4740
      %4742 = vrot.lane.b32.xlu0 %v4336, 4
      %v4743 = vpop.permute.xlu0 %4742
      %4744 = vrot.lane.b32.xlu0 %v4337, 4
      %v4745 = vpop.permute.xlu0 %4744
      %4746 = vrot.lane.b32.xlu0 %v4338, 4
      %v4747 = vpop.permute.xlu0 %4746
      %4748 = vrot.lane.b32.xlu0 %v4339, 4
      %v4749 = vpop.permute.xlu0 %4748
      %4750 = vrot.lane.b32.xlu0 %v4340, 4
      %v4751 = vpop.permute.xlu0 %4750
      %4752 = vrot.lane.b32.xlu0 %v4341, 4
      %v4753 = vpop.permute.xlu0 %4752
      %4754 = vrot.lane.b32.xlu0 %v4342, 4
      %v4755 = vpop.permute.xlu0 %4754
      %4756 = vrot.lane.b32.xlu0 %v4343, 4
      %v4757 = vpop.permute.xlu0 %4756
      %4758 = vrot.lane.b32.xlu0 %v4344, 4
      %v4759 = vpop.permute.xlu0 %4758
      %4760 = vrot.lane.b32.xlu0 %v4345, 4
      %v4761 = vpop.permute.xlu0 %4760
      %4762 = vrot.lane.b32.xlu0 %v4346, 4
      %v4763 = vpop.permute.xlu0 %4762
      %4828 = vrot.lane.b32.xlu0 %v4347, 6
      %v4829 = vpop.permute.xlu0 %4828
      %4830 = vrot.lane.b32.xlu0 %v4348, 6
      %v4831 = vpop.permute.xlu0 %4830
      %4832 = vrot.lane.b32.xlu0 %v4349, 6
      %v4833 = vpop.permute.xlu0 %4832
      %4834 = vrot.lane.b32.xlu0 %v4350, 6
      %v4835 = vpop.permute.xlu0 %4834
      %4836 = vrot.lane.b32.xlu0 %v4351, 6
      %v4837 = vpop.permute.xlu0 %4836
      %4838 = vrot.lane.b32.xlu0 %v4352, 6
      %v4839 = vpop.permute.xlu0 %4838
      %4840 = vrot.lane.b32.xlu0 %v4353, 6
      %v4841 = vpop.permute.xlu0 %4840
      %4842 = vrot.lane.b32.xlu0 %v4354, 6
      %v4843 = vpop.permute.xlu0 %4842
      %4844 = vrot.lane.b32.xlu0 %v4355, 6
      %v4845 = vpop.permute.xlu0 %4844
      %4846 = vrot.lane.b32.xlu0 %v4356, 6
      %v4847 = vpop.permute.xlu0 %4846
      %4848 = vrot.lane.b32.xlu0 %v4357, 6
      %v4849 = vpop.permute.xlu0 %4848
      %4850 = vrot.lane.b32.xlu0 %v4358, 6
      %v4851 = vpop.permute.xlu0 %4850
      %4852 = vrot.lane.b32.xlu0 %v4359, 6
      %v4853 = vpop.permute.xlu0 %4852
      %4854 = vrot.lane.b32.xlu0 %v4360, 6
      %v4855 = vpop.permute.xlu0 %4854
      %4856 = vrot.lane.b32.xlu0 %v4361, 6
      %v4857 = vpop.permute.xlu0 %4856
      %4858 = vrot.lane.b32.xlu0 %v4362, 6
      %v4859 = vpop.permute.xlu0 %4858
      %4860 = vrot.lane.b32.xlu0 %v4363, 6
      %v4861 = vpop.permute.xlu0 %4860
      %4862 = vrot.lane.b32.xlu0 %v4364, 6
      %v4863 = vpop.permute.xlu0 %4862
      %4864 = vrot.lane.b32.xlu0 %v4365, 6
      %v4865 = vpop.permute.xlu0 %4864
      %4866 = vrot.lane.b32.xlu0 %v4366, 6
      %v4867 = vpop.permute.xlu0 %4866
      %4868 = vrot.lane.b32.xlu0 %v4367, 6
      %v4869 = vpop.permute.xlu0 %4868
      %4870 = vrot.lane.b32.xlu0 %v4368, 6
      %v4871 = vpop.permute.xlu0 %4870
      %4872 = vrot.lane.b32.xlu0 %v4369, 6
      %v4873 = vpop.permute.xlu0 %4872
      %4874 = vrot.lane.b32.xlu0 %v4370, 6
      %v4875 = vpop.permute.xlu0 %4874
      %4876 = vrot.lane.b32.xlu0 %v4371, 6
      %v4877 = vpop.permute.xlu0 %4876
      %4878 = vrot.lane.b32.xlu0 %v4372, 6
      %v4879 = vpop.permute.xlu0 %4878
      %4880 = vrot.lane.b32.xlu0 %v4373, 6
      %v4881 = vpop.permute.xlu0 %4880
      %4882 = vrot.lane.b32.xlu0 %v4374, 6
      %v4883 = vpop.permute.xlu0 %4882
      %4884 = vrot.lane.b32.xlu0 %v4375, 6
      %v4885 = vpop.permute.xlu0 %4884
      %4886 = vrot.lane.b32.xlu0 %v4376, 6
      %v4887 = vpop.permute.xlu0 %4886
      %4888 = vrot.lane.b32.xlu0 %v4377, 6
      %v4889 = vpop.permute.xlu0 %4888
      %4890 = vrot.lane.b32.xlu0 %v4378, 6
      %v4891 = vpop.permute.xlu0 %4890
      %4956 = vrot.lane.b32.xlu0 %v4379, 8
      %v4957 = vpop.permute.xlu0 %4956
      %4958 = vrot.lane.b32.xlu0 %v4380, 8
      %v4959 = vpop.permute.xlu0 %4958
      %4960 = vrot.lane.b32.xlu0 %v4381, 8
      %v4961 = vpop.permute.xlu0 %4960
      %4962 = vrot.lane.b32.xlu0 %v4382, 8
      %v4963 = vpop.permute.xlu0 %4962
      %4964 = vrot.lane.b32.xlu0 %v4383, 8
      %v4965 = vpop.permute.xlu0 %4964
      %4966 = vrot.lane.b32.xlu0 %v4384, 8
      %v4967 = vpop.permute.xlu0 %4966
      %4968 = vrot.lane.b32.xlu0 %v4385, 8
      %v4969 = vpop.permute.xlu0 %4968
      %4970 = vrot.lane.b32.xlu0 %v4386, 8
      %v4971 = vpop.permute.xlu0 %4970
      %4972 = vrot.lane.b32.xlu0 %v4387, 8
      %v4973 = vpop.permute.xlu0 %4972
      %4974 = vrot.lane.b32.xlu0 %v4388, 8
      %v4975 = vpop.permute.xlu0 %4974
      %4976 = vrot.lane.b32.xlu0 %v4389, 8
      %v4977 = vpop.permute.xlu0 %4976
      %4978 = vrot.lane.b32.xlu0 %v4390, 8
      %v4979 = vpop.permute.xlu0 %4978
      %4980 = vrot.lane.b32.xlu0 %v4391, 8
      %v4981 = vpop.permute.xlu0 %4980
      %4982 = vrot.lane.b32.xlu0 %v4392, 8
      %v4983 = vpop.permute.xlu0 %4982
      %4984 = vrot.lane.b32.xlu0 %v4393, 8
      %v4985 = vpop.permute.xlu0 %4984
      %4986 = vrot.lane.b32.xlu0 %v4394, 8
      %v4987 = vpop.permute.xlu0 %4986
      %4988 = vrot.lane.b32.xlu0 %v4395, 8
      %v4989 = vpop.permute.xlu0 %4988
      %4990 = vrot.lane.b32.xlu0 %v4396, 8
      %v4991 = vpop.permute.xlu0 %4990
      %4992 = vrot.lane.b32.xlu0 %v4397, 8
      %v4993 = vpop.permute.xlu0 %4992
      %4994 = vrot.lane.b32.xlu0 %v4398, 8
      %v4995 = vpop.permute.xlu0 %4994
      %4996 = vrot.lane.b32.xlu0 %v4399, 8
      %v4997 = vpop.permute.xlu0 %4996
      %4998 = vrot.lane.b32.xlu0 %v4400, 8
      %v4999 = vpop.permute.xlu0 %4998
      %5000 = vrot.lane.b32.xlu0 %v4401, 8
      %v5001 = vpop.permute.xlu0 %5000
      %5002 = vrot.lane.b32.xlu0 %v4402, 8
      %v5003 = vpop.permute.xlu0 %5002
      %5004 = vrot.lane.b32.xlu0 %v4403, 8
      %v5005 = vpop.permute.xlu0 %5004
      %5006 = vrot.lane.b32.xlu0 %v4404, 8
      %v5007 = vpop.permute.xlu0 %5006
      %5008 = vrot.lane.b32.xlu0 %v4405, 8
      %v5009 = vpop.permute.xlu0 %5008
      %5010 = vrot.lane.b32.xlu0 %v4406, 8
      %v5011 = vpop.permute.xlu0 %5010
      %5012 = vrot.lane.b32.xlu0 %v4407, 8
      %v5013 = vpop.permute.xlu0 %5012
      %5014 = vrot.lane.b32.xlu0 %v4408, 8
      %v5015 = vpop.permute.xlu0 %5014
      %5016 = vrot.lane.b32.xlu0 %v4409, 8
      %v5017 = vpop.permute.xlu0 %5016
      %5018 = vrot.lane.b32.xlu0 %v4410, 8
      %v5019 = vpop.permute.xlu0 %5018
      %5084 = vrot.lane.b32.xlu0 %v4411, 10
      %v5085 = vpop.permute.xlu0 %5084
      %5086 = vrot.lane.b32.xlu0 %v4412, 10
      %v5087 = vpop.permute.xlu0 %5086
      %5088 = vrot.lane.b32.xlu0 %v4413, 10
      %v5089 = vpop.permute.xlu0 %5088
      %5090 = vrot.lane.b32.xlu0 %v4414, 10
      %v5091 = vpop.permute.xlu0 %5090
      %5092 = vrot.lane.b32.xlu0 %v4415, 10
      %v5093 = vpop.permute.xlu0 %5092
      %5094 = vrot.lane.b32.xlu0 %v4416, 10
      %v5095 = vpop.permute.xlu0 %5094
      %5096 = vrot.lane.b32.xlu0 %v4417, 10
      %v5097 = vpop.permute.xlu0 %5096
      %5098 = vrot.lane.b32.xlu0 %v4418, 10
      %v5099 = vpop.permute.xlu0 %5098
      %5100 = vrot.lane.b32.xlu0 %v4419, 10
      %v5101 = vpop.permute.xlu0 %5100
      %5102 = vrot.lane.b32.xlu0 %v4420, 10
      %v5103 = vpop.permute.xlu0 %5102
      %5104 = vrot.lane.b32.xlu0 %v4421, 10
      %v5105 = vpop.permute.xlu0 %5104
      %5106 = vrot.lane.b32.xlu0 %v4422, 10
      %v5107 = vpop.permute.xlu0 %5106
      %5108 = vrot.lane.b32.xlu0 %v4423, 10
      %v5109 = vpop.permute.xlu0 %5108
      %5110 = vrot.lane.b32.xlu0 %v4424, 10
      %v5111 = vpop.permute.xlu0 %5110
      %5112 = vrot.lane.b32.xlu0 %v4425, 10
      %v5113 = vpop.permute.xlu0 %5112
      %5114 = vrot.lane.b32.xlu0 %v4426, 10
      %v5115 = vpop.permute.xlu0 %5114
      %5116 = vrot.lane.b32.xlu0 %v4427, 10
      %v5117 = vpop.permute.xlu0 %5116
      %5118 = vrot.lane.b32.xlu0 %v4428, 10
      %v5119 = vpop.permute.xlu0 %5118
      %5120 = vrot.lane.b32.xlu0 %v4429, 10
      %v5121 = vpop.permute.xlu0 %5120
      %5122 = vrot.lane.b32.xlu0 %v4430, 10
      %v5123 = vpop.permute.xlu0 %5122
      %5124 = vrot.lane.b32.xlu0 %v4431, 10
      %v5125 = vpop.permute.xlu0 %5124
      %5126 = vrot.lane.b32.xlu0 %v4432, 10
      %v5127 = vpop.permute.xlu0 %5126
      %5128 = vrot.lane.b32.xlu0 %v4433, 10
      %v5129 = vpop.permute.xlu0 %5128
      %5130 = vrot.lane.b32.xlu0 %v4434, 10
      %v5131 = vpop.permute.xlu0 %5130
      %5132 = vrot.lane.b32.xlu0 %v4435, 10
      %v5133 = vpop.permute.xlu0 %5132
      %5134 = vrot.lane.b32.xlu0 %v4436, 10
      %v5135 = vpop.permute.xlu0 %5134
      %5136 = vrot.lane.b32.xlu0 %v4437, 10
      %v5137 = vpop.permute.xlu0 %5136
      %5138 = vrot.lane.b32.xlu0 %v4438, 10
      %v5139 = vpop.permute.xlu0 %5138
      %5140 = vrot.lane.b32.xlu0 %v4439, 10
      %v5141 = vpop.permute.xlu0 %5140
      %5142 = vrot.lane.b32.xlu0 %v4440, 10
      %v5143 = vpop.permute.xlu0 %5142
      %5144 = vrot.lane.b32.xlu0 %v4441, 10
      %v5145 = vpop.permute.xlu0 %5144
      %5146 = vrot.lane.b32.xlu0 %v4442, 10
      %v5147 = vpop.permute.xlu0 %5146
      %5212 = vrot.lane.b32.xlu0 %v4444, 12
      %v5213 = vpop.permute.xlu0 %5212
      %5214 = vrot.lane.b32.xlu0 %v4445, 12
      %v5215 = vpop.permute.xlu0 %5214
      %5216 = vrot.lane.b32.xlu0 %v4446, 12
      %v5217 = vpop.permute.xlu0 %5216
      %5218 = vrot.lane.b32.xlu0 %v4447, 12
      %v5219 = vpop.permute.xlu0 %5218
      %5220 = vrot.lane.b32.xlu0 %v4448, 12
      %v5221 = vpop.permute.xlu0 %5220
      %5222 = vrot.lane.b32.xlu0 %v4449, 12
      %v5223 = vpop.permute.xlu0 %5222
      %5224 = vrot.lane.b32.xlu0 %v4450, 12
      %v5225 = vpop.permute.xlu0 %5224
      %5226 = vrot.lane.b32.xlu0 %v4451, 12
      %v5227 = vpop.permute.xlu0 %5226
      %5228 = vrot.lane.b32.xlu0 %v4452, 12
      %v5229 = vpop.permute.xlu0 %5228
      %5230 = vrot.lane.b32.xlu0 %v4453, 12
      %v5231 = vpop.permute.xlu0 %5230
      %5232 = vrot.lane.b32.xlu0 %v4454, 12
      %v5233 = vpop.permute.xlu0 %5232
      %5234 = vrot.lane.b32.xlu0 %v4455, 12
      %v5235 = vpop.permute.xlu0 %5234
      %5236 = vrot.lane.b32.xlu0 %v4456, 12
      %v5237 = vpop.permute.xlu0 %5236
      %5238 = vrot.lane.b32.xlu0 %v4457, 12
      %v5239 = vpop.permute.xlu0 %5238
      %5240 = vrot.lane.b32.xlu0 %v4458, 12
      %v5241 = vpop.permute.xlu0 %5240
      %5242 = vrot.lane.b32.xlu0 %v4459, 12
      %v5243 = vpop.permute.xlu0 %5242
      %5244 = vrot.lane.b32.xlu0 %v4460, 12
      %v5245 = vpop.permute.xlu0 %5244
      %5246 = vrot.lane.b32.xlu0 %v4461, 12
      %v5247 = vpop.permute.xlu0 %5246
      %5248 = vrot.lane.b32.xlu0 %v4462, 12
      %v5249 = vpop.permute.xlu0 %5248
      %5250 = vrot.lane.b32.xlu0 %v4463, 12
      %v5251 = vpop.permute.xlu0 %5250
      %5252 = vrot.lane.b32.xlu0 %v4464, 12
      %v5253 = vpop.permute.xlu0 %5252
      %5254 = vrot.lane.b32.xlu0 %v4465, 12
      %v5255 = vpop.permute.xlu0 %5254
      %5256 = vrot.lane.b32.xlu0 %v4466, 12
      %v5257 = vpop.permute.xlu0 %5256
      %5258 = vrot.lane.b32.xlu0 %v4467, 12
      %v5259 = vpop.permute.xlu0 %5258
      %5260 = vrot.lane.b32.xlu0 %v4468, 12
      %v5261 = vpop.permute.xlu0 %5260
      %5262 = vrot.lane.b32.xlu0 %v4469, 12
      %v5263 = vpop.permute.xlu0 %5262
      %5264 = vrot.lane.b32.xlu0 %v4470, 12
      %v5265 = vpop.permute.xlu0 %5264
      %5266 = vrot.lane.b32.xlu0 %v4471, 12
      %v5267 = vpop.permute.xlu0 %5266
      %5268 = vrot.lane.b32.xlu0 %v4472, 12
      %v5269 = vpop.permute.xlu0 %5268
      %5270 = vrot.lane.b32.xlu0 %v4473, 12
      %v5271 = vpop.permute.xlu0 %5270
      %5272 = vrot.lane.b32.xlu0 %v4474, 12
      %v5273 = vpop.permute.xlu0 %5272
      %5274 = vrot.lane.b32.xlu0 %v4475, 12
      %v5275 = vpop.permute.xlu0 %5274
      %5340 = vrot.lane.b32.xlu0 %v4476, 14
      %v5341 = vpop.permute.xlu0 %5340
      %5342 = vrot.lane.b32.xlu0 %v4477, 14
      %v5343 = vpop.permute.xlu0 %5342
      %5344 = vrot.lane.b32.xlu0 %v4478, 14
      %v5345 = vpop.permute.xlu0 %5344
      %5346 = vrot.lane.b32.xlu0 %v4479, 14
      %v5347 = vpop.permute.xlu0 %5346
      %5348 = vrot.lane.b32.xlu0 %v4480, 14
      %v5349 = vpop.permute.xlu0 %5348
      %5350 = vrot.lane.b32.xlu0 %v4481, 14
      %v5351 = vpop.permute.xlu0 %5350
      %5352 = vrot.lane.b32.xlu0 %v4482, 14
      %v5353 = vpop.permute.xlu0 %5352
      %5354 = vrot.lane.b32.xlu0 %v4483, 14
      %v5355 = vpop.permute.xlu0 %5354
      %5356 = vrot.lane.b32.xlu0 %v4484, 14
      %v5357 = vpop.permute.xlu0 %5356
      %5358 = vrot.lane.b32.xlu0 %v4485, 14
      %v5359 = vpop.permute.xlu0 %5358
      %5360 = vrot.lane.b32.xlu0 %v4486, 14
      %v5361 = vpop.permute.xlu0 %5360
      %5362 = vrot.lane.b32.xlu0 %v4487, 14
      %v5363 = vpop.permute.xlu0 %5362
      %5364 = vrot.lane.b32.xlu0 %v4488, 14
      %v5365 = vpop.permute.xlu0 %5364
      %5366 = vrot.lane.b32.xlu0 %v4489, 14
      %v5367 = vpop.permute.xlu0 %5366
      %5368 = vrot.lane.b32.xlu0 %v4490, 14
      %v5369 = vpop.permute.xlu0 %5368
      %5370 = vrot.lane.b32.xlu0 %v4491, 14
      %v5371 = vpop.permute.xlu0 %5370
      %5372 = vrot.lane.b32.xlu0 %v4492, 14
      %v5373 = vpop.permute.xlu0 %5372
      %5374 = vrot.lane.b32.xlu0 %v4493, 14
      %v5375 = vpop.permute.xlu0 %5374
      %5376 = vrot.lane.b32.xlu0 %v4494, 14
      %v5377 = vpop.permute.xlu0 %5376
      %5378 = vrot.lane.b32.xlu0 %v4495, 14
      %v5379 = vpop.permute.xlu0 %5378
      %5380 = vrot.lane.b32.xlu0 %v4496, 14
      %v5381 = vpop.permute.xlu0 %5380
      %5382 = vrot.lane.b32.xlu0 %v4497, 14
      %v5383 = vpop.permute.xlu0 %5382
      %5384 = vrot.lane.b32.xlu0 %v4498, 14
      %v5385 = vpop.permute.xlu0 %5384
      %5386 = vrot.lane.b32.xlu0 %v4499, 14
      %v5387 = vpop.permute.xlu0 %5386
      %5388 = vrot.lane.b32.xlu0 %v4500, 14
      %v5389 = vpop.permute.xlu0 %5388
      %5390 = vrot.lane.b32.xlu0 %v4501, 14
      %v5391 = vpop.permute.xlu0 %5390
      %5392 = vrot.lane.b32.xlu0 %v4502, 14
      %v5393 = vpop.permute.xlu0 %5392
      %5394 = vrot.lane.b32.xlu0 %v4503, 14
      %v5395 = vpop.permute.xlu0 %5394
      %5396 = vrot.lane.b32.xlu0 %v4504, 14
      %v5397 = vpop.permute.xlu0 %5396
      %5398 = vrot.lane.b32.xlu0 %v4505, 14
      %v5399 = vpop.permute.xlu0 %5398
      %5400 = vrot.lane.b32.xlu0 %v4506, 14
      %v5401 = vpop.permute.xlu0 %5400
      %5402 = vrot.lane.b32.xlu0 %v4507, 14
      %v5403 = vpop.permute.xlu0 %5402
      %5468 = vrot.lane.b32.xlu0 %v4508, 16
      %v5469 = vpop.permute.xlu0 %5468
      %5470 = vrot.lane.b32.xlu0 %v4509, 16
      %v5471 = vpop.permute.xlu0 %5470
      %5472 = vrot.lane.b32.xlu0 %v4510, 16
      %v5473 = vpop.permute.xlu0 %5472
      %5474 = vrot.lane.b32.xlu0 %v4511, 16
      %v5475 = vpop.permute.xlu0 %5474
      %5476 = vrot.lane.b32.xlu0 %v4512, 16
      %v5477 = vpop.permute.xlu0 %5476
      %5478 = vrot.lane.b32.xlu0 %v4513, 16
      %v5479 = vpop.permute.xlu0 %5478
      %5480 = vrot.lane.b32.xlu0 %v4514, 16
      %v5481 = vpop.permute.xlu0 %5480
      %5482 = vrot.lane.b32.xlu0 %v4515, 16
      %v5483 = vpop.permute.xlu0 %5482
      %5484 = vrot.lane.b32.xlu0 %v4516, 16
      %v5485 = vpop.permute.xlu0 %5484
      %5486 = vrot.lane.b32.xlu0 %v4517, 16
      %v5487 = vpop.permute.xlu0 %5486
      %5488 = vrot.lane.b32.xlu0 %v4518, 16
      %v5489 = vpop.permute.xlu0 %5488
      %5490 = vrot.lane.b32.xlu0 %v4519, 16
      %v5491 = vpop.permute.xlu0 %5490
      %5492 = vrot.lane.b32.xlu0 %v4520, 16
      %v5493 = vpop.permute.xlu0 %5492
      %5494 = vrot.lane.b32.xlu0 %v4521, 16
      %v5495 = vpop.permute.xlu0 %5494
      %5496 = vrot.lane.b32.xlu0 %v4522, 16
      %v5497 = vpop.permute.xlu0 %5496
      %5498 = vrot.lane.b32.xlu0 %v4523, 16
      %v5499 = vpop.permute.xlu0 %5498
      %5500 = vrot.lane.b32.xlu0 %v4524, 16
      %v5501 = vpop.permute.xlu0 %5500
      %5502 = vrot.lane.b32.xlu0 %v4525, 16
      %v5503 = vpop.permute.xlu0 %5502
      %5504 = vrot.lane.b32.xlu0 %v4526, 16
      %v5505 = vpop.permute.xlu0 %5504
      %5506 = vrot.lane.b32.xlu0 %v4527, 16
      %v5507 = vpop.permute.xlu0 %5506
      %5508 = vrot.lane.b32.xlu0 %v4528, 16
      %v5509 = vpop.permute.xlu0 %5508
      %5510 = vrot.lane.b32.xlu0 %v4529, 16
      %v5511 = vpop.permute.xlu0 %5510
      %5512 = vrot.lane.b32.xlu0 %v4530, 16
      %v5513 = vpop.permute.xlu0 %5512
      %5514 = vrot.lane.b32.xlu0 %v4531, 16
      %v5515 = vpop.permute.xlu0 %5514
      %5516 = vrot.lane.b32.xlu0 %v4532, 16
      %v5517 = vpop.permute.xlu0 %5516
      %5518 = vrot.lane.b32.xlu0 %v4533, 16
      %v5519 = vpop.permute.xlu0 %5518
      %5520 = vrot.lane.b32.xlu0 %v4534, 16
      %v5521 = vpop.permute.xlu0 %5520
      %5522 = vrot.lane.b32.xlu0 %v4535, 16
      %v5523 = vpop.permute.xlu0 %5522
      %5524 = vrot.lane.b32.xlu0 %v4536, 16
      %v5525 = vpop.permute.xlu0 %5524
      %5526 = vrot.lane.b32.xlu0 %v4537, 16
      %v5527 = vpop.permute.xlu0 %5526
      %5528 = vrot.lane.b32.xlu0 %v4538, 16
      %v5529 = vpop.permute.xlu0 %5528
      %5530 = vrot.lane.b32.xlu0 %v4539, 16
      %v5531 = vpop.permute.xlu0 %5530
      %v5564 = vsel %vm2231, %v4251, %v4573
      %v5565 = vsel %vm2231, %v4252, %v4575
      %v5566 = vsel %vm2231, %v4253, %v4577
      %v5567 = vsel %vm2231, %v4254, %v4579
      %v5568 = vsel %vm2231, %v4255, %v4581
      %v5569 = vsel %vm2231, %v4256, %v4583
      %v5570 = vsel %vm2231, %v4257, %v4585
      %v5571 = vsel %vm2231, %v4258, %v4587
      %v5572 = vsel %vm2231, %v4259, %v4589
      %v5573 = vsel %vm2231, %v4260, %v4591
      %v5574 = vsel %vm2231, %v4261, %v4593
      %v5575 = vsel %vm2231, %v4262, %v4595
      %v5576 = vsel %vm2231, %v4263, %v4597
      %v5577 = vsel %vm2231, %v4264, %v4599
      %v5578 = vsel %vm2231, %v4265, %v4601
      %v5579 = vsel %vm2231, %v4266, %v4603
      %v5580 = vsel %vm2231, %v4267, %v4605
      %v5581 = vsel %vm2231, %v4268, %v4607
      %v5582 = vsel %vm2231, %v4269, %v4609
      %v5583 = vsel %vm2231, %v4270, %v4611
      %v5584 = vsel %vm2231, %v4271, %v4613
      %v5585 = vsel %vm2231, %v4272, %v4615
      %v5586 = vsel %vm2231, %v4273, %v4617
      %v5587 = vsel %vm2231, %v4274, %v4619
      %v5588 = vsel %vm2231, %v4275, %v4621
      %v5589 = vsel %vm2231, %v4276, %v4623
      %v5590 = vsel %vm2231, %v4277, %v4625
      %v5591 = vsel %vm2231, %v4278, %v4627
      %v5592 = vsel %vm2231, %v4279, %v4629
      %v5593 = vsel %vm2231, %v4280, %v4631
      %v5594 = vsel %vm2231, %v4281, %v4633
      %v5595 = vsel %vm2231, %v4282, %v4635
      %v5596 = vsel %vm279, %v5564, %v4701
      %v5597 = vsel %vm279, %v5565, %v4703
      %v5598 = vsel %vm279, %v5566, %v4705
      %v5599 = vsel %vm279, %v5567, %v4707
      %v5600 = vsel %vm279, %v5568, %v4709
      %v5601 = vsel %vm279, %v5569, %v4711
      %v5602 = vsel %vm279, %v5570, %v4713
      %v5603 = vsel %vm279, %v5571, %v4715
      %v5604 = vsel %vm279, %v5572, %v4717
      %v5605 = vsel %vm279, %v5573, %v4719
      %v5606 = vsel %vm279, %v5574, %v4721
      %v5607 = vsel %vm279, %v5575, %v4723
      %v5608 = vsel %vm279, %v5576, %v4725
      %v5609 = vsel %vm279, %v5577, %v4727
      %v5610 = vsel %vm279, %v5578, %v4729
      %v5611 = vsel %vm279, %v5579, %v4731
      %v5612 = vsel %vm279, %v5580, %v4733
      %v5613 = vsel %vm279, %v5581, %v4735
      %v5614 = vsel %vm279, %v5582, %v4737
      %v5615 = vsel %vm279, %v5583, %v4739
      %v5616 = vsel %vm279, %v5584, %v4741
      %v5617 = vsel %vm279, %v5585, %v4743
      %v5618 = vsel %vm279, %v5586, %v4745
      %v5619 = vsel %vm279, %v5587, %v4747
      %v5620 = vsel %vm279, %v5588, %v4749
      %v5621 = vsel %vm279, %v5589, %v4751
      %v5622 = vsel %vm279, %v5590, %v4753
      %v5623 = vsel %vm279, %v5591, %v4755
      %v5624 = vsel %vm279, %v5592, %v4757
      %v5625 = vsel %vm279, %v5593, %v4759
      %v5626 = vsel %vm279, %v5594, %v4761
      %v5627 = vsel %vm279, %v5595, %v4763
      %v5628 = vsel %vm3703, %v5596, %v4829
      %v5629 = vsel %vm3703, %v5597, %v4831
      %v5630 = vsel %vm3703, %v5598, %v4833
      %v5631 = vsel %vm3703, %v5599, %v4835
      %v5632 = vsel %vm3703, %v5600, %v4837
      %v5633 = vsel %vm3703, %v5601, %v4839
      %v5634 = vsel %vm3703, %v5602, %v4841
      %v5635 = vsel %vm3703, %v5603, %v4843
      %v5636 = vsel %vm3703, %v5604, %v4845
      %v5637 = vsel %vm3703, %v5605, %v4847
      %v5638 = vsel %vm3703, %v5606, %v4849
      %v5639 = vsel %vm3703, %v5607, %v4851
      %v5640 = vsel %vm3703, %v5608, %v4853
      %v5641 = vsel %vm3703, %v5609, %v4855
      %v5642 = vsel %vm3703, %v5610, %v4857
      %v5643 = vsel %vm3703, %v5611, %v4859
      %v5644 = vsel %vm3703, %v5612, %v4861
      %v5645 = vsel %vm3703, %v5613, %v4863
      %v5646 = vsel %vm3703, %v5614, %v4865
      %v5647 = vsel %vm3703, %v5615, %v4867
      %v5648 = vsel %vm3703, %v5616, %v4869
      %v5649 = vsel %vm3703, %v5617, %v4871
      %v5650 = vsel %vm3703, %v5618, %v4873
      %v5651 = vsel %vm3703, %v5619, %v4875
      %v5652 = vsel %vm3703, %v5620, %v4877
      %v5653 = vsel %vm3703, %v5621, %v4879
      %v5654 = vsel %vm3703, %v5622, %v4881
      %v5655 = vsel %vm3703, %v5623, %v4883
      %v5656 = vsel %vm3703, %v5624, %v4885
      %v5657 = vsel %vm3703, %v5625, %v4887
      %v5658 = vsel %vm3703, %v5626, %v4889
      %v5659 = vsel %vm3703, %v5627, %v4891
      %v5660 = vsel %vm1745, %v5628, %v4957
      %v5661 = vsel %vm1745, %v5629, %v4959
      %v5662 = vsel %vm1745, %v5630, %v4961
      %v5663 = vsel %vm1745, %v5631, %v4963
      %v5664 = vsel %vm1745, %v5632, %v4965
      %v5665 = vsel %vm1745, %v5633, %v4967
      %v5666 = vsel %vm1745, %v5634, %v4969
      %v5667 = vsel %vm1745, %v5635, %v4971
      %v5668 = vsel %vm1745, %v5636, %v4973
      %v5669 = vsel %vm1745, %v5637, %v4975
      %v5670 = vsel %vm1745, %v5638, %v4977
      %v5671 = vsel %vm1745, %v5639, %v4979
      %v5672 = vsel %vm1745, %v5640, %v4981
      %v5673 = vsel %vm1745, %v5641, %v4983
      %v5674 = vsel %vm1745, %v5642, %v4985
      %v5675 = vsel %vm1745, %v5643, %v4987
      %v5676 = vsel %vm1745, %v5644, %v4989
      %v5677 = vsel %vm1745, %v5645, %v4991
      %v5678 = vsel %vm1745, %v5646, %v4993
      %v5679 = vsel %vm1745, %v5647, %v4995
      %v5680 = vsel %vm1745, %v5648, %v4997
      %v5681 = vsel %vm1745, %v5649, %v4999
      %v5682 = vsel %vm1745, %v5650, %v5001
      %v5683 = vsel %vm1745, %v5651, %v5003
      %v5684 = vsel %vm1745, %v5652, %v5005
      %v5685 = vsel %vm1745, %v5653, %v5007
      %v5686 = vsel %vm1745, %v5654, %v5009
      %v5687 = vsel %vm1745, %v5655, %v5011
      %v5688 = vsel %vm1745, %v5656, %v5013
      %v5689 = vsel %vm1745, %v5657, %v5015
      %v5690 = vsel %vm1745, %v5658, %v5017
      %v5691 = vsel %vm1745, %v5659, %v5019
      %v5692 = vsel %vm3768, %v5660, %v5085
      %v5693 = vsel %vm3768, %v5661, %v5087
      %v5694 = vsel %vm3768, %v5662, %v5089
      %v5695 = vsel %vm3768, %v5663, %v5091
      %v5696 = vsel %vm3768, %v5664, %v5093
      %v5697 = vsel %vm3768, %v5665, %v5095
      %v5698 = vsel %vm3768, %v5666, %v5097
      %v5699 = vsel %vm3768, %v5667, %v5099
      %v5700 = vsel %vm3768, %v5668, %v5101
      %v5701 = vsel %vm3768, %v5669, %v5103
      %v5702 = vsel %vm3768, %v5670, %v5105
      %v5703 = vsel %vm3768, %v5671, %v5107
      %v5704 = vsel %vm3768, %v5672, %v5109
      %v5705 = vsel %vm3768, %v5673, %v5111
      %v5706 = vsel %vm3768, %v5674, %v5113
      %v5707 = vsel %vm3768, %v5675, %v5115
      %v5708 = vsel %vm3768, %v5676, %v5117
      %v5709 = vsel %vm3768, %v5677, %v5119
      %v5710 = vsel %vm3768, %v5678, %v5121
      %v5711 = vsel %vm3768, %v5679, %v5123
      %v5712 = vsel %vm3768, %v5680, %v5125
      %v5713 = vsel %vm3768, %v5681, %v5127
      %v5714 = vsel %vm3768, %v5682, %v5129
      %v5715 = vsel %vm3768, %v5683, %v5131
      %v5716 = vsel %vm3768, %v5684, %v5133
      %v5717 = vsel %vm3768, %v5685, %v5135
      %v5718 = vsel %vm3768, %v5686, %v5137
      %v5719 = vsel %vm3768, %v5687, %v5139
      %v5720 = vsel %vm3768, %v5688, %v5141
      %v5721 = vsel %vm3768, %v5689, %v5143
      %v5722 = vsel %vm3768, %v5690, %v5145
      %v5723 = vsel %vm3768, %v5691, %v5147
      %v5724 = vsel %vm1778, %v5692, %v5213
      %v5725 = vsel %vm1778, %v5693, %v5215
      %v5726 = vsel %vm1778, %v5694, %v5217
      %v5727 = vsel %vm1778, %v5695, %v5219
      %v5728 = vsel %vm1778, %v5696, %v5221
      %v5729 = vsel %vm1778, %v5697, %v5223
      %v5730 = vsel %vm1778, %v5698, %v5225
      %v5731 = vsel %vm1778, %v5699, %v5227
      %v5732 = vsel %vm1778, %v5700, %v5229
      %v5733 = vsel %vm1778, %v5701, %v5231
      %v5734 = vsel %vm1778, %v5702, %v5233
      %v5735 = vsel %vm1778, %v5703, %v5235
      %v5736 = vsel %vm1778, %v5704, %v5237
      %v5737 = vsel %vm1778, %v5705, %v5239
      %v5738 = vsel %vm1778, %v5706, %v5241
      %v5739 = vsel %vm1778, %v5707, %v5243
      %v5740 = vsel %vm1778, %v5708, %v5245
      %v5741 = vsel %vm1778, %v5709, %v5247
      %v5742 = vsel %vm1778, %v5710, %v5249
      %v5743 = vsel %vm1778, %v5711, %v5251
      %v5744 = vsel %vm1778, %v5712, %v5253
      %v5745 = vsel %vm1778, %v5713, %v5255
      %v5746 = vsel %vm1778, %v5714, %v5257
      %v5747 = vsel %vm1778, %v5715, %v5259
      %v5748 = vsel %vm1778, %v5716, %v5261
      %v5749 = vsel %vm1778, %v5717, %v5263
      %v5750 = vsel %vm1778, %v5718, %v5265
      %v5751 = vsel %vm1778, %v5719, %v5267
      %v5752 = vsel %vm1778, %v5720, %v5269
      %v5753 = vsel %vm1778, %v5721, %v5271
      %v5754 = vsel %vm1778, %v5722, %v5273
      %v5755 = vsel %vm1778, %v5723, %v5275
      %v5756 = vsel %vm3833, %v5724, %v5341
      %v5757 = vsel %vm3833, %v5725, %v5343
      %v5758 = vsel %vm3833, %v5726, %v5345
      %v5759 = vsel %vm3833, %v5727, %v5347
      %v5760 = vsel %vm3833, %v5728, %v5349
      %v5761 = vsel %vm3833, %v5729, %v5351
      %v5762 = vsel %vm3833, %v5730, %v5353
      %v5763 = vsel %vm3833, %v5731, %v5355
      %v5764 = vsel %vm3833, %v5732, %v5357
      %v5765 = vsel %vm3833, %v5733, %v5359
      %v5766 = vsel %vm3833, %v5734, %v5361
      %v5767 = vsel %vm3833, %v5735, %v5363
      %v5768 = vsel %vm3833, %v5736, %v5365
      %v5769 = vsel %vm3833, %v5737, %v5367
      %v5770 = vsel %vm3833, %v5738, %v5369
      %v5771 = vsel %vm3833, %v5739, %v5371
      %v5772 = vsel %vm3833, %v5740, %v5373
      %v5773 = vsel %vm3833, %v5741, %v5375
      %v5774 = vsel %vm3833, %v5742, %v5377
      %v5775 = vsel %vm3833, %v5743, %v5379
      %v5776 = vsel %vm3833, %v5744, %v5381
      %v5777 = vsel %vm3833, %v5745, %v5383
      %v5778 = vsel %vm3833, %v5746, %v5385
      %v5779 = vsel %vm3833, %v5747, %v5387
      %v5780 = vsel %vm3833, %v5748, %v5389
      %v5781 = vsel %vm3833, %v5749, %v5391
      %v5782 = vsel %vm3833, %v5750, %v5393
      %v5783 = vsel %vm3833, %v5751, %v5395
      %v5784 = vsel %vm3833, %v5752, %v5397
      %v5785 = vsel %vm3833, %v5753, %v5399
      %v5786 = vsel %vm3833, %v5754, %v5401
      %v5787 = vsel %vm3833, %v5755, %v5403
      %v5788 = vsel %vm1811, %v5756, %v5469
      %v5789 = vsel %vm1811, %v5757, %v5471
      %v5790 = vsel %vm1811, %v5758, %v5473
      %v5791 = vsel %vm1811, %v5759, %v5475
      %v5792 = vsel %vm1811, %v5760, %v5477
      %v5793 = vsel %vm1811, %v5761, %v5479
      %v5794 = vsel %vm1811, %v5762, %v5481
      %v5795 = vsel %vm1811, %v5763, %v5483
      %v5796 = vsel %vm1811, %v5764, %v5485
      %v5797 = vsel %vm1811, %v5765, %v5487
      %v5798 = vsel %vm1811, %v5766, %v5489
      %v5799 = vsel %vm1811, %v5767, %v5491
      %v5800 = vsel %vm1811, %v5768, %v5493
      %v5801 = vsel %vm1811, %v5769, %v5495
      %v5802 = vsel %vm1811, %v5770, %v5497
      %v5803 = vsel %vm1811, %v5771, %v5499
      %v5804 = vsel %vm1811, %v5772, %v5501
      %v5805 = vsel %vm1811, %v5773, %v5503
      %v5806 = vsel %vm1811, %v5774, %v5505
      %v5807 = vsel %vm1811, %v5775, %v5507
      %v5808 = vsel %vm1811, %v5776, %v5509
      %v5809 = vsel %vm1811, %v5777, %v5511
      %v5810 = vsel %vm1811, %v5778, %v5513
      %v5811 = vsel %vm1811, %v5779, %v5515
      %v5812 = vsel %vm1811, %v5780, %v5517
      %v5813 = vsel %vm1811, %v5781, %v5519
      %v5814 = vsel %vm1811, %v5782, %v5521
      %v5815 = vsel %vm1811, %v5783, %v5523
      %v5816 = vsel %vm1811, %v5784, %v5525
      %v5817 = vsel %vm1811, %v5785, %v5527
      %v5818 = vsel %vm1811, %v5786, %v5529
      %v5819 = vsel %vm1811, %v5787, %v5531
      %v5820 = vld [vmem:[%s5] sm:$0xff]
      %v5821 = vld [vmem:[%s5 + $0x8] sm:$0xff]
      %v5822 = vld [vmem:[%s5 + $0x10] sm:$0x3]
      %v5823 = vld [vmem:[%s6] sm:$0x1]
      %v5825 = vperm.slane %v5823, 0
      %v5828 = vsel %vm3905, %v5788, 0
      %v5831 = vsel %vm3905, %v5789, 0
      %v5834 = vsel %vm3905, %v5790, 0
      %v5837 = vsel %vm3905, %v5791, 0
      %v5840 = vsel %vm3905, %v5792, 0
      %v5843 = vsel %vm3905, %v5793, 0
      %v5846 = vsel %vm3905, %v5794, 0
      %v5849 = vsel %vm3905, %v5795, 0
      %v5852 = vsel %vm3905, %v5796, 0
      %v5855 = vsel %vm3905, %v5797, 0
      %v5858 = vsel %vm3905, %v5798, 0
      %v5861 = vsel %vm3905, %v5799, 0
      %v5864 = vsel %vm3905, %v5800, 0
      %v5867 = vsel %vm3905, %v5801, 0
      %v5870 = vsel %vm3905, %v5802, 0
      %v5873 = vsel %vm3905, %v5803, 0
      %v5876 = vsel %vm3905, %v5804, 0
      %v5879 = vsel %vm3905, %v5805, 0
      %v5882 = vsel %vm3905, %v5806, 0
      %v5885 = vsel %vm3905, %v5807, 0
      %v5888 = vsel %vm3905, %v5808, 0
      %v5891 = vsel %vm3905, %v5809, 0
      %v5894 = vsel %vm3905, %v5810, 0
      %v5897 = vsel %vm3905, %v5811, 0
      %v5900 = vsel %vm3905, %v5812, 0
      %v5903 = vsel %vm3905, %v5813, 0
      %v5906 = vsel %vm3905, %v5814, 0
      %v5909 = vsel %vm3905, %v5815, 0
      %v5912 = vsel %vm3905, %v5816, 0
      %v5915 = vsel %vm3905, %v5817, 0
      %v5918 = vsel %vm3905, %v5818, 0
      %v5921 = vsel %vm3905, %v5819, 0
      %v5924 = vsel %vm4002, %v5822, 0
      %5926 = vmatpush.msra.mxu0 0.0
      %5927 = vmatpush.msra.mxu0 0.0
      %5928 = vmatpush.msra.mxu0 0.0
      %5929 = vmatpush.msra.mxu0 0.0
      %5930 = vmatpush.msra.mxu0 0.0
      %5931 = vmatpush.msra.mxu0 0.0
      %5932 = vmatpush.msra.mxu0 0.0
      %5933 = vmatpush.msra.mxu0 0.0
      %5934 = vmatpush.msra.mxu0 0.0
      %5935 = vmatpush.msra.mxu0 0.0
      %5936 = vmatpush.msra.mxu0 0.0
      %5937 = vmatpush.msra.mxu0 0.0
      %5938 = vmatpush.msra.mxu0 0.0
      %5939 = vmatpush.msra.mxu0 %v5924
      %5940 = vmatpush.msra.mxu0 %v5821
      %5941 = vmatpush.msra.mxu0 %v5820
      %5942 = vmatmul.f32.gmra.mxu0 %v5828
      %v5943 = vpop.f32.mrf.mxu0
      %v5944 = vadd.f32 %v5825, %v5943
      %5945 = vmatmul.f32.gmra.mxu0 %v5831
      %v5946 = vpop.f32.mrf.mxu0
      %v5947 = vadd.f32 %v5825, %v5946
      %5948 = vmatmul.f32.gmra.mxu0 %v5834
      %v5949 = vpop.f32.mrf.mxu0
      %v5950 = vadd.f32 %v5825, %v5949
      %5951 = vmatmul.f32.gmra.mxu0 %v5837
      %v5952 = vpop.f32.mrf.mxu0
      %v5953 = vadd.f32 %v5825, %v5952
      %5954 = vmatmul.f32.gmra.mxu0 %v5840
      %v5955 = vpop.f32.mrf.mxu0
      %v5956 = vadd.f32 %v5825, %v5955
      %5957 = vmatmul.f32.gmra.mxu0 %v5843
      %v5958 = vpop.f32.mrf.mxu0
      %v5959 = vadd.f32 %v5825, %v5958
      %5960 = vmatmul.f32.gmra.mxu0 %v5846
      %v5961 = vpop.f32.mrf.mxu0
      %v5962 = vadd.f32 %v5825, %v5961
      %5963 = vmatmul.f32.gmra.mxu0 %v5849
      %v5964 = vpop.f32.mrf.mxu0
      %v5965 = vadd.f32 %v5825, %v5964
      %5966 = vmatmul.f32.gmra.mxu0 %v5852
      %v5967 = vpop.f32.mrf.mxu0
      %v5968 = vadd.f32 %v5825, %v5967
      %5969 = vmatmul.f32.gmra.mxu0 %v5855
      %v5970 = vpop.f32.mrf.mxu0
      %v5971 = vadd.f32 %v5825, %v5970
      %5972 = vmatmul.f32.gmra.mxu0 %v5858
      %v5973 = vpop.f32.mrf.mxu0
      %v5974 = vadd.f32 %v5825, %v5973
      %5975 = vmatmul.f32.gmra.mxu0 %v5861
      %v5976 = vpop.f32.mrf.mxu0
      %v5977 = vadd.f32 %v5825, %v5976
      %5978 = vmatmul.f32.gmra.mxu0 %v5864
      %v5979 = vpop.f32.mrf.mxu0
      %v5980 = vadd.f32 %v5825, %v5979
      %5981 = vmatmul.f32.gmra.mxu0 %v5867
      %v5982 = vpop.f32.mrf.mxu0
      %v5983 = vadd.f32 %v5825, %v5982
      %5984 = vmatmul.f32.gmra.mxu0 %v5870
      %v5985 = vpop.f32.mrf.mxu0
      %v5986 = vadd.f32 %v5825, %v5985
      %5987 = vmatmul.f32.gmra.mxu0 %v5873
      %v5988 = vpop.f32.mrf.mxu0
      %v5989 = vadd.f32 %v5825, %v5988
      %5990 = vmatmul.f32.gmra.mxu0 %v5876
      %v5991 = vpop.f32.mrf.mxu0
      %v5992 = vadd.f32 %v5825, %v5991
      %5993 = vmatmul.f32.gmra.mxu0 %v5879
      %v5994 = vpop.f32.mrf.mxu0
      %v5995 = vadd.f32 %v5825, %v5994
      %5996 = vmatmul.f32.gmra.mxu0 %v5882
      %v5997 = vpop.f32.mrf.mxu0
      %v5998 = vadd.f32 %v5825, %v5997
      %5999 = vmatmul.f32.gmra.mxu0 %v5885
      %v6000 = vpop.f32.mrf.mxu0
      %v6001 = vadd.f32 %v5825, %v6000
      %6002 = vmatmul.f32.gmra.mxu0 %v5888
      %v6003 = vpop.f32.mrf.mxu0
      %v6004 = vadd.f32 %v5825, %v6003
      %6005 = vmatmul.f32.gmra.mxu0 %v5891
      %v6006 = vpop.f32.mrf.mxu0
      %v6007 = vadd.f32 %v5825, %v6006
      %6008 = vmatmul.f32.gmra.mxu0 %v5894
      %v6009 = vpop.f32.mrf.mxu0
      %v6010 = vadd.f32 %v5825, %v6009
      %6011 = vmatmul.f32.gmra.mxu0 %v5897
      %v6012 = vpop.f32.mrf.mxu0
      %v6013 = vadd.f32 %v5825, %v6012
      %6014 = vmatmul.f32.gmra.mxu0 %v5900
      %v6015 = vpop.f32.mrf.mxu0
      %v6016 = vadd.f32 %v5825, %v6015
      %6017 = vmatmul.f32.gmra.mxu0 %v5903
      %v6018 = vpop.f32.mrf.mxu0
      %v6019 = vadd.f32 %v5825, %v6018
      %6020 = vmatmul.f32.gmra.mxu0 %v5906
      %v6021 = vpop.f32.mrf.mxu0
      %v6022 = vadd.f32 %v5825, %v6021
      %6023 = vmatmul.f32.gmra.mxu0 %v5909
      %v6024 = vpop.f32.mrf.mxu0
      %v6025 = vadd.f32 %v5825, %v6024
      %6026 = vmatmul.f32.gmra.mxu0 %v5912
      %v6027 = vpop.f32.mrf.mxu0
      %v6028 = vadd.f32 %v5825, %v6027
      %6029 = vmatmul.f32.gmra.mxu0 %v5915
      %v6030 = vpop.f32.mrf.mxu0
      %v6031 = vadd.f32 %v5825, %v6030
      %6032 = vmatmul.f32.gmra.mxu0 %v5918
      %v6033 = vpop.f32.mrf.mxu0
      %v6034 = vadd.f32 %v5825, %v6033
      %6035 = vmatmul.f32.gmra.mxu0 %v5921
      %v6036 = vpop.f32.mrf.mxu0
      %v6037 = vadd.f32 %v5825, %v6036
      %6038 = vdwg.mxu0
      %v6039 = vmax.f32 %v5944, 0.0
      %v6040 = vmax.f32 %v5947, 0.0
      %v6041 = vmax.f32 %v5950, 0.0
      %v6042 = vmax.f32 %v5953, 0.0
      %v6043 = vmax.f32 %v5956, 0.0
      %v6044 = vmax.f32 %v5959, 0.0
      %v6045 = vmax.f32 %v5962, 0.0
      %v6046 = vmax.f32 %v5965, 0.0
      %v6047 = vmax.f32 %v5968, 0.0
      %v6048 = vmax.f32 %v5971, 0.0
      %v6049 = vmax.f32 %v5974, 0.0
      %v6050 = vmax.f32 %v5977, 0.0
      %v6051 = vmax.f32 %v5980, 0.0
      %v6052 = vmax.f32 %v5983, 0.0
      %v6053 = vmax.f32 %v5986, 0.0
      %v6054 = vmax.f32 %v5989, 0.0
      %v6055 = vmax.f32 %v5992, 0.0
      %v6056 = vmax.f32 %v5995, 0.0
      %v6057 = vmax.f32 %v5998, 0.0
      %v6058 = vmax.f32 %v6001, 0.0
      %v6059 = vmax.f32 %v6004, 0.0
      %v6060 = vmax.f32 %v6007, 0.0
      %v6061 = vmax.f32 %v6010, 0.0
      %v6062 = vmax.f32 %v6013, 0.0
      %v6063 = vmax.f32 %v6016, 0.0
      %v6064 = vmax.f32 %v6019, 0.0
      %v6065 = vmax.f32 %v6022, 0.0
      %v6066 = vmax.f32 %v6025, 0.0
      %v6067 = vmax.f32 %v6028, 0.0
      %v6068 = vmax.f32 %v6031, 0.0
      %v6069 = vmax.f32 %v6034, 0.0
      %v6070 = vmax.f32 %v6037, 0.0
      %6071 = vst.msk [vmem:[%s278] sm:$0xff] %vm1745, %v6039
      %6072 = vst.msk [vmem:[%s278 + $0x8] sm:$0xff] %vm1745, %v6040
      %6073 = vst.msk [vmem:[%s278 + $0x10] sm:$0xff] %vm1745, %v6041
      %6074 = vst.msk [vmem:[%s278 + $0x18] sm:$0xff] %vm1745, %v6042
      %6075 = vst.msk [vmem:[%s278 + $0x20] sm:$0xff] %vm1745, %v6043
      %6076 = vst.msk [vmem:[%s278 + $0x28] sm:$0xff] %vm1745, %v6044
      %6077 = vst.msk [vmem:[%s278 + $0x30] sm:$0xff] %vm1745, %v6045
      %6078 = vst.msk [vmem:[%s278 + $0x38] sm:$0xff] %vm1745, %v6046
      %6079 = vst.msk [vmem:[%s278 + $0x40] sm:$0xff] %vm1745, %v6047
      %6080 = vst.msk [vmem:[%s278 + $0x48] sm:$0xff] %vm1745, %v6048
      %6081 = vst.msk [vmem:[%s278 + $0x50] sm:$0xff] %vm1745, %v6049
      %6082 = vst.msk [vmem:[%s278 + $0x58] sm:$0xff] %vm1745, %v6050
      %6083 = vst.msk [vmem:[%s278 + $0x60] sm:$0xff] %vm1745, %v6051
      %6084 = vst.msk [vmem:[%s278 + $0x68] sm:$0xff] %vm1745, %v6052
      %6085 = vst.msk [vmem:[%s278 + $0x70] sm:$0xff] %vm1745, %v6053
      %6086 = vst.msk [vmem:[%s278 + $0x78] sm:$0xff] %vm1745, %v6054
      %6087 = vst.msk [vmem:[%s278 + $0x80] sm:$0xff] %vm1745, %v6055
      %6088 = vst.msk [vmem:[%s278 + $0x88] sm:$0xff] %vm1745, %v6056
      %6089 = vst.msk [vmem:[%s278 + $0x90] sm:$0xff] %vm1745, %v6057
      %6090 = vst.msk [vmem:[%s278 + $0x98] sm:$0xff] %vm1745, %v6058
      %6091 = vst.msk [vmem:[%s278 + $0xa0] sm:$0xff] %vm1745, %v6059
      %6092 = vst.msk [vmem:[%s278 + $0xa8] sm:$0xff] %vm1745, %v6060
      %6093 = vst.msk [vmem:[%s278 + $0xb0] sm:$0xff] %vm1745, %v6061
      %6094 = vst.msk [vmem:[%s278 + $0xb8] sm:$0xff] %vm1745, %v6062
      %6095 = vst.msk [vmem:[%s278 + $0xc0] sm:$0xff] %vm1745, %v6063
      %6096 = vst.msk [vmem:[%s278 + $0xc8] sm:$0xff] %vm1745, %v6064
      %6097 = vst.msk [vmem:[%s278 + $0xd0] sm:$0xff] %vm1745, %v6065
      %6098 = vst.msk [vmem:[%s278 + $0xd8] sm:$0xff] %vm1745, %v6066
      %6099 = vst.msk [vmem:[%s278 + $0xe0] sm:$0xff] %vm1745, %v6067
      %6100 = vst.msk [vmem:[%s278 + $0xe8] sm:$0xff] %vm1745, %v6068
      %6101 = vst.msk [vmem:[%s278 + $0xf0] sm:$0xff] %vm1745, %v6069
      %6102 = vst.msk [vmem:[%s278 + $0xf8] sm:$0xff] %vm1745, %v6070
      %p6103 = scmp.lt.s32.totalorder %s18, 1
      %s6104 = scalar_select %p6103, %s18, 1
      %s6105 = smul.addr %s6104, 32
      %s6106 = smul.addr %s6105, 8
      %s6107 = scalar_lea.vmem %s7, %s6106
      // Predicated region
      $region49: #{dalit_conv_forward.1} parent=47 // pred_check
        %p6108 = pneg %p188
      $region50: #{dalit_conv_forward.1} parent=47 // pred_check_branch
        %6110 = sbr.rel (%p6108) target = $region52
      $region51: #{dalit_conv_forward.1} parent=47 // pred_region
        _
      $region52: #{dalit_conv_forward.1} parent=47 // pred_fallthru
        _
    $region48: #{dalit_conv_forward.1} parent=5 // pred_fallthru
      _
    %p6111 = scmp.le.s32.totalorder 2, %s13
    // Predicated region
    $region53: #{dalit_conv_forward.1} parent=5 // pred_check
      %p6112 = pneg %p6111
    $region54: #{dalit_conv_forward.1} parent=5 // pred_check_branch
      %6114 = sbr.rel (%p6112) target = $region56
    $region55: #{dalit_conv_forward.1} parent=5 // pred_region
      %s6115 = ssub.s32 %s13, 2
      // Predicated region
      $region57: #{dalit_conv_forward.1} parent=55 // pred_check
        %p6116 = pneg %p194
      $region58: #{dalit_conv_forward.1} parent=55 // pred_check_branch
        %6118 = sbr.rel (%p6116) target = $region60
      $region59: #{dalit_conv_forward.1} parent=55 // pred_region
        %p6119 = scmp.lt.s32.totalorder %s19, 1
        %s6120 = scalar_select %p6119, %s19, 1
        %s6121 = smul.addr %s6120, 32
        %s6122 = smul.addr %s6121, 8
        %s6123 = scalar_lea.vmem %s7, %s6122
      $region60: #{dalit_conv_forward.1} parent=55 // pred_fallthru
        _
    $region56: #{dalit_conv_forward.1} parent=5 // pred_fallthru
      _
  $region6: #{dalit_conv_forward.1} parent=0 // loop_footer
    %s17 = sadd.s32 1, %s13
  $region7: #{dalit_conv_forward.1} parent=0 // loop_footer_branch
    %12 = sbr.rel target = $region3
  $region8: #{dalit_conv_forward.1} parent=0 // loop_exit
    _

</llo_original>
